<compile_context>
chip_gen: v7x
topology: tpu7x:2x2x1
jax: 0.10.0
libtpu: 0.0.40
codegen_flags: <defaults>
</compile_context>

<pallas_src>
import jax
import jax.numpy as jnp
from jax.experimental import pallas as pl
from jax.experimental.pallas import tpu as pltpu

T = 4              # timesteps folded into one kernel launch
B = 32             # batch (>= 16 enables the 2-way core split; multiple of 8)
C = 4              # num feature layers (policy.num_layers)
HW = 8             # spatial extent (H == W)
OBS_D = C * HW * HW            # 256 flattened obs features
HIDDEN = 128                   # policy.hidden_size
GATES = 4 * HIDDEN
NUM_ACTIONS = 16
NA_PAD = 128                   # lane-dense padded action width
SLAB = 2 * NA_PAD              # [ log-softmax | raw head (logits, value, entropy) ]
NEG_FILL = -1e30               # finite "-inf" for padded logit lanes


def _agent_kernel(obs_ref, h0_ref, c0_ref,
                  w_enc_ref, b_enc_ref,
                  w_ih_ref, w_hh_ref, b_lstm_ref,
                  w_head_ref, b_head_ref,
                  out_ref, h_ref, c_ref,
                  pre_ref, hall_ref):
    f32 = jnp.float32
    bf16 = jnp.bfloat16
    Tn, Bc, _ = obs_ref.shape
    TB = Tn * Bc

    # ---- pre-recurrence (off the serial path): encoder + input projection for
    # all T steps as two big matmuls (M = T*Bc rows -> better MXU utilization).
    # Reshape only merges 8-aligned leading dims (layout-preserving, no copy).
    obs2d = obs_ref[...].reshape(TB, OBS_D)
    enc = jnp.dot(obs2d.astype(bf16), w_enc_ref[...],
                  preferred_element_type=f32) + b_enc_ref[...]
    enc = jnp.maximum(enc, 0.0)                                         # [TB, H] f32
    pre = jnp.dot(enc.astype(bf16), w_ih_ref[...],
                  preferred_element_type=f32) + b_lstm_ref[...]         # [TB, 4H] f32
    pre_ref[...] = pre.reshape(Tn, Bc, GATES)

    # ---- serial LSTM recurrence: only h_prev @ w_hh + gate math per step.
    # Gate column order is (i, f, o, g) -> one sigmoid covers i/f/o.
    def step(t, carry):
        h_prev, c_prev = carry
        gates = pre_ref[t] + jnp.dot(h_prev.astype(bf16), w_hh_ref[...],
                                     preferred_element_type=f32)        # [Bc, 4H]
        ifo = jax.nn.sigmoid(gates[:, : 3 * HIDDEN])
        i_g = ifo[:, 0 * HIDDEN:1 * HIDDEN]
        f_g = ifo[:, 1 * HIDDEN:2 * HIDDEN]
        o_g = ifo[:, 2 * HIDDEN:3 * HIDDEN]
        g_g = jnp.tanh(gates[:, 3 * HIDDEN:])
        c_new = f_g * c_prev + i_g * g_g
        h_new = o_g * jnp.tanh(c_new)
        hall_ref[t] = h_new                                             # keep for fused head
        return (h_new, c_new)

    h_fin, c_fin = jax.lax.fori_loop(0, Tn, step,
                                     (h0_ref[...], c0_ref[...]), unroll=True)
    h_ref[...] = h_fin
    c_ref[...] = c_fin

    # ---- post-recurrence: fused actor/critic head + log-softmax/entropy for
    # all steps at once; a single lane-dense 256-wide output store.
    h_all = hall_ref[...].reshape(TB, HIDDEN)
    head = jnp.dot(h_all.astype(bf16), w_head_ref[...],
                   preferred_element_type=f32) + b_head_ref[...]        # [TB, NA_PAD]
    lane = jax.lax.broadcasted_iota(jnp.int32, head.shape, 1)
    logits = jnp.where(lane < NUM_ACTIONS, head, NEG_FILL)              # pad lanes masked
    m = jnp.max(logits, axis=-1, keepdims=True)
    z = logits - m
    e = jnp.exp(z)                                                      # 0 on pad lanes
    denom = jnp.sum(e, axis=-1, keepdims=True)
    logp = z - jnp.log(denom)
    ent = -jnp.sum(e * logp, axis=-1, keepdims=True) * pl.reciprocal(denom)  # exact
    # misc lanes: 0..NA-1 raw logits ("hidden"), NA value, NA+1 entropy, rest 0.
    misc = jnp.where(lane == NUM_ACTIONS + 1, ent, head)
    out_ref[...] = jnp.concatenate([logp, misc], axis=-1).reshape(Tn, Bc, SLAB)


def _init_torch_style_params(key):
    """PyTorch-layout params: Linear [out, in]; LSTMCell [4H, in], gate order i,f,g,o."""
    ks = jax.random.split(key, 6)

    def lin(k, fan_out, fan_in):
        scale = 1.0 / jnp.sqrt(jnp.float32(fan_in))
        return jax.random.uniform(k, (fan_out, fan_in), jnp.float32, -scale, scale)

    return {
        "w_enc": lin(ks[0], HIDDEN, OBS_D), "b_enc": jnp.zeros((HIDDEN,), jnp.float32),
        "w_ih": lin(ks[1], GATES, HIDDEN), "b_ih": jnp.zeros((GATES,), jnp.float32),
        "w_hh": lin(ks[2], GATES, HIDDEN), "b_hh": jnp.zeros((GATES,), jnp.float32),
        "w_act": lin(ks[3], NUM_ACTIONS, HIDDEN), "b_act": jnp.zeros((NUM_ACTIONS,), jnp.float32),
        "w_val": lin(ks[4], 1, HIDDEN), "b_val": jnp.zeros((1,), jnp.float32),
    }


def prepare_params(torch_params, max_vec):
    """One-time, checkpoint-load-time parameter preparation:
      - fold the 1/max_vec feature normalization into the encoder weight
      - transpose everything to [in, out] for x @ W
      - keep w_ih / w_hh separate (enc@w_ih is hoisted off the recurrence), sum
        the biases, reorder gate columns PyTorch (i,f,g,o) -> fused (i,f,o,g)
      - concat actor/critic heads into one zero-padded lane-dense [H, 128] weight
      - cast weights to bf16 (MXU-native); keep biases f32.
    """
    f32 = jnp.float32
    bf16 = jnp.bfloat16
    inv_flat = jnp.repeat(1.0 / max_vec.astype(f32), HW * HW)           # [OBS_D] (NCHW order)

    w_enc = torch_params["w_enc"].T * inv_flat[:, None]                 # [OBS_D, H]
    b_enc = torch_params["b_enc"][None, :]                              # [1, H]

    h = HIDDEN
    perm = jnp.concatenate([jnp.arange(0, h), jnp.arange(h, 2 * h),
                            jnp.arange(3 * h, 4 * h), jnp.arange(2 * h, 3 * h)])
    w_ih = torch_params["w_ih"][perm].T                                 # [H, 4H] (i,f,o,g)
    w_hh = torch_params["w_hh"][perm].T                                 # [H, 4H] (i,f,o,g)
    b_lstm = (torch_params["b_ih"] + torch_params["b_hh"])[perm][None, :]

    w_head = jnp.zeros((HIDDEN, NA_PAD), f32)
    w_head = w_head.at[:, :NUM_ACTIONS].set(torch_params["w_act"].T)
    w_head = w_head.at[:, NUM_ACTIONS:NUM_ACTIONS + 1].set(torch_params["w_val"].T)
    b_head = jnp.zeros((1, NA_PAD), f32)
    b_head = b_head.at[0, :NUM_ACTIONS].set(torch_params["b_act"])
    b_head = b_head.at[0, NUM_ACTIONS].set(torch_params["b_val"][0])

    return {
        "w_enc": w_enc.astype(bf16), "b_enc": b_enc.astype(f32),
        "w_ih": w_ih.astype(bf16), "w_hh": w_hh.astype(bf16),
        "b_lstm": b_lstm.astype(f32),
        "w_head": w_head.astype(bf16), "b_head": b_head.astype(f32),
    }


@jax.jit
def agent_forward(obs_seq, params, lstm_h, lstm_c, sample_key):
    """obs_seq: [T, B, C, H, W] NCHW.  Runs T adapter-forward steps in one kernel."""
    Tn, Bsz = obs_seq.shape[0], obs_seq.shape[1]
    obs_flat = obs_seq.reshape(Tn, Bsz, OBS_D).astype(jnp.float32)

    # v7x: shard independent batch halves across the two TensorCores once B >= 16;
    # on single-core chips the size-2 "parallel" grid is just a cheap serial loop.
    n_split = 2 if (Bsz >= 16 and Bsz % 16 == 0) else 1
    bc = Bsz // n_split

    grid_spec = pltpu.PrefetchScalarGridSpec(
        num_scalar_prefetch=0,
        grid=(n_split,),
        in_specs=[
            pl.BlockSpec((Tn, bc, OBS_D), lambda i: (0, i, 0)),        # obs (per core)
            pl.BlockSpec((bc, HIDDEN), lambda i: (i, 0)),              # h0
            pl.BlockSpec((bc, HIDDEN), lambda i: (i, 0)),              # c0
            pl.BlockSpec((OBS_D, HIDDEN), lambda i: (0, 0)),           # w_enc  bf16, resident
            pl.BlockSpec((1, HIDDEN), lambda i: (0, 0)),               # b_enc
            pl.BlockSpec((HIDDEN, GATES), lambda i: (0, 0)),           # w_ih   bf16, resident
            pl.BlockSpec((HIDDEN, GATES), lambda i: (0, 0)),           # w_hh   bf16, resident
            pl.BlockSpec((1, GATES), lambda i: (0, 0)),                # b_lstm
            pl.BlockSpec((HIDDEN, NA_PAD), lambda i: (0, 0)),          # w_head bf16, resident
            pl.BlockSpec((1, NA_PAD), lambda i: (0, 0)),               # b_head
        ],
        out_specs=[
            pl.BlockSpec((Tn, bc, SLAB), lambda i: (0, i, 0)),         # per-call output slab
            pl.BlockSpec((bc, HIDDEN), lambda i: (i, 0)),              # final h
            pl.BlockSpec((bc, HIDDEN), lambda i: (i, 0)),              # final c
        ],
        scratch_shapes=[
            pltpu.VMEM((Tn, bc, GATES), jnp.float32),                  # pre-computed enc@w_ih + b
            pltpu.VMEM((Tn, bc, HIDDEN), jnp.float32),                 # h history for fused head
        ],
    )
    out_shapes = (
        jax.ShapeDtypeStruct((Tn, Bsz, SLAB), jnp.float32),
        jax.ShapeDtypeStruct((Bsz, HIDDEN), jnp.float32),
        jax.ShapeDtypeStruct((Bsz, HIDDEN), jnp.float32),
    )

    slab, h_new, c_new = pl.pallas_call(
        _agent_kernel,
        out_shape=out_shapes,
        grid_spec=grid_spec,
        input_output_aliases={1: 1, 2: 2},      # lstm_h -> h_out, lstm_c -> c_out
        compiler_params=pltpu.CompilerParams(
            dimension_semantics=("parallel",)),  # batch halves are independent
    )(obs_flat, lstm_h, lstm_c,
      params["w_enc"], params["b_enc"],
      params["w_ih"], params["w_hh"], params["b_lstm"],
      params["w_head"], params["b_head"])

    logp_act = slab[..., :NUM_ACTIONS]                                  # [T, B, NA] log-softmax
    logits = slab[..., NA_PAD:NA_PAD + NUM_ACTIONS]                     # [T, B, NA] ("hidden")
    value = slab[..., NA_PAD + NUM_ACTIONS]                             # [T, B]     ("critic")
    entropy = slab[..., NA_PAD + NUM_ACTIONS + 1]                       # [T, B]

    # sample_logits glue: categorical on log-softmax (shift-invariant) + gather.
    action = jax.random.categorical(sample_key, logp_act, axis=-1)      # [T, B]
    logprob = jnp.take_along_axis(logp_act, action[..., None], axis=-1)[..., 0]
    # Return order mirrors PytorchAgent.forward: (action, logprob, entropy, critic, hidden)
    return action, logprob, entropy, value, logits, h_new, c_new


if __name__ == "__main__":
    root = jax.random.PRNGKey(0)
    k_obs, k_h, k_c, k_par, k_sample = jax.random.split(root, 5)

    # Deterministic example inputs (NCHW obs like PyTorch), T timesteps folded in.
    obs_seq = jax.random.uniform(k_obs, (T, B, C, HW, HW), jnp.float32, 0.0, 10.0)
    lstm_h = jax.random.normal(k_h, (B, HIDDEN), jnp.float32) * 0.1
    lstm_c = jax.random.normal(k_c, (B, HIDDEN), jnp.float32) * 0.1

    # max_vec per feature layer (cf. DEFAULT_FEATURE_NORMALIZATIONS / _update_max_vec_normalizations)
    max_vec = jnp.array([9.0, 1.0, 10.0, 254.0], jnp.float32)

    torch_params = _init_torch_style_params(k_par)
    params = prepare_params(torch_params, max_vec)   # one-time checkpoint-load-time fold

    outs = agent_forward(obs_seq, params, lstm_h, lstm_c, k_sample)
    outs = jax.block_until_ready(outs)
    action, logprob, entropy, value, logits, h_new, c_new = outs

    assert action.shape == (T, B)
    assert logprob.shape == (T, B)
    assert entropy.shape == (T, B)
    assert value.shape == (T, B)
    assert logits.shape == (T, B, NUM_ACTIONS)
    assert h_new.shape == (B, HIDDEN) and c_new.shape == (B, HIDDEN)
    assert bool(jnp.all(jnp.isfinite(logprob)))
    assert bool(jnp.all(jnp.isfinite(entropy)))
    assert bool(jnp.all(jnp.isfinite(value)))
    assert bool(jnp.all(jnp.isfinite(h_new))) and bool(jnp.all(jnp.isfinite(c_new)))

    # TODO(synk): checkpoint-specific encode_observations variants (non-Linear
    # encoders) and the non-recurrent wrapped-policy branch are out of scope.
    print("KERNEL_OK")
</pallas_src>

<mosaic_0001>
module attributes {stable_mosaic.version = 11 : i64} {
  func.func @_agent_kernel(%arg0: i32, %arg1: memref<4x16x256xf32, #tpu.memory_space<vmem>>, %arg2: memref<16x128xf32, #tpu.memory_space<vmem>>, %arg3: memref<16x128xf32, #tpu.memory_space<vmem>>, %arg4: memref<256x128xbf16, #tpu.memory_space<vmem>>, %arg5: memref<1x128xf32, #tpu.memory_space<vmem>>, %arg6: memref<128x512xbf16, #tpu.memory_space<vmem>>, %arg7: memref<128x512xbf16, #tpu.memory_space<vmem>>, %arg8: memref<1x512xf32, #tpu.memory_space<vmem>>, %arg9: memref<128x128xbf16, #tpu.memory_space<vmem>>, %arg10: memref<1x128xf32, #tpu.memory_space<vmem>>, %arg11: memref<4x16x256xf32, #tpu.memory_space<vmem>>, %arg12: memref<16x128xf32, #tpu.memory_space<vmem>>, %arg13: memref<16x128xf32, #tpu.memory_space<vmem>>, %arg14: memref<4x16x512xf32, #tpu.memory_space<vmem>>, %arg15: memref<4x16x128xf32, #tpu.memory_space<vmem>>) attributes {dimension_semantics = [#tpu.dimension_semantics<parallel>], iteration_bounds = array<i64: 2>, scalar_prefetch = 0 : i64, scratch_operands = 2 : i64, tpu.core_type = #tpu.core_type<tc>, window_params = [{transform_indices = @transform_0, window_bounds = array<i64: 4, 16, 256>}, {transform_indices = @transform_1, window_bounds = array<i64: 16, 128>}, {transform_indices = @transform_2, window_bounds = array<i64: 16, 128>}, {pipeline_mode = #tpu.pipeline_mode<synchronous>, transform_indices = @transform_3, window_bounds = array<i64: 256, 128>}, {pipeline_mode = #tpu.pipeline_mode<synchronous>, transform_indices = @transform_4, window_bounds = array<i64: 1, 128>}, {pipeline_mode = #tpu.pipeline_mode<synchronous>, transform_indices = @transform_5, window_bounds = array<i64: 128, 512>}, {pipeline_mode = #tpu.pipeline_mode<synchronous>, transform_indices = @transform_6, window_bounds = array<i64: 128, 512>}, {pipeline_mode = #tpu.pipeline_mode<synchronous>, transform_indices = @transform_7, window_bounds = array<i64: 1, 512>}, {pipeline_mode = #tpu.pipeline_mode<synchronous>, transform_indices = @transform_8, window_bounds = array<i64: 128, 128>}, {pipeline_mode = #tpu.pipeline_mode<synchronous>, transform_indices = @transform_9, window_bounds = array<i64: 1, 128>}, {transform_indices = @transform_10, window_bounds = array<i64: 4, 16, 256>}, {transform_indices = @transform_11, window_bounds = array<i64: 16, 128>}, {transform_indices = @transform_12, window_bounds = array<i64: 16, 128>}]} {
    %c0 = arith.constant 0 : index
    %c0_0 = arith.constant 0 : index
    %c0_1 = arith.constant 0 : index
    %0 = vector.load %arg1[%c0, %c0_0, %c0_1] : memref<4x16x256xf32, #tpu.memory_space<vmem>>, vector<4x16x256xf32>
    %1 = vector.shape_cast %0 : vector<4x16x256xf32> to vector<64x256xf32>
    %2 = arith.truncf %1 : vector<64x256xf32> to vector<64x256xbf16>
    %c0_2 = arith.constant 0 : index
    %c0_3 = arith.constant 0 : index
    %3 = vector.load %arg4[%c0_2, %c0_3] : memref<256x128xbf16, #tpu.memory_space<vmem>>, vector<256x128xbf16>
    %cst = arith.constant dense<0.000000e+00> : vector<64x128xf32>
    %4 = tpu.matmul %2, %3, %cst {dimension_numbers = #tpu.dot_dimension_numbers<[1], [0], [0], [1], [0, 0, 1, 1], [], []>} : vector<64x256xbf16>, vector<256x128xbf16>, vector<64x128xf32> -> vector<64x128xf32>
    %c0_4 = arith.constant 0 : index
    %c0_5 = arith.constant 0 : index
    %5 = vector.load %arg5[%c0_4, %c0_5] : memref<1x128xf32, #tpu.memory_space<vmem>>, vector<1x128xf32>
    %6 = vector.broadcast %5 : vector<1x128xf32> to vector<64x128xf32>
    %7 = arith.addf %4, %6 : vector<64x128xf32>
    %cst_6 = arith.constant 0.000000e+00 : f32
    %8 = vector.broadcast %cst_6 : f32 to vector<64x128xf32>
    %9 = arith.maximumf %7, %8 : vector<64x128xf32>
    %10 = arith.truncf %9 : vector<64x128xf32> to vector<64x128xbf16>
    %c0_7 = arith.constant 0 : index
    %c0_8 = arith.constant 0 : index
    %11 = vector.load %arg6[%c0_7, %c0_8] : memref<128x512xbf16, #tpu.memory_space<vmem>>, vector<128x512xbf16>
    %cst_9 = arith.constant dense<0.000000e+00> : vector<64x512xf32>
    %12 = tpu.matmul %10, %11, %cst_9 {dimension_numbers = #tpu.dot_dimension_numbers<[1], [0], [0], [1], [0, 0, 1, 1], [], []>} : vector<64x128xbf16>, vector<128x512xbf16>, vector<64x512xf32> -> vector<64x512xf32>
    %c0_10 = arith.constant 0 : index
    %c0_11 = arith.constant 0 : index
    %13 = vector.load %arg8[%c0_10, %c0_11] : memref<1x512xf32, #tpu.memory_space<vmem>>, vector<1x512xf32>
    %14 = vector.broadcast %13 : vector<1x512xf32> to vector<64x512xf32>
    %15 = arith.addf %12, %14 : vector<64x512xf32>
    %16 = vector.shape_cast %15 : vector<64x512xf32> to vector<4x16x512xf32>
    %c0_12 = arith.constant 0 : index
    %c0_13 = arith.constant 0 : index
    %c0_14 = arith.constant 0 : index
    %17 = vector.load %arg14[%c0_12, %c0_13, %c0_14] : memref<4x16x512xf32, #tpu.memory_space<vmem>>, vector<4x16x512xf32>
    tpu.vector_store %arg14[%c0_12, %c0_13, %c0_14], %16 {strides = array<i32>} : memref<4x16x512xf32, #tpu.memory_space<vmem>>, vector<4x16x512xf32>,
    %c0_15 = arith.constant 0 : index
    %c0_16 = arith.constant 0 : index
    %18 = vector.load %arg2[%c0_15, %c0_16] : memref<16x128xf32, #tpu.memory_space<vmem>>, vector<16x128xf32>
    %c0_17 = arith.constant 0 : index
    %c0_18 = arith.constant 0 : index
    %19 = vector.load %arg3[%c0_17, %c0_18] : memref<16x128xf32, #tpu.memory_space<vmem>>, vector<16x128xf32>
    %c0_i32 = arith.constant 0 : i32
    %20 = arith.index_cast %c0_i32 : i32 to index
    %c0_19 = arith.constant 0 : index
    %c0_20 = arith.constant 0 : index
    %21 = vector.load %arg14[%20, %c0_19, %c0_20] : memref<4x16x512xf32, #tpu.memory_space<vmem>>, vector<1x16x512xf32>
    %22 = vector.shape_cast %21 : vector<1x16x512xf32> to vector<16x512xf32>
    %23 = arith.truncf %18 : vector<16x128xf32> to vector<16x128xbf16>
    %c0_21 = arith.constant 0 : index
    %c0_22 = arith.constant 0 : index
    %24 = vector.load %arg7[%c0_21, %c0_22] : memref<128x512xbf16, #tpu.memory_space<vmem>>, vector<128x512xbf16>
    %cst_23 = arith.constant dense<0.000000e+00> : vector<16x512xf32>
    %25 = tpu.matmul %23, %24, %cst_23 {dimension_numbers = #tpu.dot_dimension_numbers<[1], [0], [0], [1], [0, 0, 1, 1], [], []>} : vector<16x128xbf16>, vector<128x512xbf16>, vector<16x512xf32> -> vector<16x512xf32>
    %26 = arith.addf %22, %25 : vector<16x512xf32>
    %27 = vector.extract_strided_slice %26 {offsets = [0, 0], sizes = [16, 384], strides = [1, 1]} : vector<16x512xf32> to vector<16x384xf32>
    %28 = arith.negf %27 : vector<16x384xf32>
    %29 = math.exp %28 : vector<16x384xf32>
    %cst_24 = arith.constant 1.000000e+00 : f32
    %30 = vector.broadcast %cst_24 : f32 to vector<16x384xf32>
    %31 = arith.addf %30, %29 : vector<16x384xf32>
    %32 = arith.divf %30, %31 : vector<16x384xf32>
    %33 = vector.extract_strided_slice %32 {offsets = [0, 0], sizes = [16, 128], strides = [1, 1]} : vector<16x384xf32> to vector<16x128xf32>
    %34 = vector.extract_strided_slice %32 {offsets = [0, 128], sizes = [16, 128], strides = [1, 1]} : vector<16x384xf32> to vector<16x128xf32>
    %35 = vector.extract_strided_slice %32 {offsets = [0, 256], sizes = [16, 128], strides = [1, 1]} : vector<16x384xf32> to vector<16x128xf32>
    %36 = vector.extract_strided_slice %26 {offsets = [0, 384], sizes = [16, 128], strides = [1, 1]} : vector<16x512xf32> to vector<16x128xf32>
    %37 = math.tanh %36 : vector<16x128xf32>
    %38 = arith.mulf %34, %19 : vector<16x128xf32>
    %39 = arith.mulf %33, %37 : vector<16x128xf32>
    %40 = arith.addf %38, %39 : vector<16x128xf32>
    %41 = math.tanh %40 : vector<16x128xf32>
    %42 = arith.mulf %35, %41 : vector<16x128xf32>
    %43 = arith.index_cast %c0_i32 : i32 to index
    %c0_25 = arith.constant 0 : index
    %c0_26 = arith.constant 0 : index
    %44 = vector.load %arg15[%43, %c0_25, %c0_26] : memref<4x16x128xf32, #tpu.memory_space<vmem>>, vector<1x16x128xf32>
    %45 = vector.shape_cast %44 : vector<1x16x128xf32> to vector<16x128xf32>
    %46 = vector.shape_cast %42 : vector<16x128xf32> to vector<1x16x128xf32>
    tpu.vector_store %arg15[%43, %c0_25, %c0_26], %46 {strides = array<i32>} : memref<4x16x128xf32, #tpu.memory_space<vmem>>, vector<1x16x128xf32>,
    %c1_i32 = arith.constant 1 : i32
    %47 = arith.index_cast %c1_i32 : i32 to index
    %c0_27 = arith.constant 0 : index
    %c0_28 = arith.constant 0 : index
    %48 = vector.load %arg14[%47, %c0_27, %c0_28] : memref<4x16x512xf32, #tpu.memory_space<vmem>>, vector<1x16x512xf32>
    %49 = vector.shape_cast %48 : vector<1x16x512xf32> to vector<16x512xf32>
    %50 = arith.truncf %42 : vector<16x128xf32> to vector<16x128xbf16>
    %c0_29 = arith.constant 0 : index
    %c0_30 = arith.constant 0 : index
    %51 = vector.load %arg7[%c0_29, %c0_30] : memref<128x512xbf16, #tpu.memory_space<vmem>>, vector<128x512xbf16>
    %cst_31 = arith.constant dense<0.000000e+00> : vector<16x512xf32>
    %52 = tpu.matmul %50, %51, %cst_31 {dimension_numbers = #tpu.dot_dimension_numbers<[1], [0], [0], [1], [0, 0, 1, 1], [], []>} : vector<16x128xbf16>, vector<128x512xbf16>, vector<16x512xf32> -> vector<16x512xf32>
    %53 = arith.addf %49, %52 : vector<16x512xf32>
    %54 = vector.extract_strided_slice %53 {offsets = [0, 0], sizes = [16, 384], strides = [1, 1]} : vector<16x512xf32> to vector<16x384xf32>
    %55 = arith.negf %54 : vector<16x384xf32>
    %56 = math.exp %55 : vector<16x384xf32>
    %cst_32 = arith.constant 1.000000e+00 : f32
    %57 = vector.broadcast %cst_32 : f32 to vector<16x384xf32>
    %58 = arith.addf %57, %56 : vector<16x384xf32>
    %59 = arith.divf %57, %58 : vector<16x384xf32>
    %60 = vector.extract_strided_slice %59 {offsets = [0, 0], sizes = [16, 128], strides = [1, 1]} : vector<16x384xf32> to vector<16x128xf32>
    %61 = vector.extract_strided_slice %59 {offsets = [0, 128], sizes = [16, 128], strides = [1, 1]} : vector<16x384xf32> to vector<16x128xf32>
    %62 = vector.extract_strided_slice %59 {offsets = [0, 256], sizes = [16, 128], strides = [1, 1]} : vector<16x384xf32> to vector<16x128xf32>
    %63 = vector.extract_strided_slice %53 {offsets = [0, 384], sizes = [16, 128], strides = [1, 1]} : vector<16x512xf32> to vector<16x128xf32>
    %64 = math.tanh %63 : vector<16x128xf32>
    %65 = arith.mulf %61, %40 : vector<16x128xf32>
    %66 = arith.mulf %60, %64 : vector<16x128xf32>
    %67 = arith.addf %65, %66 : vector<16x128xf32>
    %68 = math.tanh %67 : vector<16x128xf32>
    %69 = arith.mulf %62, %68 : vector<16x128xf32>
    %70 = arith.index_cast %c1_i32 : i32 to index
    %c0_33 = arith.constant 0 : index
    %c0_34 = arith.constant 0 : index
    %71 = vector.load %arg15[%70, %c0_33, %c0_34] : memref<4x16x128xf32, #tpu.memory_space<vmem>>, vector<1x16x128xf32>
    %72 = vector.shape_cast %71 : vector<1x16x128xf32> to vector<16x128xf32>
    %73 = vector.shape_cast %69 : vector<16x128xf32> to vector<1x16x128xf32>
    tpu.vector_store %arg15[%70, %c0_33, %c0_34], %73 {strides = array<i32>} : memref<4x16x128xf32, #tpu.memory_space<vmem>>, vector<1x16x128xf32>,
    %c2_i32 = arith.constant 2 : i32
    %74 = arith.index_cast %c2_i32 : i32 to index
    %c0_35 = arith.constant 0 : index
    %c0_36 = arith.constant 0 : index
    %75 = vector.load %arg14[%74, %c0_35, %c0_36] : memref<4x16x512xf32, #tpu.memory_space<vmem>>, vector<1x16x512xf32>
    %76 = vector.shape_cast %75 : vector<1x16x512xf32> to vector<16x512xf32>
    %77 = arith.truncf %69 : vector<16x128xf32> to vector<16x128xbf16>
    %c0_37 = arith.constant 0 : index
    %c0_38 = arith.constant 0 : index
    %78 = vector.load %arg7[%c0_37, %c0_38] : memref<128x512xbf16, #tpu.memory_space<vmem>>, vector<128x512xbf16>
    %cst_39 = arith.constant dense<0.000000e+00> : vector<16x512xf32>
    %79 = tpu.matmul %77, %78, %cst_39 {dimension_numbers = #tpu.dot_dimension_numbers<[1], [0], [0], [1], [0, 0, 1, 1], [], []>} : vector<16x128xbf16>, vector<128x512xbf16>, vector<16x512xf32> -> vector<16x512xf32>
    %80 = arith.addf %76, %79 : vector<16x512xf32>
    %81 = vector.extract_strided_slice %80 {offsets = [0, 0], sizes = [16, 384], strides = [1, 1]} : vector<16x512xf32> to vector<16x384xf32>
    %82 = arith.negf %81 : vector<16x384xf32>
    %83 = math.exp %82 : vector<16x384xf32>
    %cst_40 = arith.constant 1.000000e+00 : f32
    %84 = vector.broadcast %cst_40 : f32 to vector<16x384xf32>
    %85 = arith.addf %84, %83 : vector<16x384xf32>
    %86 = arith.divf %84, %85 : vector<16x384xf32>
    %87 = vector.extract_strided_slice %86 {offsets = [0, 0], sizes = [16, 128], strides = [1, 1]} : vector<16x384xf32> to vector<16x128xf32>
    %88 = vector.extract_strided_slice %86 {offsets = [0, 128], sizes = [16, 128], strides = [1, 1]} : vector<16x384xf32> to vector<16x128xf32>
    %89 = vector.extract_strided_slice %86 {offsets = [0, 256], sizes = [16, 128], strides = [1, 1]} : vector<16x384xf32> to vector<16x128xf32>
    %90 = vector.extract_strided_slice %80 {offsets = [0, 384], sizes = [16, 128], strides = [1, 1]} : vector<16x512xf32> to vector<16x128xf32>
    %91 = math.tanh %90 : vector<16x128xf32>
    %92 = arith.mulf %88, %67 : vector<16x128xf32>
    %93 = arith.mulf %87, %91 : vector<16x128xf32>
    %94 = arith.addf %92, %93 : vector<16x128xf32>
    %95 = math.tanh %94 : vector<16x128xf32>
    %96 = arith.mulf %89, %95 : vector<16x128xf32>
    %97 = arith.index_cast %c2_i32 : i32 to index
    %c0_41 = arith.constant 0 : index
    %c0_42 = arith.constant 0 : index
    %98 = vector.load %arg15[%97, %c0_41, %c0_42] : memref<4x16x128xf32, #tpu.memory_space<vmem>>, vector<1x16x128xf32>
    %99 = vector.shape_cast %98 : vector<1x16x128xf32> to vector<16x128xf32>
    %100 = vector.shape_cast %96 : vector<16x128xf32> to vector<1x16x128xf32>
    tpu.vector_store %arg15[%97, %c0_41, %c0_42], %100 {strides = array<i32>} : memref<4x16x128xf32, #tpu.memory_space<vmem>>, vector<1x16x128xf32>,
    %c3_i32 = arith.constant 3 : i32
    %101 = arith.index_cast %c3_i32 : i32 to index
    %c0_43 = arith.constant 0 : index
    %c0_44 = arith.constant 0 : index
    %102 = vector.load %arg14[%101, %c0_43, %c0_44] : memref<4x16x512xf32, #tpu.memory_space<vmem>>, vector<1x16x512xf32>
    %103 = vector.shape_cast %102 : vector<1x16x512xf32> to vector<16x512xf32>
    %104 = arith.truncf %96 : vector<16x128xf32> to vector<16x128xbf16>
    %c0_45 = arith.constant 0 : index
    %c0_46 = arith.constant 0 : index
    %105 = vector.load %arg7[%c0_45, %c0_46] : memref<128x512xbf16, #tpu.memory_space<vmem>>, vector<128x512xbf16>
    %cst_47 = arith.constant dense<0.000000e+00> : vector<16x512xf32>
    %106 = tpu.matmul %104, %105, %cst_47 {dimension_numbers = #tpu.dot_dimension_numbers<[1], [0], [0], [1], [0, 0, 1, 1], [], []>} : vector<16x128xbf16>, vector<128x512xbf16>, vector<16x512xf32> -> vector<16x512xf32>
    %107 = arith.addf %103, %106 : vector<16x512xf32>
    %108 = vector.extract_strided_slice %107 {offsets = [0, 0], sizes = [16, 384], strides = [1, 1]} : vector<16x512xf32> to vector<16x384xf32>
    %109 = arith.negf %108 : vector<16x384xf32>
    %110 = math.exp %109 : vector<16x384xf32>
    %cst_48 = arith.constant 1.000000e+00 : f32
    %111 = vector.broadcast %cst_48 : f32 to vector<16x384xf32>
    %112 = arith.addf %111, %110 : vector<16x384xf32>
    %113 = arith.divf %111, %112 : vector<16x384xf32>
    %114 = vector.extract_strided_slice %113 {offsets = [0, 0], sizes = [16, 128], strides = [1, 1]} : vector<16x384xf32> to vector<16x128xf32>
    %115 = vector.extract_strided_slice %113 {offsets = [0, 128], sizes = [16, 128], strides = [1, 1]} : vector<16x384xf32> to vector<16x128xf32>
    %116 = vector.extract_strided_slice %113 {offsets = [0, 256], sizes = [16, 128], strides = [1, 1]} : vector<16x384xf32> to vector<16x128xf32>
    %117 = vector.extract_strided_slice %107 {offsets = [0, 384], sizes = [16, 128], strides = [1, 1]} : vector<16x512xf32> to vector<16x128xf32>
    %118 = math.tanh %117 : vector<16x128xf32>
    %119 = arith.mulf %115, %94 : vector<16x128xf32>
    %120 = arith.mulf %114, %118 : vector<16x128xf32>
    %121 = arith.addf %119, %120 : vector<16x128xf32>
    %122 = math.tanh %121 : vector<16x128xf32>
    %123 = arith.mulf %116, %122 : vector<16x128xf32>
    %124 = arith.index_cast %c3_i32 : i32 to index
    %c0_49 = arith.constant 0 : index
    %c0_50 = arith.constant 0 : index
    %125 = vector.load %arg15[%124, %c0_49, %c0_50] : memref<4x16x128xf32, #tpu.memory_space<vmem>>, vector<1x16x128xf32>
    %126 = vector.shape_cast %125 : vector<1x16x128xf32> to vector<16x128xf32>
    %127 = vector.shape_cast %123 : vector<16x128xf32> to vector<1x16x128xf32>
    tpu.vector_store %arg15[%124, %c0_49, %c0_50], %127 {strides = array<i32>} : memref<4x16x128xf32, #tpu.memory_space<vmem>>, vector<1x16x128xf32>,
    %c4_i32 = arith.constant 4 : i32
    %c0_51 = arith.constant 0 : index
    %c0_52 = arith.constant 0 : index
    %128 = vector.load %arg12[%c0_51, %c0_52] : memref<16x128xf32, #tpu.memory_space<vmem>>, vector<16x128xf32>
    tpu.vector_store %arg12[%c0_51, %c0_52], %123 {strides = array<i32>} : memref<16x128xf32, #tpu.memory_space<vmem>>, vector<16x128xf32>,
    %c0_53 = arith.constant 0 : index
    %c0_54 = arith.constant 0 : index
    %129 = vector.load %arg13[%c0_53, %c0_54] : memref<16x128xf32, #tpu.memory_space<vmem>>, vector<16x128xf32>
    tpu.vector_store %arg13[%c0_53, %c0_54], %121 {strides = array<i32>} : memref<16x128xf32, #tpu.memory_space<vmem>>, vector<16x128xf32>,
    %c0_55 = arith.constant 0 : index
    %c0_56 = arith.constant 0 : index
    %c0_57 = arith.constant 0 : index
    %130 = vector.load %arg15[%c0_55, %c0_56, %c0_57] : memref<4x16x128xf32, #tpu.memory_space<vmem>>, vector<4x16x128xf32>
    %131 = vector.shape_cast %130 : vector<4x16x128xf32> to vector<64x128xf32>
    %132 = arith.truncf %131 : vector<64x128xf32> to vector<64x128xbf16>
    %c0_58 = arith.constant 0 : index
    %c0_59 = arith.constant 0 : index
    %133 = vector.load %arg9[%c0_58, %c0_59] : memref<128x128xbf16, #tpu.memory_space<vmem>>, vector<128x128xbf16>
    %cst_60 = arith.constant dense<0.000000e+00> : vector<64x128xf32>
    %134 = tpu.matmul %132, %133, %cst_60 {dimension_numbers = #tpu.dot_dimension_numbers<[1], [0], [0], [1], [0, 0, 1, 1], [], []>} : vector<64x128xbf16>, vector<128x128xbf16>, vector<64x128xf32> -> vector<64x128xf32>
    %c0_61 = arith.constant 0 : index
    %c0_62 = arith.constant 0 : index
    %135 = vector.load %arg10[%c0_61, %c0_62] : memref<1x128xf32, #tpu.memory_space<vmem>>, vector<1x128xf32>
    %136 = vector.broadcast %135 : vector<1x128xf32> to vector<64x128xf32>
    %137 = arith.addf %134, %136 : vector<64x128xf32>
    %138 = tpu.iota {dimensions = array<i32: 1>} : vector<64x128xi32>
    %c16_i32 = arith.constant 16 : i32
    %139 = vector.broadcast %c16_i32 : i32 to vector<64x128xi32>
    %140 = arith.cmpi slt, %138, %139 : vector<64x128xi32>
    %cst_63 = arith.constant -1.000000e+30 : f32
    %141 = vector.broadcast %cst_63 : f32 to vector<64x128xf32>
    %142 = arith.select %140, %137, %141 : vector<64x128xi1>, vector<64x128xf32>
    %cst_64 = arith.constant dense<0xFF800000> : vector<64xf32>
    %143 = vector.multi_reduction <maximumf>, %142, %cst_64 [1] : vector<64x128xf32> to vector<64xf32>
    %144 = vector.shape_cast %143 : vector<64xf32> to vector<64x1xf32>
    %145 = vector.broadcast %144 : vector<64x1xf32> to vector<64x128xf32>
    %146 = arith.subf %142, %145 : vector<64x128xf32>
    %147 = math.exp %146 : vector<64x128xf32>
    %cst_65 = arith.constant dense<0.000000e+00> : vector<64xf32>
    %148 = vector.multi_reduction <add>, %147, %cst_65 [1] : vector<64x128xf32> to vector<64xf32>
    %149 = vector.shape_cast %148 : vector<64xf32> to vector<64x1xf32>
    %150 = math.log %149 : vector<64x1xf32>
    %151 = vector.broadcast %150 : vector<64x1xf32> to vector<64x128xf32>
    %152 = arith.subf %146, %151 : vector<64x128xf32>
    %153 = arith.mulf %147, %152 : vector<64x128xf32>
    %cst_66 = arith.constant dense<0.000000e+00> : vector<64xf32>
    %154 = vector.multi_reduction <add>, %153, %cst_66 [1] : vector<64x128xf32> to vector<64xf32>
    %155 = vector.shape_cast %154 : vector<64xf32> to vector<64x1xf32>
    %cst_67 = arith.constant 0.000000e+00 : f32
    %156 = vector.broadcast %cst_67 : f32 to vector<64x1xf32>
    %157 = arith.subf %156, %155 : vector<64x1xf32>
    %158 = tpu.reciprocal %149 : vector<64x1xf32> -> vector<64x1xf32>
    %159 = arith.mulf %157, %158 : vector<64x1xf32>
    %c17_i32 = arith.constant 17 : i32
    %160 = vector.broadcast %c17_i32 : i32 to vector<64x128xi32>
    %161 = arith.cmpi eq, %138, %160 : vector<64x128xi32>
    %162 = vector.shape_cast %159 : vector<64x1xf32> to vector<64x1xf32>
    %163 = vector.broadcast %162 : vector<64x1xf32> to vector<64x128xf32>
    %164 = arith.select %161, %163, %137 : vector<64x128xi1>, vector<64x128xf32>
    %165 = tpu.concatenate %152, %164 in 1 : vector<64x128xf32>, vector<64x128xf32> -> vector<64x256xf32>
    %166 = vector.shape_cast %165 : vector<64x256xf32> to vector<4x16x256xf32>
    %c0_68 = arith.constant 0 : index
    %c0_69 = arith.constant 0 : index
    %c0_70 = arith.constant 0 : index
    %167 = vector.load %arg11[%c0_68, %c0_69, %c0_70] : memref<4x16x256xf32, #tpu.memory_space<vmem>>, vector<4x16x256xf32>
    tpu.vector_store %arg11[%c0_68, %c0_69, %c0_70], %166 {strides = array<i32>} : memref<4x16x256xf32, #tpu.memory_space<vmem>>, vector<4x16x256xf32>,
    return
  }
  func.func @transform_0(%arg0: i32) -> (i32, i32, i32) {
    %c0_i32 = arith.constant 0 : i32
    %c0_i32_0 = arith.constant 0 : i32
    %c0_i32_1 = arith.constant 0 : i32
    return %c0_i32, %arg0, %c0_i32_0 : i32, i32, i32
  }
  func.func @transform_1(%arg0: i32) -> (i32, i32) {
    %c0_i32 = arith.constant 0 : i32
    %c0_i32_0 = arith.constant 0 : i32
    return %arg0, %c0_i32 : i32, i32
  }
  func.func @transform_2(%arg0: i32) -> (i32, i32) {
    %c0_i32 = arith.constant 0 : i32
    %c0_i32_0 = arith.constant 0 : i32
    return %arg0, %c0_i32 : i32, i32
  }
  func.func @transform_3(%arg0: i32) -> (i32, i32) {
    %c0_i32 = arith.constant 0 : i32
    %c0_i32_0 = arith.constant 0 : i32
    %c0_i32_1 = arith.constant 0 : i32
    return %c0_i32, %c0_i32_0 : i32, i32
  }
  func.func @transform_4(%arg0: i32) -> (i32, i32) {
    %c0_i32 = arith.constant 0 : i32
    %c0_i32_0 = arith.constant 0 : i32
    %c0_i32_1 = arith.constant 0 : i32
    return %c0_i32, %c0_i32_0 : i32, i32
  }
  func.func @transform_5(%arg0: i32) -> (i32, i32) {
    %c0_i32 = arith.constant 0 : i32
    %c0_i32_0 = arith.constant 0 : i32
    %c0_i32_1 = arith.constant 0 : i32
    return %c0_i32, %c0_i32_0 : i32, i32
  }
  func.func @transform_6(%arg0: i32) -> (i32, i32) {
    %c0_i32 = arith.constant 0 : i32
    %c0_i32_0 = arith.constant 0 : i32
    %c0_i32_1 = arith.constant 0 : i32
    return %c0_i32, %c0_i32_0 : i32, i32
  }
  func.func @transform_7(%arg0: i32) -> (i32, i32) {
    %c0_i32 = arith.constant 0 : i32
    %c0_i32_0 = arith.constant 0 : i32
    %c0_i32_1 = arith.constant 0 : i32
    return %c0_i32, %c0_i32_0 : i32, i32
  }
  func.func @transform_8(%arg0: i32) -> (i32, i32) {
    %c0_i32 = arith.constant 0 : i32
    %c0_i32_0 = arith.constant 0 : i32
    %c0_i32_1 = arith.constant 0 : i32
    return %c0_i32, %c0_i32_0 : i32, i32
  }
  func.func @transform_9(%arg0: i32) -> (i32, i32) {
    %c0_i32 = arith.constant 0 : i32
    %c0_i32_0 = arith.constant 0 : i32
    %c0_i32_1 = arith.constant 0 : i32
    return %c0_i32, %c0_i32_0 : i32, i32
  }
  func.func @transform_10(%arg0: i32) -> (i32, i32, i32) {
    %c0_i32 = arith.constant 0 : i32
    %c0_i32_0 = arith.constant 0 : i32
    %c0_i32_1 = arith.constant 0 : i32
    return %c0_i32, %arg0, %c0_i32_0 : i32, i32, i32
  }
  func.func @transform_11(%arg0: i32) -> (i32, i32) {
    %c0_i32 = arith.constant 0 : i32
    %c0_i32_0 = arith.constant 0 : i32
    return %arg0, %c0_i32 : i32, i32
  }
  func.func @transform_12(%arg0: i32) -> (i32, i32) {
    %c0_i32 = arith.constant 0 : i32
    %c0_i32_0 = arith.constant 0 : i32
    return %arg0, %c0_i32 : i32, i32
  }
}

</mosaic_0001>

<llo_original>
// kernel: agent_forward.1
$region0: #{agent_forward.1}
  #allocation0 [shape = 'u32[]', space=smem, size = 0x4, offset = 0x4, fixed_abs, tag = 'smem constant byte address 0x4 - core index']
  #allocation1 [shape = 'u32[144,128]{1,0:T(1,128)}', space=vmem, size = 0x12000, scoped, tag = 'internal scratch']
  #allocation2 [shape = 'f32[4,16,512]{2,1,0:T(8,128)}', space=vmem, size = 0x20000, scoped, tag = 'scratch operand']
  #allocation3 [shape = 'f32[4,16,128]{2,1,0:T(8,128)}', space=vmem, size = 0x8000, scoped, tag = 'scratch operand']
  %s0 = inlined_call_operand.vmem [shape: f32[4,32,256], index: 0, kind: input, shape index: {}]
  %s1 = inlined_call_operand.vmem [shape: f32[32,128], index: 1, kind: input, shape index: {}, may-alias: {1,11}]
  %s2 = inlined_call_operand.vmem [shape: f32[32,128], index: 2, kind: input, shape index: {}, may-alias: {2,12}]
  %s3 = inlined_call_operand.vmem [shape: bf16[256,128], index: 3, kind: input, shape index: {}]
  %s4 = inlined_call_operand.vmem [shape: f32[1,128], index: 4, kind: input, shape index: {}]
  %s5 = inlined_call_operand.vmem [shape: bf16[128,512], index: 5, kind: input, shape index: {}]
  %s6 = inlined_call_operand.vmem [shape: bf16[128,512], index: 6, kind: input, shape index: {}]
  %s7 = inlined_call_operand.vmem [shape: f32[1,512], index: 7, kind: input, shape index: {}]
  %s8 = inlined_call_operand.vmem [shape: bf16[128,128], index: 8, kind: input, shape index: {}]
  %s9 = inlined_call_operand.vmem [shape: f32[1,128], index: 9, kind: input, shape index: {}]
  %s10 = inlined_call_operand.vmem [shape: f32[4,32,256], index: 10, kind: output, shape index: {0}]
  %s11 = inlined_call_operand.vmem [shape: f32[32,128], index: 11, kind: output, shape index: {1}, may-alias: {1,11}]
  %s12 = inlined_call_operand.vmem [shape: f32[32,128], index: 12, kind: output, shape index: {2}, may-alias: {2,12}]
  %13 = xla_tuple %s10, %s11, %s12
  %s14 = sld [smem:[#allocation0]]
  $region131: #{agent_forward.1} parent=0
    _
  %s16 = ssub.s32 1, %s14
  %s17 = scalar_select 0, %s16, %s14
  $region1: #{agent_forward.1} parent=0
    #allocation4 [shape = 'u8[131072]{0}', space=vmem, size = 0x20000, scoped, tag = 'input window, operand 0']
    #allocation5 [shape = 'u8[131072]{0}', space=vmem, size = 0x20000, scoped, tag = 'output window, operand 0']
    loop: start=0, step=1, limit=4
    $region2: #{agent_forward.1} parent=1 // loop_pre_header
      _
    $region3: #{agent_forward.1} parent=1 // loop_header
      %s19 = sphi 0, %s23
      %p20 = scmp.ge.s32.totalorder %s19, 4
      %s29 = sphi 0, %s31
      %s32 = sphi 0, %s29
      %s33 = sphi 0, %s32
      %s49 = sphi 0, %s33
      %s55 = sphi 0, %s57
      %s58 = sphi 0, %s55
      %s59 = sphi 0, %s58
      %s75 = sphi 0, %s59
      %s81 = sphi 0, %s83
      %s84 = sphi 0, %s81
      %s85 = sphi 0, %s84
      %s101 = sphi 0, %s85
      %s105 = sphi 0, %s105
      %s107 = sphi 0, %s105
      %s108 = sphi 0, %s107
      %s122 = sphi 0, %s108
      %s126 = sphi 0, %s126
      %s128 = sphi 0, %s126
      %s129 = sphi 0, %s128
      %s143 = sphi 0, %s129
      %s147 = sphi 0, %s147
      %s149 = sphi 0, %s147
      %s150 = sphi 0, %s149
      %s164 = sphi 0, %s150
      %s168 = sphi 0, %s168
      %s170 = sphi 0, %s168
      %s171 = sphi 0, %s170
      %s185 = sphi 0, %s171
      %s189 = sphi 0, %s189
      %s191 = sphi 0, %s189
      %s192 = sphi 0, %s191
      %s206 = sphi 0, %s192
      %s210 = sphi 0, %s210
      %s212 = sphi 0, %s210
      %s213 = sphi 0, %s212
      %s227 = sphi 0, %s213
      %s231 = sphi 0, %s231
      %s233 = sphi 0, %s231
      %s234 = sphi 0, %s233
      %s248 = sphi 0, %s234
      %s254 = sphi 0, %s256
      %s257 = sphi 0, %s254
      %s258 = sphi 0, %s257
      %s274 = sphi 0, %s258
      %s280 = sphi 0, %s282
      %s283 = sphi 0, %s280
      %s284 = sphi 0, %s283
      %s300 = sphi 0, %s284
      %s306 = sphi 0, %s308
      %s309 = sphi 0, %s306
      %s310 = sphi 0, %s309
      %s326 = sphi 0, %s310
    $region4: #{agent_forward.1} parent=1 // loop_header_branch
      %22 = sbr.rel (%p20) target = $region8
    $region5: #{agent_forward.1} parent=1 // loop_body
      %s24 = ssub.s32 %s19, 1
      %s25 = ssub.s32 %s19, 2
      %s26 = sadd.s32 %s19, 1
      %s27 = ssub.s32 %s19, %s26
      %p28 = scmp.eq.s32.totalorder %s27, 0
      %s30 = sadd.s32 %s29, 1
      %s31 = scalar_select %p28, %s29, %s30
      %p34 = pneg %p28
      %p35 = scmp.eq.s32.totalorder %s19, 1
      %p36 = por %p34, %p35
      %p37 = scmp.ne.s32.totalorder %s29, %s32
      %p38 = scmp.eq.s32.totalorder %s19, 0
      %p39 = por %p37, %p38
      %p40 = scmp.ne.s32.totalorder %s29, %s32
      %p41 = scmp.eq.s32.totalorder %s24, 1
      %p42 = por %p40, %p41
      %p43 = scmp.ne.s32.totalorder %s32, %s33
      %p44 = scmp.eq.s32.totalorder %s24, 0
      %p45 = por %p43, %p44
      %p46 = scmp.ne.s32.totalorder %s32, %s33
      %p47 = scmp.eq.s32.totalorder %s25, 1
      %p48 = por %p46, %p47
      %p50 = scmp.ne.s32.totalorder %s33, %s49
      %p51 = scmp.eq.s32.totalorder %s25, 0
      %p52 = por %p50, %p51
      %s53 = ssub.s32 %s19, %s26
      %p54 = scmp.eq.s32.totalorder %s53, 0
      %s56 = sadd.s32 %s55, 1
      %s57 = scalar_select %p54, %s55, %s56
      %p60 = pneg %p54
      %p61 = scmp.eq.s32.totalorder %s19, 1
      %p62 = por %p60, %p61
      %p63 = scmp.ne.s32.totalorder %s55, %s58
      %p64 = scmp.eq.s32.totalorder %s19, 0
      %p65 = por %p63, %p64
      %p66 = scmp.ne.s32.totalorder %s55, %s58
      %p67 = scmp.eq.s32.totalorder %s24, 1
      %p68 = por %p66, %p67
      %p69 = scmp.ne.s32.totalorder %s58, %s59
      %p70 = scmp.eq.s32.totalorder %s24, 0
      %p71 = por %p69, %p70
      %p72 = scmp.ne.s32.totalorder %s58, %s59
      %p73 = scmp.eq.s32.totalorder %s25, 1
      %p74 = por %p72, %p73
      %p76 = scmp.ne.s32.totalorder %s59, %s75
      %p77 = scmp.eq.s32.totalorder %s25, 0
      %p78 = por %p76, %p77
      %s79 = ssub.s32 %s19, %s26
      %p80 = scmp.eq.s32.totalorder %s79, 0
      %s82 = sadd.s32 %s81, 1
      %s83 = scalar_select %p80, %s81, %s82
      %p86 = pneg %p80
      %p87 = scmp.eq.s32.totalorder %s19, 1
      %p88 = por %p86, %p87
      %p89 = scmp.ne.s32.totalorder %s81, %s84
      %p90 = scmp.eq.s32.totalorder %s19, 0
      %p91 = por %p89, %p90
      %p92 = scmp.ne.s32.totalorder %s81, %s84
      %p93 = scmp.eq.s32.totalorder %s24, 1
      %p94 = por %p92, %p93
      %p95 = scmp.ne.s32.totalorder %s84, %s85
      %p96 = scmp.eq.s32.totalorder %s24, 0
      %p97 = por %p95, %p96
      %p98 = scmp.ne.s32.totalorder %s84, %s85
      %p99 = scmp.eq.s32.totalorder %s25, 1
      %p100 = por %p98, %p99
      %p102 = scmp.ne.s32.totalorder %s85, %s101
      %p103 = scmp.eq.s32.totalorder %s25, 0
      %p104 = por %p102, %p103
      %s106 = sadd.s32 %s105, 1
      %p109 = scmp.eq.s32.totalorder %s19, 1
      %p110 = scmp.ne.s32.totalorder %s105, %s107
      %p111 = scmp.eq.s32.totalorder %s19, 0
      %p112 = por %p110, %p111
      %p113 = scmp.ne.s32.totalorder %s105, %s107
      %p114 = scmp.eq.s32.totalorder %s24, 1
      %p115 = por %p113, %p114
      %p116 = scmp.ne.s32.totalorder %s107, %s108
      %p117 = scmp.eq.s32.totalorder %s24, 0
      %p118 = por %p116, %p117
      %p119 = scmp.ne.s32.totalorder %s107, %s108
      %p120 = scmp.eq.s32.totalorder %s25, 1
      %p121 = por %p119, %p120
      %p123 = scmp.ne.s32.totalorder %s108, %s122
      %p124 = scmp.eq.s32.totalorder %s25, 0
      %p125 = por %p123, %p124
      %s127 = sadd.s32 %s126, 1
      %p130 = scmp.eq.s32.totalorder %s19, 1
      %p131 = scmp.ne.s32.totalorder %s126, %s128
      %p132 = scmp.eq.s32.totalorder %s19, 0
      %p133 = por %p131, %p132
      %p134 = scmp.ne.s32.totalorder %s126, %s128
      %p135 = scmp.eq.s32.totalorder %s24, 1
      %p136 = por %p134, %p135
      %p137 = scmp.ne.s32.totalorder %s128, %s129
      %p138 = scmp.eq.s32.totalorder %s24, 0
      %p139 = por %p137, %p138
      %p140 = scmp.ne.s32.totalorder %s128, %s129
      %p141 = scmp.eq.s32.totalorder %s25, 1
      %p142 = por %p140, %p141
      %p144 = scmp.ne.s32.totalorder %s129, %s143
      %p145 = scmp.eq.s32.totalorder %s25, 0
      %p146 = por %p144, %p145
      %s148 = sadd.s32 %s147, 1
      %p151 = scmp.eq.s32.totalorder %s19, 1
      %p152 = scmp.ne.s32.totalorder %s147, %s149
      %p153 = scmp.eq.s32.totalorder %s19, 0
      %p154 = por %p152, %p153
      %p155 = scmp.ne.s32.totalorder %s147, %s149
      %p156 = scmp.eq.s32.totalorder %s24, 1
      %p157 = por %p155, %p156
      %p158 = scmp.ne.s32.totalorder %s149, %s150
      %p159 = scmp.eq.s32.totalorder %s24, 0
      %p160 = por %p158, %p159
      %p161 = scmp.ne.s32.totalorder %s149, %s150
      %p162 = scmp.eq.s32.totalorder %s25, 1
      %p163 = por %p161, %p162
      %p165 = scmp.ne.s32.totalorder %s150, %s164
      %p166 = scmp.eq.s32.totalorder %s25, 0
      %p167 = por %p165, %p166
      %s169 = sadd.s32 %s168, 1
      %p172 = scmp.eq.s32.totalorder %s19, 1
      %p173 = scmp.ne.s32.totalorder %s168, %s170
      %p174 = scmp.eq.s32.totalorder %s19, 0
      %p175 = por %p173, %p174
      %p176 = scmp.ne.s32.totalorder %s168, %s170
      %p177 = scmp.eq.s32.totalorder %s24, 1
      %p178 = por %p176, %p177
      %p179 = scmp.ne.s32.totalorder %s170, %s171
      %p180 = scmp.eq.s32.totalorder %s24, 0
      %p181 = por %p179, %p180
      %p182 = scmp.ne.s32.totalorder %s170, %s171
      %p183 = scmp.eq.s32.totalorder %s25, 1
      %p184 = por %p182, %p183
      %p186 = scmp.ne.s32.totalorder %s171, %s185
      %p187 = scmp.eq.s32.totalorder %s25, 0
      %p188 = por %p186, %p187
      %s190 = sadd.s32 %s189, 1
      %p193 = scmp.eq.s32.totalorder %s19, 1
      %p194 = scmp.ne.s32.totalorder %s189, %s191
      %p195 = scmp.eq.s32.totalorder %s19, 0
      %p196 = por %p194, %p195
      %p197 = scmp.ne.s32.totalorder %s189, %s191
      %p198 = scmp.eq.s32.totalorder %s24, 1
      %p199 = por %p197, %p198
      %p200 = scmp.ne.s32.totalorder %s191, %s192
      %p201 = scmp.eq.s32.totalorder %s24, 0
      %p202 = por %p200, %p201
      %p203 = scmp.ne.s32.totalorder %s191, %s192
      %p204 = scmp.eq.s32.totalorder %s25, 1
      %p205 = por %p203, %p204
      %p207 = scmp.ne.s32.totalorder %s192, %s206
      %p208 = scmp.eq.s32.totalorder %s25, 0
      %p209 = por %p207, %p208
      %s211 = sadd.s32 %s210, 1
      %p214 = scmp.eq.s32.totalorder %s19, 1
      %p215 = scmp.ne.s32.totalorder %s210, %s212
      %p216 = scmp.eq.s32.totalorder %s19, 0
      %p217 = por %p215, %p216
      %p218 = scmp.ne.s32.totalorder %s210, %s212
      %p219 = scmp.eq.s32.totalorder %s24, 1
      %p220 = por %p218, %p219
      %p221 = scmp.ne.s32.totalorder %s212, %s213
      %p222 = scmp.eq.s32.totalorder %s24, 0
      %p223 = por %p221, %p222
      %p224 = scmp.ne.s32.totalorder %s212, %s213
      %p225 = scmp.eq.s32.totalorder %s25, 1
      %p226 = por %p224, %p225
      %p228 = scmp.ne.s32.totalorder %s213, %s227
      %p229 = scmp.eq.s32.totalorder %s25, 0
      %p230 = por %p228, %p229
      %s232 = sadd.s32 %s231, 1
      %p235 = scmp.eq.s32.totalorder %s19, 1
      %p236 = scmp.ne.s32.totalorder %s231, %s233
      %p237 = scmp.eq.s32.totalorder %s19, 0
      %p238 = por %p236, %p237
      %p239 = scmp.ne.s32.totalorder %s231, %s233
      %p240 = scmp.eq.s32.totalorder %s24, 1
      %p241 = por %p239, %p240
      %p242 = scmp.ne.s32.totalorder %s233, %s234
      %p243 = scmp.eq.s32.totalorder %s24, 0
      %p244 = por %p242, %p243
      %p245 = scmp.ne.s32.totalorder %s233, %s234
      %p246 = scmp.eq.s32.totalorder %s25, 1
      %p247 = por %p245, %p246
      %p249 = scmp.ne.s32.totalorder %s234, %s248
      %p250 = scmp.eq.s32.totalorder %s25, 0
      %p251 = por %p249, %p250
      %s252 = ssub.s32 %s19, %s26
      %p253 = scmp.eq.s32.totalorder %s252, 0
      %s255 = sadd.s32 %s254, 1
      %s256 = scalar_select %p253, %s254, %s255
      %p259 = pneg %p253
      %p260 = scmp.eq.s32.totalorder %s19, 1
      %p261 = por %p259, %p260
      %p262 = scmp.ne.s32.totalorder %s254, %s257
      %p263 = scmp.eq.s32.totalorder %s19, 0
      %p264 = por %p262, %p263
      %p265 = scmp.ne.s32.totalorder %s254, %s257
      %p266 = scmp.eq.s32.totalorder %s24, 1
      %p267 = por %p265, %p266
      %p268 = scmp.ne.s32.totalorder %s257, %s258
      %p269 = scmp.eq.s32.totalorder %s24, 0
      %p270 = por %p268, %p269
      %p271 = scmp.ne.s32.totalorder %s257, %s258
      %p272 = scmp.eq.s32.totalorder %s25, 1
      %p273 = por %p271, %p272
      %p275 = scmp.ne.s32.totalorder %s258, %s274
      %p276 = scmp.eq.s32.totalorder %s25, 0
      %p277 = por %p275, %p276
      %s278 = ssub.s32 %s19, %s26
      %p279 = scmp.eq.s32.totalorder %s278, 0
      %s281 = sadd.s32 %s280, 1
      %s282 = scalar_select %p279, %s280, %s281
      %p285 = pneg %p279
      %p286 = scmp.eq.s32.totalorder %s19, 1
      %p287 = por %p285, %p286
      %p288 = scmp.ne.s32.totalorder %s280, %s283
      %p289 = scmp.eq.s32.totalorder %s19, 0
      %p290 = por %p288, %p289
      %p291 = scmp.ne.s32.totalorder %s280, %s283
      %p292 = scmp.eq.s32.totalorder %s24, 1
      %p293 = por %p291, %p292
      %p294 = scmp.ne.s32.totalorder %s283, %s284
      %p295 = scmp.eq.s32.totalorder %s24, 0
      %p296 = por %p294, %p295
      %p297 = scmp.ne.s32.totalorder %s283, %s284
      %p298 = scmp.eq.s32.totalorder %s25, 1
      %p299 = por %p297, %p298
      %p301 = scmp.ne.s32.totalorder %s284, %s300
      %p302 = scmp.eq.s32.totalorder %s25, 0
      %p303 = por %p301, %p302
      %s304 = ssub.s32 %s19, %s26
      %p305 = scmp.eq.s32.totalorder %s304, 0
      %s307 = sadd.s32 %s306, 1
      %s308 = scalar_select %p305, %s306, %s307
      %p311 = pneg %p305
      %p312 = scmp.eq.s32.totalorder %s19, 1
      %p313 = por %p311, %p312
      %p314 = scmp.ne.s32.totalorder %s306, %s309
      %p315 = scmp.eq.s32.totalorder %s19, 0
      %p316 = por %p314, %p315
      %p317 = scmp.ne.s32.totalorder %s306, %s309
      %p318 = scmp.eq.s32.totalorder %s24, 1
      %p319 = por %p317, %p318
      %p320 = scmp.ne.s32.totalorder %s309, %s310
      %p321 = scmp.eq.s32.totalorder %s24, 0
      %p322 = por %p320, %p321
      %p323 = scmp.ne.s32.totalorder %s309, %s310
      %p324 = scmp.eq.s32.totalorder %s25, 1
      %p325 = por %p323, %p324
      %p327 = scmp.ne.s32.totalorder %s310, %s326
      %p328 = scmp.eq.s32.totalorder %s25, 0
      %p329 = por %p327, %p328
      %p330 = scmp.le.s32.totalorder 1, %s19
      %p331 = scmp.lt.s32.totalorder %s19, 3
      %p332 = pnand %p330, %p331
      %p333 = pneg %p332
      // Predicated region
      $region9: #{agent_forward.1} parent=5 // pred_check
        _
      $region10: #{agent_forward.1} parent=5 // pred_check_branch
        %335 = sbr.rel (%p332) target = $region12
      $region11: #{agent_forward.1} parent=5 // pred_region
        %s336 = ssub.s32 %s19, 1
        // Predicated region
        $region13: #{agent_forward.1} parent=11 // pred_check
          %p337 = pneg %p118
        $region14: #{agent_forward.1} parent=11 // pred_check_branch
          %339 = sbr.rel (%p337) target = $region16
        $region15: #{agent_forward.1} parent=11 // pred_region
          _
        $region16: #{agent_forward.1} parent=11 // pred_fallthru
          _
        // Predicated region
        $region17: #{agent_forward.1} parent=11 // pred_check
          %p340 = pneg %p139
        $region18: #{agent_forward.1} parent=11 // pred_check_branch
          %342 = sbr.rel (%p340) target = $region20
        $region19: #{agent_forward.1} parent=11 // pred_region
          _
        $region20: #{agent_forward.1} parent=11 // pred_fallthru
          _
        // Predicated region
        $region21: #{agent_forward.1} parent=11 // pred_check
          %p343 = pneg %p160
        $region22: #{agent_forward.1} parent=11 // pred_check_branch
          %345 = sbr.rel (%p343) target = $region24
        $region23: #{agent_forward.1} parent=11 // pred_region
          _
        $region24: #{agent_forward.1} parent=11 // pred_fallthru
          _
        // Predicated region
        $region25: #{agent_forward.1} parent=11 // pred_check
          %p346 = pneg %p181
        $region26: #{agent_forward.1} parent=11 // pred_check_branch
          %348 = sbr.rel (%p346) target = $region28
        $region27: #{agent_forward.1} parent=11 // pred_region
          _
        $region28: #{agent_forward.1} parent=11 // pred_fallthru
          _
        // Predicated region
        $region29: #{agent_forward.1} parent=11 // pred_check
          %p349 = pneg %p202
        $region30: #{agent_forward.1} parent=11 // pred_check_branch
          %351 = sbr.rel (%p349) target = $region32
        $region31: #{agent_forward.1} parent=11 // pred_region
          _
        $region32: #{agent_forward.1} parent=11 // pred_fallthru
          _
        // Predicated region
        $region33: #{agent_forward.1} parent=11 // pred_check
          %p352 = pneg %p223
        $region34: #{agent_forward.1} parent=11 // pred_check_branch
          %354 = sbr.rel (%p352) target = $region36
        $region35: #{agent_forward.1} parent=11 // pred_region
          _
        $region36: #{agent_forward.1} parent=11 // pred_fallthru
          _
        // Predicated region
        $region37: #{agent_forward.1} parent=11 // pred_check
          %p355 = pneg %p244
        $region38: #{agent_forward.1} parent=11 // pred_check_branch
          %357 = sbr.rel (%p355) target = $region40
        $region39: #{agent_forward.1} parent=11 // pred_region
          _
        $region40: #{agent_forward.1} parent=11 // pred_fallthru
          _
      $region12: #{agent_forward.1} parent=5 // pred_fallthru
        _
      %p358 = scmp.lt.s32.totalorder %s19, 2
      // Predicated region
      $region41: #{agent_forward.1} parent=5 // pred_check
        %p359 = pneg %p358
      $region42: #{agent_forward.1} parent=5 // pred_check_branch
        %361 = sbr.rel (%p359) target = $region44
      $region43: #{agent_forward.1} parent=5 // pred_region
        // Predicated region
        $region45: #{agent_forward.1} parent=43 // pred_check
          %p362 = pneg %p39
        $region46: #{agent_forward.1} parent=43 // pred_check_branch
          %364 = sbr.rel (%p362) target = $region48
        $region47: #{agent_forward.1} parent=43 // pred_region
          %s365 = sand.u32 %s29, 1
          %s366 = sand.u32 %s29, 1
          %s367 = smul.addr %s366, 128
          %s368 = scalar_lea.vmem [#allocation4], %s367
          %s369 = smul.u32 2, %s19
          %s370 = smul.addr %s369, 2
          %s371 = smul.addr %s370, 8
          %s372 = scalar_lea.vmem %s0, %s371
          // Predicated region
          $region49: #{agent_forward.1} parent=47 // pred_check
            _
          $region50: #{agent_forward.1} parent=47 // pred_check_branch
            %374 = sbr.rel (0) target = $region52
          $region51: #{agent_forward.1} parent=47 // pred_region
            // Predicated region
            $region53: #{agent_forward.1} parent=51 // pred_check
              _
            $region54: #{agent_forward.1} parent=51 // pred_check_branch
              %376 = sbr.rel (0) target = $region56
            $region55: #{agent_forward.1} parent=51 // pred_region
              loop: start=0, step=1, limit=1
              $region57: #{agent_forward.1} parent=55 // loop_pre_header
                _
              $region58: #{agent_forward.1} parent=55 // loop_header
                %s378 = sphi 0, %s382
                %p379 = scmp.ge.s32.totalorder %s378, 1
                %s383 = sphi %s372, %s372
                %s384 = sphi %s368, %s368
              $region59: #{agent_forward.1} parent=55 // loop_header_branch
                %381 = sbr.rel (%p379) target = $region63
              $region60: #{agent_forward.1} parent=55 // loop_body
                %v385 = vld [vmem:[%s383] sm:$0xff]
                %386 = vst [vmem:[%s384] sm:$0xff] %v385
                %v387 = vld [vmem:[%s383 + $0x8] sm:$0xff]
                %388 = vst [vmem:[%s384 + $0x8] sm:$0xff] %v387
                %v389 = vld [vmem:[%s383 + $0x10] sm:$0xff]
                %390 = vst [vmem:[%s384 + $0x10] sm:$0xff] %v389
                %v391 = vld [vmem:[%s383 + $0x18] sm:$0xff]
                %392 = vst [vmem:[%s384 + $0x18] sm:$0xff] %v391
                %v393 = vld [vmem:[%s383 + $0x40] sm:$0xff]
                %394 = vst [vmem:[%s384 + $0x20] sm:$0xff] %v393
                %v395 = vld [vmem:[%s383 + $0x48] sm:$0xff]
                %396 = vst [vmem:[%s384 + $0x28] sm:$0xff] %v395
                %v397 = vld [vmem:[%s383 + $0x50] sm:$0xff]
                %398 = vst [vmem:[%s384 + $0x30] sm:$0xff] %v397
                %v399 = vld [vmem:[%s383 + $0x58] sm:$0xff]
                %400 = vst [vmem:[%s384 + $0x38] sm:$0xff] %v399
                %v401 = vld [vmem:[%s383 + $0x80] sm:$0xff]
                %402 = vst [vmem:[%s384 + $0x40] sm:$0xff] %v401
                %v403 = vld [vmem:[%s383 + $0x88] sm:$0xff]
                %404 = vst [vmem:[%s384 + $0x48] sm:$0xff] %v403
                %v405 = vld [vmem:[%s383 + $0x90] sm:$0xff]
                %406 = vst [vmem:[%s384 + $0x50] sm:$0xff] %v405
                %v407 = vld [vmem:[%s383 + $0x98] sm:$0xff]
                %408 = vst [vmem:[%s384 + $0x58] sm:$0xff] %v407
                %v409 = vld [vmem:[%s383 + $0xc0] sm:$0xff]
                %410 = vst [vmem:[%s384 + $0x60] sm:$0xff] %v409
                %v411 = vld [vmem:[%s383 + $0xc8] sm:$0xff]
                %412 = vst [vmem:[%s384 + $0x68] sm:$0xff] %v411
                %v413 = vld [vmem:[%s383 + $0xd0] sm:$0xff]
                %414 = vst [vmem:[%s384 + $0x70] sm:$0xff] %v413
                %v415 = vld [vmem:[%s383 + $0xd8] sm:$0xff]
                %416 = vst [vmem:[%s384 + $0x78] sm:$0xff] %v415
              $region61: #{agent_forward.1} parent=55 // loop_footer
                %s382 = sadd.s32 1, %s378
              $region62: #{agent_forward.1} parent=55 // loop_footer_branch
                %377 = sbr.rel target = $region58
              $region63: #{agent_forward.1} parent=55 // loop_exit
                _
            $region56: #{agent_forward.1} parent=51 // pred_fallthru
              _
            // Predicated region
            $region64: #{agent_forward.1} parent=51 // pred_check
              _
            $region65: #{agent_forward.1} parent=51 // pred_check_branch
              %418 = sbr.rel target = $region67
            $region66: #{agent_forward.1} parent=51 // pred_region
              _
            $region67: #{agent_forward.1} parent=51 // pred_fallthru
              _
          $region52: #{agent_forward.1} parent=47 // pred_fallthru
            _
          %419 = vnop
        $region48: #{agent_forward.1} parent=43 // pred_fallthru
          _
        // Predicated region
        $region68: #{agent_forward.1} parent=43 // pred_check
          %p420 = pneg %p65
        $region69: #{agent_forward.1} parent=43 // pred_check_branch
          %422 = sbr.rel (%p420) target = $region71
        $region70: #{agent_forward.1} parent=43 // pred_region
          %s423 = smul.u32 2, %s19
          %p424 = scmp.lt.s32.totalorder %s423, 3
          %s425 = scalar_select %p424, %s423, 3
          %s426 = smul.addr %s425, 8
          %s427 = scalar_lea.vmem %s1, %s426
          %s428 = smul.u32 2, %s19
        $region71: #{agent_forward.1} parent=43 // pred_fallthru
          _
        // Predicated region
        $region72: #{agent_forward.1} parent=43 // pred_check
          %p429 = pneg %p91
        $region73: #{agent_forward.1} parent=43 // pred_check_branch
          %431 = sbr.rel (%p429) target = $region75
        $region74: #{agent_forward.1} parent=43 // pred_region
          %s432 = smul.u32 2, %s19
          %p433 = scmp.lt.s32.totalorder %s432, 3
          %s434 = scalar_select %p433, %s432, 3
          %s435 = smul.addr %s434, 8
          %s436 = scalar_lea.vmem %s2, %s435
          %s437 = smul.u32 2, %s19
        $region75: #{agent_forward.1} parent=43 // pred_fallthru
          _
      $region44: #{agent_forward.1} parent=5 // pred_fallthru
        _
      %p438 = scmp.le.s32.totalorder 1, %s19
      %p439 = scmp.lt.s32.totalorder %s19, 3
      %p440 = pnand %p438, %p439
      %p441 = pneg %p440
      // Predicated region
      $region76: #{agent_forward.1} parent=5 // pred_check
        _
      $region77: #{agent_forward.1} parent=5 // pred_check_branch
        %443 = sbr.rel (%p440) target = $region79
      $region78: #{agent_forward.1} parent=5 // pred_region
        %s444 = ssub.s32 %s19, 1
        %s445 = sand.u32 %s32, 1
        %s446 = sand.u32 %s32, 1
        %s447 = smul.addr %s446, 128
        %s448 = scalar_lea.vmem [#allocation4], %s447
        // Predicated region
        $region80: #{agent_forward.1} parent=78 // pred_check
          %p449 = pneg %p45
        $region81: #{agent_forward.1} parent=78 // pred_check_branch
          %451 = sbr.rel (%p449) target = $region83
        $region82: #{agent_forward.1} parent=78 // pred_region
          _
        $region83: #{agent_forward.1} parent=78 // pred_fallthru
          _
        %s452 = sand.u32 %s32, 1
        %s453 = sand.u32 %s32, 1
        %s454 = smul.addr %s453, 128
        %s455 = scalar_lea.vmem [#allocation4], %s454
        %p456 = pneg %p45
        %p457 = pneg %p42
        %s458 = smul.u32 2, %s24
        %p459 = scmp.lt.s32.totalorder %s458, 3
        %s460 = scalar_select %p459, %s458, 3
        %s461 = smul.addr %s460, 8
        %s462 = scalar_lea.vmem %s1, %s461
        %p463 = pneg %p71
        %p464 = pneg %p68
        %s465 = smul.u32 2, %s24
        %p466 = scmp.lt.s32.totalorder %s465, 3
        %s467 = scalar_select %p466, %s465, 3
        %s468 = smul.addr %s467, 8
        %s469 = scalar_lea.vmem %s2, %s468
        %p470 = pneg %p97
        %p471 = pneg %p94
        %p472 = pneg %p118
        %p473 = pneg %p115
        %p474 = pneg %p139
        %p475 = pneg %p136
        %p476 = pneg %p160
        %p477 = pneg %p157
        %p478 = pneg %p181
        %p479 = pneg %p178
        %p480 = pneg %p202
        %p481 = pneg %p199
        %p482 = pneg %p223
        %p483 = pneg %p220
        %p484 = pneg %p244
        %p485 = pneg %p241
        %p486 = pneg %p270
        %p487 = pneg %p267
        %s488 = sand.u32 %s257, 1
        %s489 = sand.u32 %s257, 1
        %s490 = smul.addr %s489, 128
        %s491 = scalar_lea.vmem [#allocation5], %s490
        %p492 = pneg %p296
        %p493 = pneg %p293
        %s494 = smul.u32 2, %s24
        %p495 = scmp.lt.s32.totalorder %s494, 3
        %s496 = scalar_select %p495, %s494, 3
        %s497 = smul.addr %s496, 8
        %s498 = scalar_lea.vmem %s11, %s497
        %p499 = pneg %p322
        %p500 = pneg %p319
        %s501 = smul.u32 2, %s24
        %p502 = scmp.lt.s32.totalorder %s501, 3
        %s503 = scalar_select %p502, %s501, 3
        %s504 = smul.addr %s503, 8
        %s505 = scalar_lea.vmem %s12, %s504
        %s506 = smul.u32 2, %s24
        %s507 = smul.u32 2, %s24
        %p508 = scmp.lt.s32.totalorder %s507, 3
        %s509 = scalar_select %p508, %s507, 3
        %s510 = smul.addr %s509, 8
        %s511 = scalar_lea.vmem %s1, %s510
        %s512 = smul.u32 2, %s24
        %s513 = smul.u32 2, %s24
        %p514 = scmp.lt.s32.totalorder %s513, 3
        %s515 = scalar_select %p514, %s513, 3
        %s516 = smul.addr %s515, 8
        %s517 = scalar_lea.vmem %s2, %s516
        %s518 = smul.u32 2, %s24
        %s519 = smul.u32 2, %s24
        %s520 = smul.u32 2, %s24
        %p521 = scmp.lt.s32.totalorder %s520, 3
        %s522 = scalar_select %p521, %s520, 3
        %s523 = smul.addr %s522, 8
        %s524 = scalar_lea.vmem %s11, %s523
        %s525 = smul.u32 2, %s24
        %s526 = smul.u32 2, %s24
        %p527 = scmp.lt.s32.totalorder %s526, 3
        %s528 = scalar_select %p527, %s526, 3
        %s529 = smul.addr %s528, 8
        %s530 = scalar_lea.vmem %s12, %s529
        %s531 = smul.u32 2, %s24
        %v533 = vld [vmem:[%s448] sm:$0xff]
        %v534 = vld [vmem:[%s448 + $0x8] sm:$0xff]
        %v535 = vld [vmem:[%s448 + $0x10] sm:$0xff]
        %v536 = vld [vmem:[%s448 + $0x18] sm:$0xff]
        %v537 = vld [vmem:[%s448 + $0x20] sm:$0xff]
        %v538 = vld [vmem:[%s448 + $0x28] sm:$0xff]
        %v539 = vld [vmem:[%s448 + $0x30] sm:$0xff]
        %v540 = vld [vmem:[%s448 + $0x38] sm:$0xff]
        %v541 = vld [vmem:[%s448 + $0x40] sm:$0xff]
        %v542 = vld [vmem:[%s448 + $0x48] sm:$0xff]
        %v543 = vld [vmem:[%s448 + $0x50] sm:$0xff]
        %v544 = vld [vmem:[%s448 + $0x58] sm:$0xff]
        %v545 = vld [vmem:[%s448 + $0x60] sm:$0xff]
        %v546 = vld [vmem:[%s448 + $0x68] sm:$0xff]
        %v547 = vld [vmem:[%s448 + $0x70] sm:$0xff]
        %v548 = vld [vmem:[%s448 + $0x78] sm:$0xff]
        %v549 = vpack.c.bf16 %v535, %v533
        %v550 = vpack.c.bf16 %v536, %v534
        %v551 = vpack.c.bf16 %v539, %v537
        %v552 = vpack.c.bf16 %v540, %v538
        %v553 = vpack.c.bf16 %v543, %v541
        %v554 = vpack.c.bf16 %v544, %v542
        %v555 = vpack.c.bf16 %v547, %v545
        %v556 = vpack.c.bf16 %v548, %v546
        %v557 = vld [vmem:[%s3] sm:$0xf]
        %v558 = vld [vmem:[%s3 + $0x4] sm:$0xf]
        %v559 = vld [vmem:[%s3 + $0x8] sm:$0xf]
        %v560 = vld [vmem:[%s3 + $0xc] sm:$0xf]
        %v561 = vld [vmem:[%s3 + $0x10] sm:$0xf]
        %v562 = vld [vmem:[%s3 + $0x14] sm:$0xf]
        %v563 = vld [vmem:[%s3 + $0x18] sm:$0xf]
        %v564 = vld [vmem:[%s3 + $0x1c] sm:$0xf]
        %v565 = vld [vmem:[%s3 + $0x20] sm:$0xf]
        %v566 = vld [vmem:[%s3 + $0x24] sm:$0xf]
        %v567 = vld [vmem:[%s3 + $0x28] sm:$0xf]
        %v568 = vld [vmem:[%s3 + $0x2c] sm:$0xf]
        %v569 = vld [vmem:[%s3 + $0x30] sm:$0xf]
        %v570 = vld [vmem:[%s3 + $0x34] sm:$0xf]
        %v571 = vld [vmem:[%s3 + $0x38] sm:$0xf]
        %v572 = vld [vmem:[%s3 + $0x3c] sm:$0xf]
        %v573 = vld [vmem:[%s3 + $0x40] sm:$0xf]
        %v574 = vld [vmem:[%s3 + $0x44] sm:$0xf]
        %v575 = vld [vmem:[%s3 + $0x48] sm:$0xf]
        %v576 = vld [vmem:[%s3 + $0x4c] sm:$0xf]
        %v577 = vld [vmem:[%s3 + $0x50] sm:$0xf]
        %v578 = vld [vmem:[%s3 + $0x54] sm:$0xf]
        %v579 = vld [vmem:[%s3 + $0x58] sm:$0xf]
        %v580 = vld [vmem:[%s3 + $0x5c] sm:$0xf]
        %v581 = vld [vmem:[%s3 + $0x60] sm:$0xf]
        %v582 = vld [vmem:[%s3 + $0x64] sm:$0xf]
        %v583 = vld [vmem:[%s3 + $0x68] sm:$0xf]
        %v584 = vld [vmem:[%s3 + $0x6c] sm:$0xf]
        %v585 = vld [vmem:[%s3 + $0x70] sm:$0xf]
        %v586 = vld [vmem:[%s3 + $0x74] sm:$0xf]
        %v587 = vld [vmem:[%s3 + $0x78] sm:$0xf]
        %v588 = vld [vmem:[%s3 + $0x7c] sm:$0xf]
        %v589 = vld [vmem:[%s4] sm:$0x1]
        %v591 = vlaneseq
        %v592 = vshrl.u32 %v591, 7
        %v593 = vsub.s32 0, %v592
        %v594 = vrot.slane %v589, %v593
        %v628 = vunpack.c.l.b16 %v557
        %v629 = vunpack.c.l.b16 %v558
        %v630 = vunpack.c.l.b16 %v559
        %v631 = vunpack.c.l.b16 %v560
        %v632 = vunpack.c.l.b16 %v561
        %v633 = vunpack.c.l.b16 %v562
        %v634 = vunpack.c.l.b16 %v563
        %v635 = vunpack.c.l.b16 %v564
        %v636 = vunpack.c.l.b16 %v565
        %v637 = vunpack.c.l.b16 %v566
        %v638 = vunpack.c.l.b16 %v567
        %v639 = vunpack.c.l.b16 %v568
        %v640 = vunpack.c.l.b16 %v569
        %v641 = vunpack.c.l.b16 %v570
        %v642 = vunpack.c.l.b16 %v571
        %v643 = vunpack.c.l.b16 %v572
        %v644 = vunpack.c.l.b16 %v573
        %v645 = vunpack.c.l.b16 %v574
        %v646 = vunpack.c.l.b16 %v575
        %v647 = vunpack.c.l.b16 %v576
        %v648 = vunpack.c.l.b16 %v577
        %v649 = vunpack.c.l.b16 %v578
        %v650 = vunpack.c.l.b16 %v579
        %v651 = vunpack.c.l.b16 %v580
        %v652 = vunpack.c.l.b16 %v581
        %v653 = vunpack.c.l.b16 %v582
        %v654 = vunpack.c.l.b16 %v583
        %v655 = vunpack.c.l.b16 %v584
        %v656 = vunpack.c.l.b16 %v585
        %v657 = vunpack.c.l.b16 %v586
        %v658 = vunpack.c.l.b16 %v587
        %v659 = vunpack.c.l.b16 %v588
        %v660 = vpack.c.b16 %v629, %v628
        %v661 = vpack.c.b16 %v631, %v630
        %v662 = vpack.c.b16 %v633, %v632
        %v663 = vpack.c.b16 %v635, %v634
        %v664 = vpack.c.b16 %v637, %v636
        %v665 = vpack.c.b16 %v639, %v638
        %v666 = vpack.c.b16 %v641, %v640
        %v667 = vpack.c.b16 %v643, %v642
        %v668 = vpack.c.b16 %v645, %v644
        %v669 = vpack.c.b16 %v647, %v646
        %v670 = vpack.c.b16 %v649, %v648
        %v671 = vpack.c.b16 %v651, %v650
        %v672 = vpack.c.b16 %v653, %v652
        %v673 = vpack.c.b16 %v655, %v654
        %v674 = vpack.c.b16 %v657, %v656
        %v675 = vpack.c.b16 %v659, %v658
        %692 = vmatprep.subr.bf16.mxu0 0
        %693 = vmatpush1.bf16.msra.mxu0 %v660
        %694 = vmatprep.subr.bf16.mxu0 0
        %695 = vmatpush1.bf16.msra.mxu0 %v661
        %696 = vmatprep.subr.bf16.mxu0 0
        %697 = vmatpush1.bf16.msra.mxu0 %v662
        %698 = vmatprep.subr.bf16.mxu0 0
        %699 = vmatpush1.bf16.msra.mxu0 %v663
        %700 = vmatprep.subr.bf16.mxu0 0
        %701 = vmatpush1.bf16.msra.mxu0 %v664
        %702 = vmatprep.subr.bf16.mxu0 0
        %703 = vmatpush1.bf16.msra.mxu0 %v665
        %704 = vmatprep.subr.bf16.mxu0 0
        %705 = vmatpush1.bf16.msra.mxu0 %v666
        %706 = vmatprep.subr.bf16.mxu0 0
        %707 = vmatpush1.bf16.msra.mxu0 %v667
        %708 = vmatprep.subr.bf16.mxu0 0
        %709 = vmatpush1.bf16.msra.mxu0 %v668
        %710 = vmatprep.subr.bf16.mxu0 0
        %711 = vmatpush1.bf16.msra.mxu0 %v669
        %712 = vmatprep.subr.bf16.mxu0 0
        %713 = vmatpush1.bf16.msra.mxu0 %v670
        %714 = vmatprep.subr.bf16.mxu0 0
        %715 = vmatpush1.bf16.msra.mxu0 %v671
        %716 = vmatprep.subr.bf16.mxu0 0
        %717 = vmatpush1.bf16.msra.mxu0 %v672
        %718 = vmatprep.subr.bf16.mxu0 0
        %719 = vmatpush1.bf16.msra.mxu0 %v673
        %720 = vmatprep.subr.bf16.mxu0 0
        %721 = vmatpush1.bf16.msra.mxu0 %v674
        %722 = vmatprep.subr.bf16.mxu0 0
        %723 = vmatpush1.bf16.msra.mxu0 %v675
        %724 = vmatprep.mubr.bf16.mxu0 %v550
        %725 = vmatmul.mubr.bf16.gmra.mrb[0].mxu0 %v549
        %v726 = vpop.f32.mrb[0].mxu0
        %v727 = vadd.f32 %v594, %v726
        %v728 = vpop.f32.mrb[0].mxu0
        %v729 = vpop.f32.mrb[0].mxu0
        %v730 = vadd.f32 %v594, %v729
        %v731 = vpop.f32.mrb[0].mxu0
        %732 = vmatprep.mubr.bf16.mxu0 %v552
        %733 = vmatmul.mubr.bf16.gmra.mrb[0].mxu0 %v551
        %v734 = vpop.f32.mrb[0].mxu0
        %v735 = vadd.f32 %v594, %v734
        %v736 = vpop.f32.mrb[0].mxu0
        %v737 = vpop.f32.mrb[0].mxu0
        %v738 = vadd.f32 %v594, %v737
        %v739 = vpop.f32.mrb[0].mxu0
        %740 = vmatprep.mubr.bf16.mxu0 %v554
        %741 = vmatmul.mubr.bf16.gmra.mrb[0].mxu0 %v553
        %v742 = vpop.f32.mrb[0].mxu0
        %v743 = vadd.f32 %v594, %v742
        %v744 = vpop.f32.mrb[0].mxu0
        %v745 = vpop.f32.mrb[0].mxu0
        %v746 = vadd.f32 %v594, %v745
        %v747 = vpop.f32.mrb[0].mxu0
        %748 = vmatprep.mubr.bf16.mxu0 %v556
        %749 = vmatmul.mubr.bf16.gmra.mrb[0].mxu0 %v555
        %v750 = vpop.f32.mrb[0].mxu0
        %v751 = vadd.f32 %v594, %v750
        %v752 = vpop.f32.mrb[0].mxu0
        %v753 = vpop.f32.mrb[0].mxu0
        %v754 = vadd.f32 %v594, %v753
        %v755 = vpop.f32.mrb[0].mxu0
        %756 = vdwg.mxu0
        %v757 = vmax.f32 %v727, 0.0
        %v758 = vmax.f32 %v730, 0.0
        %v759 = vmax.f32 %v735, 0.0
        %v760 = vmax.f32 %v738, 0.0
        %v761 = vmax.f32 %v743, 0.0
        %v762 = vmax.f32 %v746, 0.0
        %v763 = vmax.f32 %v751, 0.0
        %v764 = vmax.f32 %v754, 0.0
        %v765 = vpack.c.bf16 %v758, %v757
        %v766 = vpack.c.bf16 %v760, %v759
        %v767 = vpack.c.bf16 %v762, %v761
        %v768 = vpack.c.bf16 %v764, %v763
        %v769 = vld [vmem:[%s5] sm:$0xff]
        %v770 = vld [vmem:[%s5 + $0x8] sm:$0xff]
        %v771 = vld [vmem:[%s5 + $0x10] sm:$0xff]
        %v772 = vld [vmem:[%s5 + $0x18] sm:$0xff]
        %v773 = vld [vmem:[%s5 + $0x20] sm:$0xff]
        %v774 = vld [vmem:[%s5 + $0x28] sm:$0xff]
        %v775 = vld [vmem:[%s5 + $0x30] sm:$0xff]
        %v776 = vld [vmem:[%s5 + $0x38] sm:$0xff]
        %v777 = vld [vmem:[%s5 + $0x40] sm:$0xff]
        %v778 = vld [vmem:[%s5 + $0x48] sm:$0xff]
        %v779 = vld [vmem:[%s5 + $0x50] sm:$0xff]
        %v780 = vld [vmem:[%s5 + $0x58] sm:$0xff]
        %v781 = vld [vmem:[%s5 + $0x60] sm:$0xff]
        %v782 = vld [vmem:[%s5 + $0x68] sm:$0xff]
        %v783 = vld [vmem:[%s5 + $0x70] sm:$0xff]
        %v784 = vld [vmem:[%s5 + $0x78] sm:$0xff]
        %v785 = vld [vmem:[%s5 + $0x80] sm:$0xff]
        %v786 = vld [vmem:[%s5 + $0x88] sm:$0xff]
        %v787 = vld [vmem:[%s5 + $0x90] sm:$0xff]
        %v788 = vld [vmem:[%s5 + $0x98] sm:$0xff]
        %v789 = vld [vmem:[%s5 + $0xa0] sm:$0xff]
        %v790 = vld [vmem:[%s5 + $0xa8] sm:$0xff]
        %v791 = vld [vmem:[%s5 + $0xb0] sm:$0xff]
        %v792 = vld [vmem:[%s5 + $0xb8] sm:$0xff]
        %v793 = vld [vmem:[%s5 + $0xc0] sm:$0xff]
        %v794 = vld [vmem:[%s5 + $0xc8] sm:$0xff]
        %v795 = vld [vmem:[%s5 + $0xd0] sm:$0xff]
        %v796 = vld [vmem:[%s5 + $0xd8] sm:$0xff]
        %v797 = vld [vmem:[%s5 + $0xe0] sm:$0xff]
        %v798 = vld [vmem:[%s5 + $0xe8] sm:$0xff]
        %v799 = vld [vmem:[%s5 + $0xf0] sm:$0xff]
        %v800 = vld [vmem:[%s5 + $0xf8] sm:$0xff]
        %v801 = vld [vmem:[%s7] sm:$0xf]
        %v803 = vlaneseq
        %v804 = vshrl.u32 %v803, 7
        %v805 = vsub.s32 0, %v804
        %v806 = vrot.slane %v801, %v805
        %v807 = vlaneseq
        %v808 = vshrl.u32 %v807, 7
        %v809 = vsub.s32 1, %v808
        %v810 = vrot.slane %v801, %v809
        %v811 = vlaneseq
        %v812 = vshrl.u32 %v811, 7
        %v813 = vsub.s32 2, %v812
        %v814 = vrot.slane %v801, %v813
        %v815 = vlaneseq
        %v816 = vshrl.u32 %v815, 7
        %v817 = vsub.s32 3, %v816
        %v818 = vrot.slane %v801, %v817
        %v855 = vunpack.c.l.b16 %v769
        %v856 = vunpack.c.h.b16 %v769
        %v857 = vunpack.c.l.b16 %v770
        %v858 = vunpack.c.h.b16 %v770
        %v859 = vunpack.c.l.b16 %v771
        %v860 = vunpack.c.h.b16 %v771
        %v861 = vunpack.c.l.b16 %v772
        %v862 = vunpack.c.h.b16 %v772
        %v863 = vunpack.c.l.b16 %v773
        %v864 = vunpack.c.h.b16 %v773
        %v865 = vunpack.c.l.b16 %v774
        %v866 = vunpack.c.h.b16 %v774
        %v867 = vunpack.c.l.b16 %v775
        %v868 = vunpack.c.h.b16 %v775
        %v869 = vunpack.c.l.b16 %v776
        %v870 = vunpack.c.h.b16 %v776
        %v871 = vunpack.c.l.b16 %v777
        %v872 = vunpack.c.h.b16 %v777
        %v873 = vunpack.c.l.b16 %v778
        %v874 = vunpack.c.h.b16 %v778
        %v875 = vunpack.c.l.b16 %v779
        %v876 = vunpack.c.h.b16 %v779
        %v877 = vunpack.c.l.b16 %v780
        %v878 = vunpack.c.h.b16 %v780
        %v879 = vunpack.c.l.b16 %v781
        %v880 = vunpack.c.h.b16 %v781
        %v881 = vunpack.c.l.b16 %v782
        %v882 = vunpack.c.h.b16 %v782
        %v883 = vunpack.c.l.b16 %v783
        %v884 = vunpack.c.h.b16 %v783
        %v885 = vunpack.c.l.b16 %v784
        %v886 = vunpack.c.h.b16 %v784
        %v887 = vunpack.c.l.b16 %v785
        %v888 = vunpack.c.h.b16 %v785
        %v889 = vunpack.c.l.b16 %v786
        %v890 = vunpack.c.h.b16 %v786
        %v891 = vunpack.c.l.b16 %v787
        %v892 = vunpack.c.h.b16 %v787
        %v893 = vunpack.c.l.b16 %v788
        %v894 = vunpack.c.h.b16 %v788
        %v895 = vunpack.c.l.b16 %v789
        %v896 = vunpack.c.h.b16 %v789
        %v897 = vunpack.c.l.b16 %v790
        %v898 = vunpack.c.h.b16 %v790
        %v899 = vunpack.c.l.b16 %v791
        %v900 = vunpack.c.h.b16 %v791
        %v901 = vunpack.c.l.b16 %v792
        %v902 = vunpack.c.h.b16 %v792
        %v903 = vunpack.c.l.b16 %v793
        %v904 = vunpack.c.h.b16 %v793
        %v905 = vunpack.c.l.b16 %v794
        %v906 = vunpack.c.h.b16 %v794
        %v907 = vunpack.c.l.b16 %v795
        %v908 = vunpack.c.h.b16 %v795
        %v909 = vunpack.c.l.b16 %v796
        %v910 = vunpack.c.h.b16 %v796
        %v911 = vunpack.c.l.b16 %v797
        %v912 = vunpack.c.h.b16 %v797
        %v913 = vunpack.c.l.b16 %v798
        %v914 = vunpack.c.h.b16 %v798
        %v915 = vunpack.c.l.b16 %v799
        %v916 = vunpack.c.h.b16 %v799
        %v917 = vunpack.c.l.b16 %v800
        %v918 = vunpack.c.h.b16 %v800
        %v919 = vpack.c.b16 %v859, %v855
        %v920 = vpack.c.b16 %v860, %v856
        %v921 = vpack.c.b16 %v861, %v857
        %v922 = vpack.c.b16 %v862, %v858
        %v923 = vpack.c.b16 %v867, %v863
        %v924 = vpack.c.b16 %v868, %v864
        %v925 = vpack.c.b16 %v869, %v865
        %v926 = vpack.c.b16 %v870, %v866
        %v927 = vpack.c.b16 %v875, %v871
        %v928 = vpack.c.b16 %v876, %v872
        %v929 = vpack.c.b16 %v877, %v873
        %v930 = vpack.c.b16 %v878, %v874
        %v931 = vpack.c.b16 %v883, %v879
        %v932 = vpack.c.b16 %v884, %v880
        %v933 = vpack.c.b16 %v885, %v881
        %v934 = vpack.c.b16 %v886, %v882
        %v935 = vpack.c.b16 %v891, %v887
        %v936 = vpack.c.b16 %v892, %v888
        %v937 = vpack.c.b16 %v893, %v889
        %v938 = vpack.c.b16 %v894, %v890
        %v939 = vpack.c.b16 %v899, %v895
        %v940 = vpack.c.b16 %v900, %v896
        %v941 = vpack.c.b16 %v901, %v897
        %v942 = vpack.c.b16 %v902, %v898
        %v943 = vpack.c.b16 %v907, %v903
        %v944 = vpack.c.b16 %v908, %v904
        %v945 = vpack.c.b16 %v909, %v905
        %v946 = vpack.c.b16 %v910, %v906
        %v947 = vpack.c.b16 %v915, %v911
        %v948 = vpack.c.b16 %v916, %v912
        %v949 = vpack.c.b16 %v917, %v913
        %v950 = vpack.c.b16 %v918, %v914
        %983 = vmatprep.subr.bf16.mxu0 %v920
        %984 = vmatpush1.bf16.msra.mxu0 %v919
        %985 = vmatprep.subr.bf16.mxu0 %v924
        %986 = vmatpush1.bf16.msra.mxu0 %v923
        %987 = vmatprep.subr.bf16.mxu0 %v928
        %988 = vmatpush1.bf16.msra.mxu0 %v927
        %989 = vmatprep.subr.bf16.mxu0 %v932
        %990 = vmatpush1.bf16.msra.mxu0 %v931
        %991 = vmatprep.subr.bf16.mxu0 %v936
        %992 = vmatpush1.bf16.msra.mxu0 %v935
        %993 = vmatprep.subr.bf16.mxu0 %v940
        %994 = vmatpush1.bf16.msra.mxu0 %v939
        %995 = vmatprep.subr.bf16.mxu0 %v944
        %996 = vmatpush1.bf16.msra.mxu0 %v943
        %997 = vmatprep.subr.bf16.mxu0 %v948
        %998 = vmatpush1.bf16.msra.mxu0 %v947
        %999 = vmatprep.subr.bf16.mxu0 0
        %1000 = vmatpush1.bf16.msra.mxu0 0
        %1001 = vmatprep.subr.bf16.mxu0 0
        %1002 = vmatpush1.bf16.msra.mxu0 0
        %1003 = vmatprep.subr.bf16.mxu0 0
        %1004 = vmatpush1.bf16.msra.mxu0 0
        %1005 = vmatprep.subr.bf16.mxu0 0
        %1006 = vmatpush1.bf16.msra.mxu0 0
        %1007 = vmatprep.subr.bf16.mxu0 0
        %1008 = vmatpush1.bf16.msra.mxu0 0
        %1009 = vmatprep.subr.bf16.mxu0 0
        %1010 = vmatpush1.bf16.msra.mxu0 0
        %1011 = vmatprep.subr.bf16.mxu0 0
        %1012 = vmatpush1.bf16.msra.mxu0 0
        %1013 = vmatprep.subr.bf16.mxu0 0
        %1014 = vmatpush1.bf16.msra.mxu0 0
        %1015 = vmatprep.mubr.bf16.mxu0 0
        %1016 = vmatmul.mubr.bf16.gmra.mrb[0].mxu0 %v765
        %v1017 = vpop.f32.mrb[0].mxu0
        %v1018 = vadd.f32 %v806, %v1017
        %v1019 = vpop.f32.mrb[0].mxu0
        %v1020 = vadd.f32 %v810, %v1019
        %v1021 = vpop.f32.mrb[0].mxu0
        %v1022 = vadd.f32 %v806, %v1021
        %v1023 = vpop.f32.mrb[0].mxu0
        %v1024 = vadd.f32 %v810, %v1023
        %1025 = vmatprep.mubr.bf16.mxu0 0
        %1026 = vmatmul.mubr.bf16.gmra.mrb[0].mxu0 %v766
        %v1027 = vpop.f32.mrb[0].mxu0
        %v1028 = vadd.f32 %v806, %v1027
        %v1029 = vpop.f32.mrb[0].mxu0
        %v1030 = vadd.f32 %v810, %v1029
        %v1031 = vpop.f32.mrb[0].mxu0
        %v1032 = vadd.f32 %v806, %v1031
        %v1033 = vpop.f32.mrb[0].mxu0
        %v1034 = vadd.f32 %v810, %v1033
        %1035 = vmatprep.mubr.bf16.mxu0 0
        %1036 = vmatmul.mubr.bf16.gmra.mrb[0].mxu0 %v767
        %v1037 = vpop.f32.mrb[0].mxu0
        %v1038 = vadd.f32 %v806, %v1037
        %v1039 = vpop.f32.mrb[0].mxu0
        %v1040 = vadd.f32 %v810, %v1039
        %v1041 = vpop.f32.mrb[0].mxu0
        %v1042 = vadd.f32 %v806, %v1041
        %v1043 = vpop.f32.mrb[0].mxu0
        %v1044 = vadd.f32 %v810, %v1043
        %1045 = vmatprep.mubr.bf16.mxu0 0
        %1046 = vmatmul.mubr.bf16.gmra.mrb[0].mxu0 %v768
        %v1047 = vpop.f32.mrb[0].mxu0
        %v1048 = vadd.f32 %v806, %v1047
        %v1049 = vpop.f32.mrb[0].mxu0
        %v1050 = vadd.f32 %v810, %v1049
        %v1051 = vpop.f32.mrb[0].mxu0
        %v1052 = vadd.f32 %v806, %v1051
        %v1053 = vpop.f32.mrb[0].mxu0
        %v1054 = vadd.f32 %v810, %v1053
        %1055 = vdwg.mxu0
        %1056 = vmatprep.subr.bf16.mxu0 %v922
        %1057 = vmatpush1.bf16.msra.mxu0 %v921
        %1058 = vmatprep.subr.bf16.mxu0 %v926
        %1059 = vmatpush1.bf16.msra.mxu0 %v925
        %1060 = vmatprep.subr.bf16.mxu0 %v930
        %1061 = vmatpush1.bf16.msra.mxu0 %v929
        %1062 = vmatprep.subr.bf16.mxu0 %v934
        %1063 = vmatpush1.bf16.msra.mxu0 %v933
        %1064 = vmatprep.subr.bf16.mxu0 %v938
        %1065 = vmatpush1.bf16.msra.mxu0 %v937
        %1066 = vmatprep.subr.bf16.mxu0 %v942
        %1067 = vmatpush1.bf16.msra.mxu0 %v941
        %1068 = vmatprep.subr.bf16.mxu0 %v946
        %1069 = vmatpush1.bf16.msra.mxu0 %v945
        %1070 = vmatprep.subr.bf16.mxu0 %v950
        %1071 = vmatpush1.bf16.msra.mxu0 %v949
        %1072 = vmatprep.subr.bf16.mxu0 0
        %1073 = vmatpush1.bf16.msra.mxu0 0
        %1074 = vmatprep.subr.bf16.mxu0 0
        %1075 = vmatpush1.bf16.msra.mxu0 0
        %1076 = vmatprep.subr.bf16.mxu0 0
        %1077 = vmatpush1.bf16.msra.mxu0 0
        %1078 = vmatprep.subr.bf16.mxu0 0
        %1079 = vmatpush1.bf16.msra.mxu0 0
        %1080 = vmatprep.subr.bf16.mxu0 0
        %1081 = vmatpush1.bf16.msra.mxu0 0
        %1082 = vmatprep.subr.bf16.mxu0 0
        %1083 = vmatpush1.bf16.msra.mxu0 0
        %1084 = vmatprep.subr.bf16.mxu0 0
        %1085 = vmatpush1.bf16.msra.mxu0 0
        %1086 = vmatprep.subr.bf16.mxu0 0
        %1087 = vmatpush1.bf16.msra.mxu0 0
        %1088 = vmatprep.mubr.bf16.mxu0 0
        %1089 = vmatmul.mubr.bf16.gmra.mrb[0].mxu0 %v765
        %v1090 = vpop.f32.mrb[0].mxu0
        %v1091 = vadd.f32 %v814, %v1090
        %v1092 = vpop.f32.mrb[0].mxu0
        %v1093 = vadd.f32 %v818, %v1092
        %v1094 = vpop.f32.mrb[0].mxu0
        %v1095 = vadd.f32 %v814, %v1094
        %v1096 = vpop.f32.mrb[0].mxu0
        %v1097 = vadd.f32 %v818, %v1096
        %1098 = vmatprep.mubr.bf16.mxu0 0
        %1099 = vmatmul.mubr.bf16.gmra.mrb[0].mxu0 %v766
        %v1100 = vpop.f32.mrb[0].mxu0
        %v1101 = vadd.f32 %v814, %v1100
        %v1102 = vpop.f32.mrb[0].mxu0
        %v1103 = vadd.f32 %v818, %v1102
        %v1104 = vpop.f32.mrb[0].mxu0
        %v1105 = vadd.f32 %v814, %v1104
        %v1106 = vpop.f32.mrb[0].mxu0
        %v1107 = vadd.f32 %v818, %v1106
        %1108 = vmatprep.mubr.bf16.mxu0 0
        %1109 = vmatmul.mubr.bf16.gmra.mrb[0].mxu0 %v767
        %v1110 = vpop.f32.mrb[0].mxu0
        %v1111 = vadd.f32 %v814, %v1110
        %v1112 = vpop.f32.mrb[0].mxu0
        %v1113 = vadd.f32 %v818, %v1112
        %v1114 = vpop.f32.mrb[0].mxu0
        %v1115 = vadd.f32 %v814, %v1114
        %v1116 = vpop.f32.mrb[0].mxu0
        %v1117 = vadd.f32 %v818, %v1116
        %1118 = vmatprep.mubr.bf16.mxu0 0
        %1119 = vmatmul.mubr.bf16.gmra.mrb[0].mxu0 %v768
        %v1120 = vpop.f32.mrb[0].mxu0
        %v1121 = vadd.f32 %v814, %v1120
        %v1122 = vpop.f32.mrb[0].mxu0
        %v1123 = vadd.f32 %v818, %v1122
        %v1124 = vpop.f32.mrb[0].mxu0
        %v1125 = vadd.f32 %v814, %v1124
        %v1126 = vpop.f32.mrb[0].mxu0
        %v1127 = vadd.f32 %v818, %v1126
        %1128 = vdwg.mxu0
        %1129 = vst [vmem:[#allocation2] sm:$0xff] %v1018
        %1130 = vst [vmem:[#allocation2 + $0x8] sm:$0xff] %v1020
        %1131 = vst [vmem:[#allocation2 + $0x10] sm:$0xff] %v1091
        %1132 = vst [vmem:[#allocation2 + $0x18] sm:$0xff] %v1093
        %1133 = vst [vmem:[#allocation2 + $0x20] sm:$0xff] %v1022
        %1134 = vst [vmem:[#allocation2 + $0x28] sm:$0xff] %v1024
        %1135 = vst [vmem:[#allocation2 + $0x30] sm:$0xff] %v1095
        %1136 = vst [vmem:[#allocation2 + $0x38] sm:$0xff] %v1097
        %1137 = vst [vmem:[#allocation2 + $0x40] sm:$0xff] %v1028
        %1138 = vst [vmem:[#allocation2 + $0x48] sm:$0xff] %v1030
        %1139 = vst [vmem:[#allocation2 + $0x50] sm:$0xff] %v1101
        %1140 = vst [vmem:[#allocation2 + $0x58] sm:$0xff] %v1103
        %1141 = vst [vmem:[#allocation2 + $0x60] sm:$0xff] %v1032
        %1142 = vst [vmem:[#allocation2 + $0x68] sm:$0xff] %v1034
        %1143 = vst [vmem:[#allocation2 + $0x70] sm:$0xff] %v1105
        %1144 = vst [vmem:[#allocation2 + $0x78] sm:$0xff] %v1107
        %1145 = vst [vmem:[#allocation2 + $0x80] sm:$0xff] %v1038
        %1146 = vst [vmem:[#allocation2 + $0x88] sm:$0xff] %v1040
        %1147 = vst [vmem:[#allocation2 + $0x90] sm:$0xff] %v1111
        %1148 = vst [vmem:[#allocation2 + $0x98] sm:$0xff] %v1113
        %1149 = vst [vmem:[#allocation2 + $0xa0] sm:$0xff] %v1042
        %1150 = vst [vmem:[#allocation2 + $0xa8] sm:$0xff] %v1044
        %1151 = vst [vmem:[#allocation2 + $0xb0] sm:$0xff] %v1115
        %1152 = vst [vmem:[#allocation2 + $0xb8] sm:$0xff] %v1117
        %1153 = vst [vmem:[#allocation2 + $0xc0] sm:$0xff] %v1048
        %1154 = vst [vmem:[#allocation2 + $0xc8] sm:$0xff] %v1050
        %1155 = vst [vmem:[#allocation2 + $0xd0] sm:$0xff] %v1121
        %1156 = vst [vmem:[#allocation2 + $0xd8] sm:$0xff] %v1123
        %1157 = vst [vmem:[#allocation2 + $0xe0] sm:$0xff] %v1052
        %1158 = vst [vmem:[#allocation2 + $0xe8] sm:$0xff] %v1054
        %1159 = vst [vmem:[#allocation2 + $0xf0] sm:$0xff] %v1125
        %1160 = vst [vmem:[#allocation2 + $0xf8] sm:$0xff] %v1127
        %v1161 = vld [vmem:[%s511] sm:$0xff]
        %v1162 = vld [vmem:[%s511 + $0x8] sm:$0xff]
        %v1163 = vld [vmem:[%s517] sm:$0xff]
        %v1164 = vld [vmem:[%s517 + $0x8] sm:$0xff]
        %v1165 = vld [vmem:[#allocation2] sm:$0xff]
        %v1166 = vld [vmem:[#allocation2 + $0x8] sm:$0xff]
        %v1167 = vld [vmem:[#allocation2 + $0x10] sm:$0xff]
        %v1168 = vld [vmem:[#allocation2 + $0x18] sm:$0xff]
        %v1169 = vld [vmem:[#allocation2 + $0x20] sm:$0xff]
        %v1170 = vld [vmem:[#allocation2 + $0x28] sm:$0xff]
        %v1171 = vld [vmem:[#allocation2 + $0x30] sm:$0xff]
        %v1172 = vld [vmem:[#allocation2 + $0x38] sm:$0xff]
        %v1173 = vpack.c.bf16 %v1162, %v1161
        %v1174 = vld [vmem:[%s6] sm:$0xff]
        %v1175 = vld [vmem:[%s6 + $0x8] sm:$0xff]
        %v1176 = vld [vmem:[%s6 + $0x10] sm:$0xff]
        %v1177 = vld [vmem:[%s6 + $0x18] sm:$0xff]
        %v1178 = vld [vmem:[%s6 + $0x20] sm:$0xff]
        %v1179 = vld [vmem:[%s6 + $0x28] sm:$0xff]
        %v1180 = vld [vmem:[%s6 + $0x30] sm:$0xff]
        %v1181 = vld [vmem:[%s6 + $0x38] sm:$0xff]
        %v1182 = vld [vmem:[%s6 + $0x40] sm:$0xff]
        %v1183 = vld [vmem:[%s6 + $0x48] sm:$0xff]
        %v1184 = vld [vmem:[%s6 + $0x50] sm:$0xff]
        %v1185 = vld [vmem:[%s6 + $0x58] sm:$0xff]
        %v1186 = vld [vmem:[%s6 + $0x60] sm:$0xff]
        %v1187 = vld [vmem:[%s6 + $0x68] sm:$0xff]
        %v1188 = vld [vmem:[%s6 + $0x70] sm:$0xff]
        %v1189 = vld [vmem:[%s6 + $0x78] sm:$0xff]
        %v1190 = vld [vmem:[%s6 + $0x80] sm:$0xff]
        %v1191 = vld [vmem:[%s6 + $0x88] sm:$0xff]
        %v1192 = vld [vmem:[%s6 + $0x90] sm:$0xff]
        %v1193 = vld [vmem:[%s6 + $0x98] sm:$0xff]
        %v1194 = vld [vmem:[%s6 + $0xa0] sm:$0xff]
        %v1195 = vld [vmem:[%s6 + $0xa8] sm:$0xff]
        %v1196 = vld [vmem:[%s6 + $0xb0] sm:$0xff]
        %v1197 = vld [vmem:[%s6 + $0xb8] sm:$0xff]
        %v1198 = vld [vmem:[%s6 + $0xc0] sm:$0xff]
        %v1199 = vld [vmem:[%s6 + $0xc8] sm:$0xff]
        %v1200 = vld [vmem:[%s6 + $0xd0] sm:$0xff]
        %v1201 = vld [vmem:[%s6 + $0xd8] sm:$0xff]
        %v1202 = vld [vmem:[%s6 + $0xe0] sm:$0xff]
        %v1203 = vld [vmem:[%s6 + $0xe8] sm:$0xff]
        %v1204 = vld [vmem:[%s6 + $0xf0] sm:$0xff]
        %v1205 = vld [vmem:[%s6 + $0xf8] sm:$0xff]
        %v1238 = vunpack.c.l.b16 %v1174
        %v1239 = vunpack.c.h.b16 %v1174
        %v1240 = vunpack.c.l.b16 %v1175
        %v1241 = vunpack.c.h.b16 %v1175
        %v1242 = vunpack.c.l.b16 %v1176
        %v1243 = vunpack.c.h.b16 %v1176
        %v1244 = vunpack.c.l.b16 %v1177
        %v1245 = vunpack.c.h.b16 %v1177
        %v1246 = vunpack.c.l.b16 %v1178
        %v1247 = vunpack.c.h.b16 %v1178
        %v1248 = vunpack.c.l.b16 %v1179
        %v1249 = vunpack.c.h.b16 %v1179
        %v1250 = vunpack.c.l.b16 %v1180
        %v1251 = vunpack.c.h.b16 %v1180
        %v1252 = vunpack.c.l.b16 %v1181
        %v1253 = vunpack.c.h.b16 %v1181
        %v1254 = vunpack.c.l.b16 %v1182
        %v1255 = vunpack.c.h.b16 %v1182
        %v1256 = vunpack.c.l.b16 %v1183
        %v1257 = vunpack.c.h.b16 %v1183
        %v1258 = vunpack.c.l.b16 %v1184
        %v1259 = vunpack.c.h.b16 %v1184
        %v1260 = vunpack.c.l.b16 %v1185
        %v1261 = vunpack.c.h.b16 %v1185
        %v1262 = vunpack.c.l.b16 %v1186
        %v1263 = vunpack.c.h.b16 %v1186
        %v1264 = vunpack.c.l.b16 %v1187
        %v1265 = vunpack.c.h.b16 %v1187
        %v1266 = vunpack.c.l.b16 %v1188
        %v1267 = vunpack.c.h.b16 %v1188
        %v1268 = vunpack.c.l.b16 %v1189
        %v1269 = vunpack.c.h.b16 %v1189
        %v1270 = vunpack.c.l.b16 %v1190
        %v1271 = vunpack.c.h.b16 %v1190
        %v1272 = vunpack.c.l.b16 %v1191
        %v1273 = vunpack.c.h.b16 %v1191
        %v1274 = vunpack.c.l.b16 %v1192
        %v1275 = vunpack.c.h.b16 %v1192
        %v1276 = vunpack.c.l.b16 %v1193
        %v1277 = vunpack.c.h.b16 %v1193
        %v1278 = vunpack.c.l.b16 %v1194
        %v1279 = vunpack.c.h.b16 %v1194
        %v1280 = vunpack.c.l.b16 %v1195
        %v1281 = vunpack.c.h.b16 %v1195
        %v1282 = vunpack.c.l.b16 %v1196
        %v1283 = vunpack.c.h.b16 %v1196
        %v1284 = vunpack.c.l.b16 %v1197
        %v1285 = vunpack.c.h.b16 %v1197
        %v1286 = vunpack.c.l.b16 %v1198
        %v1287 = vunpack.c.h.b16 %v1198
        %v1288 = vunpack.c.l.b16 %v1199
        %v1289 = vunpack.c.h.b16 %v1199
        %v1290 = vunpack.c.l.b16 %v1200
        %v1291 = vunpack.c.h.b16 %v1200
        %v1292 = vunpack.c.l.b16 %v1201
        %v1293 = vunpack.c.h.b16 %v1201
        %v1294 = vunpack.c.l.b16 %v1202
        %v1295 = vunpack.c.h.b16 %v1202
        %v1296 = vunpack.c.l.b16 %v1203
        %v1297 = vunpack.c.h.b16 %v1203
        %v1298 = vunpack.c.l.b16 %v1204
        %v1299 = vunpack.c.h.b16 %v1204
        %v1300 = vunpack.c.l.b16 %v1205
        %v1301 = vunpack.c.h.b16 %v1205
        %v1302 = vpack.c.b16 %v1242, %v1238
        %v1303 = vpack.c.b16 %v1243, %v1239
        %v1304 = vpack.c.b16 %v1244, %v1240
        %v1305 = vpack.c.b16 %v1245, %v1241
        %v1306 = vpack.c.b16 %v1250, %v1246
        %v1307 = vpack.c.b16 %v1251, %v1247
        %v1308 = vpack.c.b16 %v1252, %v1248
        %v1309 = vpack.c.b16 %v1253, %v1249
        %v1310 = vpack.c.b16 %v1258, %v1254
        %v1311 = vpack.c.b16 %v1259, %v1255
        %v1312 = vpack.c.b16 %v1260, %v1256
        %v1313 = vpack.c.b16 %v1261, %v1257
        %v1314 = vpack.c.b16 %v1266, %v1262
        %v1315 = vpack.c.b16 %v1267, %v1263
        %v1316 = vpack.c.b16 %v1268, %v1264
        %v1317 = vpack.c.b16 %v1269, %v1265
        %v1318 = vpack.c.b16 %v1274, %v1270
        %v1319 = vpack.c.b16 %v1275, %v1271
        %v1320 = vpack.c.b16 %v1276, %v1272
        %v1321 = vpack.c.b16 %v1277, %v1273
        %v1322 = vpack.c.b16 %v1282, %v1278
        %v1323 = vpack.c.b16 %v1283, %v1279
        %v1324 = vpack.c.b16 %v1284, %v1280
        %v1325 = vpack.c.b16 %v1285, %v1281
        %v1326 = vpack.c.b16 %v1290, %v1286
        %v1327 = vpack.c.b16 %v1291, %v1287
        %v1328 = vpack.c.b16 %v1292, %v1288
        %v1329 = vpack.c.b16 %v1293, %v1289
        %v1330 = vpack.c.b16 %v1298, %v1294
        %v1331 = vpack.c.b16 %v1299, %v1295
        %v1332 = vpack.c.b16 %v1300, %v1296
        %v1333 = vpack.c.b16 %v1301, %v1297
        %1366 = vmatprep.subr.bf16.mxu0 %v1303
        %1367 = vmatpush1.bf16.msra.mxu0 %v1302
        %1368 = vmatprep.subr.bf16.mxu0 %v1307
        %1369 = vmatpush1.bf16.msra.mxu0 %v1306
        %1370 = vmatprep.subr.bf16.mxu0 %v1311
        %1371 = vmatpush1.bf16.msra.mxu0 %v1310
        %1372 = vmatprep.subr.bf16.mxu0 %v1315
        %1373 = vmatpush1.bf16.msra.mxu0 %v1314
        %1374 = vmatprep.subr.bf16.mxu0 %v1319
        %1375 = vmatpush1.bf16.msra.mxu0 %v1318
        %1376 = vmatprep.subr.bf16.mxu0 %v1323
        %1377 = vmatpush1.bf16.msra.mxu0 %v1322
        %1378 = vmatprep.subr.bf16.mxu0 %v1327
        %1379 = vmatpush1.bf16.msra.mxu0 %v1326
        %1380 = vmatprep.subr.bf16.mxu0 %v1331
        %1381 = vmatpush1.bf16.msra.mxu0 %v1330
        %1382 = vmatprep.subr.bf16.mxu0 0
        %1383 = vmatpush1.bf16.msra.mxu0 0
        %1384 = vmatprep.subr.bf16.mxu0 0
        %1385 = vmatpush1.bf16.msra.mxu0 0
        %1386 = vmatprep.subr.bf16.mxu0 0
        %1387 = vmatpush1.bf16.msra.mxu0 0
        %1388 = vmatprep.subr.bf16.mxu0 0
        %1389 = vmatpush1.bf16.msra.mxu0 0
        %1390 = vmatprep.subr.bf16.mxu0 0
        %1391 = vmatpush1.bf16.msra.mxu0 0
        %1392 = vmatprep.subr.bf16.mxu0 0
        %1393 = vmatpush1.bf16.msra.mxu0 0
        %1394 = vmatprep.subr.bf16.mxu0 0
        %1395 = vmatpush1.bf16.msra.mxu0 0
        %1396 = vmatprep.subr.bf16.mxu0 0
        %1397 = vmatpush1.bf16.msra.mxu0 0
        %1398 = vmatprep.mubr.bf16.mxu0 0
        %1399 = vmatmul.mubr.bf16.gmra.mrb[0].mxu0 %v1173
        %v1400 = vpop.f32.mrb[0].mxu0
        %v1401 = vadd.f32 0.0, %v1400
        %v1402 = vpop.f32.mrb[0].mxu0
        %v1403 = vadd.f32 0.0, %v1402
        %v1404 = vpop.f32.mrb[0].mxu0
        %v1405 = vadd.f32 0.0, %v1404
        %v1406 = vpop.f32.mrb[0].mxu0
        %v1407 = vadd.f32 0.0, %v1406
        %1408 = vdwg.mxu0
        %1409 = vmatprep.subr.bf16.mxu0 %v1305
        %1410 = vmatpush1.bf16.msra.mxu0 %v1304
        %1411 = vmatprep.subr.bf16.mxu0 %v1309
        %1412 = vmatpush1.bf16.msra.mxu0 %v1308
        %1413 = vmatprep.subr.bf16.mxu0 %v1313
        %1414 = vmatpush1.bf16.msra.mxu0 %v1312
        %1415 = vmatprep.subr.bf16.mxu0 %v1317
        %1416 = vmatpush1.bf16.msra.mxu0 %v1316
        %1417 = vmatprep.subr.bf16.mxu0 %v1321
        %1418 = vmatpush1.bf16.msra.mxu0 %v1320
        %1419 = vmatprep.subr.bf16.mxu0 %v1325
        %1420 = vmatpush1.bf16.msra.mxu0 %v1324
        %1421 = vmatprep.subr.bf16.mxu0 %v1329
        %1422 = vmatpush1.bf16.msra.mxu0 %v1328
        %1423 = vmatprep.subr.bf16.mxu0 %v1333
        %1424 = vmatpush1.bf16.msra.mxu0 %v1332
        %1425 = vmatprep.subr.bf16.mxu0 0
        %1426 = vmatpush1.bf16.msra.mxu0 0
        %1427 = vmatprep.subr.bf16.mxu0 0
        %1428 = vmatpush1.bf16.msra.mxu0 0
        %1429 = vmatprep.subr.bf16.mxu0 0
        %1430 = vmatpush1.bf16.msra.mxu0 0
        %1431 = vmatprep.subr.bf16.mxu0 0
        %1432 = vmatpush1.bf16.msra.mxu0 0
        %1433 = vmatprep.subr.bf16.mxu0 0
        %1434 = vmatpush1.bf16.msra.mxu0 0
        %1435 = vmatprep.subr.bf16.mxu0 0
        %1436 = vmatpush1.bf16.msra.mxu0 0
        %1437 = vmatprep.subr.bf16.mxu0 0
        %1438 = vmatpush1.bf16.msra.mxu0 0
        %1439 = vmatprep.subr.bf16.mxu0 0
        %1440 = vmatpush1.bf16.msra.mxu0 0
        %1441 = vmatprep.mubr.bf16.mxu0 0
        %1442 = vmatmul.mubr.bf16.gmra.mrb[0].mxu0 %v1173
        %v1443 = vpop.f32.mrb[0].mxu0
        %v1444 = vadd.f32 0.0, %v1443
        %v1445 = vpop.f32.mrb[0].mxu0
        %v1446 = vadd.f32 0.0, %v1445
        %v1447 = vpop.f32.mrb[0].mxu0
        %v1448 = vadd.f32 0.0, %v1447
        %v1449 = vpop.f32.mrb[0].mxu0
        %v1450 = vadd.f32 0.0, %v1449
        %1451 = vdwg.mxu0
        %v1452 = vadd.f32 %v1165, %v1401
        %v1453 = vadd.f32 %v1166, %v1403
        %v1454 = vadd.f32 %v1167, %v1444
        %v1455 = vadd.f32 %v1168, %v1446
        %v1456 = vadd.f32 %v1169, %v1405
        %v1457 = vadd.f32 %v1170, %v1407
        %v1458 = vadd.f32 %v1171, %v1448
        %v1459 = vadd.f32 %v1172, %v1450
        %v1460 = vxor.u32 %v1452, 2147483648
        %v1461 = vxor.u32 %v1453, 2147483648
        %v1462 = vxor.u32 %v1454, 2147483648
        %v1463 = vxor.u32 %v1456, 2147483648
        %v1464 = vxor.u32 %v1457, 2147483648
        %v1465 = vxor.u32 %v1458, 2147483648
        %v1466 = vmul.f32 %v1460, 1.442695
        %v1467 = vpow.pop %v1466
        %v1468 = vmul.f32 %v1461, 1.442695
        %v1469 = vpow.pop %v1468
        %v1470 = vmul.f32 %v1462, 1.442695
        %v1471 = vpow.pop %v1470
        %v1472 = vmul.f32 %v1463, 1.442695
        %v1473 = vpow.pop %v1472
        %v1474 = vmul.f32 %v1464, 1.442695
        %v1475 = vpow.pop %v1474
        %v1476 = vmul.f32 %v1465, 1.442695
        %v1477 = vpow.pop %v1476
        %v1478 = vadd.f32 %v1467, 1.0
        %v1479 = vadd.f32 %v1469, 1.0
        %v1480 = vadd.f32 %v1471, 1.0
        %v1481 = vadd.f32 %v1473, 1.0
        %v1482 = vadd.f32 %v1475, 1.0
        %v1483 = vadd.f32 %v1477, 1.0
        %v1484 = vrcp.pop %v1478
        %v1485 = vmul.f32 1.0, %v1484
        %v1486 = vrcp.pop %v1479
        %v1487 = vmul.f32 1.0, %v1486
        %v1488 = vrcp.pop %v1480
        %v1489 = vmul.f32 1.0, %v1488
        %v1490 = vrcp.pop %v1481
        %v1491 = vmul.f32 1.0, %v1490
        %v1492 = vrcp.pop %v1482
        %v1493 = vmul.f32 1.0, %v1492
        %v1494 = vrcp.pop %v1483
        %v1495 = vmul.f32 1.0, %v1494
        %v1496 = vtanh.pop %v1455
        %v1497 = vtanh.pop %v1459
        %v1498 = vmul.f32 %v1487, %v1163
        %v1499 = vmul.f32 %v1493, %v1164
        %v1500 = vmul.f32 %v1485, %v1496
        %v1501 = vmul.f32 %v1491, %v1497
        %v1502 = vadd.f32 %v1498, %v1500
        %v1503 = vadd.f32 %v1499, %v1501
        %v1504 = vtanh.pop %v1502
        %v1505 = vtanh.pop %v1503
        %v1506 = vmul.f32 %v1489, %v1504
        %v1507 = vmul.f32 %v1495, %v1505
        %1508 = vst [vmem:[#allocation3] sm:$0xff] %v1506
        %1509 = vst [vmem:[#allocation3 + $0x8] sm:$0xff] %v1507
        %s1510 = scalar_lea.vmem [#allocation2], 64
        %v1511 = vld [vmem:[%s1510] sm:$0xff]
        %v1512 = vld [vmem:[%s1510 + $0x8] sm:$0xff]
        %v1513 = vld [vmem:[%s1510 + $0x10] sm:$0xff]
        %v1514 = vld [vmem:[%s1510 + $0x18] sm:$0xff]
        %v1515 = vld [vmem:[%s1510 + $0x20] sm:$0xff]
        %v1516 = vld [vmem:[%s1510 + $0x28] sm:$0xff]
        %v1517 = vld [vmem:[%s1510 + $0x30] sm:$0xff]
        %v1518 = vld [vmem:[%s1510 + $0x38] sm:$0xff]
        %v1519 = vpack.c.bf16 %v1507, %v1506
        %v1520 = vld [vmem:[%s6] sm:$0xff]
        %v1521 = vld [vmem:[%s6 + $0x8] sm:$0xff]
        %v1522 = vld [vmem:[%s6 + $0x10] sm:$0xff]
        %v1523 = vld [vmem:[%s6 + $0x18] sm:$0xff]
        %v1524 = vld [vmem:[%s6 + $0x20] sm:$0xff]
        %v1525 = vld [vmem:[%s6 + $0x28] sm:$0xff]
        %v1526 = vld [vmem:[%s6 + $0x30] sm:$0xff]
        %v1527 = vld [vmem:[%s6 + $0x38] sm:$0xff]
        %v1528 = vld [vmem:[%s6 + $0x40] sm:$0xff]
        %v1529 = vld [vmem:[%s6 + $0x48] sm:$0xff]
        %v1530 = vld [vmem:[%s6 + $0x50] sm:$0xff]
        %v1531 = vld [vmem:[%s6 + $0x58] sm:$0xff]
        %v1532 = vld [vmem:[%s6 + $0x60] sm:$0xff]
        %v1533 = vld [vmem:[%s6 + $0x68] sm:$0xff]
        %v1534 = vld [vmem:[%s6 + $0x70] sm:$0xff]
        %v1535 = vld [vmem:[%s6 + $0x78] sm:$0xff]
        %v1536 = vld [vmem:[%s6 + $0x80] sm:$0xff]
        %v1537 = vld [vmem:[%s6 + $0x88] sm:$0xff]
        %v1538 = vld [vmem:[%s6 + $0x90] sm:$0xff]
        %v1539 = vld [vmem:[%s6 + $0x98] sm:$0xff]
        %v1540 = vld [vmem:[%s6 + $0xa0] sm:$0xff]
        %v1541 = vld [vmem:[%s6 + $0xa8] sm:$0xff]
        %v1542 = vld [vmem:[%s6 + $0xb0] sm:$0xff]
        %v1543 = vld [vmem:[%s6 + $0xb8] sm:$0xff]
        %v1544 = vld [vmem:[%s6 + $0xc0] sm:$0xff]
        %v1545 = vld [vmem:[%s6 + $0xc8] sm:$0xff]
        %v1546 = vld [vmem:[%s6 + $0xd0] sm:$0xff]
        %v1547 = vld [vmem:[%s6 + $0xd8] sm:$0xff]
        %v1548 = vld [vmem:[%s6 + $0xe0] sm:$0xff]
        %v1549 = vld [vmem:[%s6 + $0xe8] sm:$0xff]
        %v1550 = vld [vmem:[%s6 + $0xf0] sm:$0xff]
        %v1551 = vld [vmem:[%s6 + $0xf8] sm:$0xff]
        %v1584 = vunpack.c.l.b16 %v1520
        %v1585 = vunpack.c.h.b16 %v1520
        %v1586 = vunpack.c.l.b16 %v1521
        %v1587 = vunpack.c.h.b16 %v1521
        %v1588 = vunpack.c.l.b16 %v1522
        %v1589 = vunpack.c.h.b16 %v1522
        %v1590 = vunpack.c.l.b16 %v1523
        %v1591 = vunpack.c.h.b16 %v1523
        %v1592 = vunpack.c.l.b16 %v1524
        %v1593 = vunpack.c.h.b16 %v1524
        %v1594 = vunpack.c.l.b16 %v1525
        %v1595 = vunpack.c.h.b16 %v1525
        %v1596 = vunpack.c.l.b16 %v1526
        %v1597 = vunpack.c.h.b16 %v1526
        %v1598 = vunpack.c.l.b16 %v1527
        %v1599 = vunpack.c.h.b16 %v1527
        %v1600 = vunpack.c.l.b16 %v1528
        %v1601 = vunpack.c.h.b16 %v1528
        %v1602 = vunpack.c.l.b16 %v1529
        %v1603 = vunpack.c.h.b16 %v1529
        %v1604 = vunpack.c.l.b16 %v1530
        %v1605 = vunpack.c.h.b16 %v1530
        %v1606 = vunpack.c.l.b16 %v1531
        %v1607 = vunpack.c.h.b16 %v1531
        %v1608 = vunpack.c.l.b16 %v1532
        %v1609 = vunpack.c.h.b16 %v1532
        %v1610 = vunpack.c.l.b16 %v1533
        %v1611 = vunpack.c.h.b16 %v1533
        %v1612 = vunpack.c.l.b16 %v1534
        %v1613 = vunpack.c.h.b16 %v1534
        %v1614 = vunpack.c.l.b16 %v1535
        %v1615 = vunpack.c.h.b16 %v1535
        %v1616 = vunpack.c.l.b16 %v1536
        %v1617 = vunpack.c.h.b16 %v1536
        %v1618 = vunpack.c.l.b16 %v1537
        %v1619 = vunpack.c.h.b16 %v1537
        %v1620 = vunpack.c.l.b16 %v1538
        %v1621 = vunpack.c.h.b16 %v1538
        %v1622 = vunpack.c.l.b16 %v1539
        %v1623 = vunpack.c.h.b16 %v1539
        %v1624 = vunpack.c.l.b16 %v1540
        %v1625 = vunpack.c.h.b16 %v1540
        %v1626 = vunpack.c.l.b16 %v1541
        %v1627 = vunpack.c.h.b16 %v1541
        %v1628 = vunpack.c.l.b16 %v1542
        %v1629 = vunpack.c.h.b16 %v1542
        %v1630 = vunpack.c.l.b16 %v1543
        %v1631 = vunpack.c.h.b16 %v1543
        %v1632 = vunpack.c.l.b16 %v1544
        %v1633 = vunpack.c.h.b16 %v1544
        %v1634 = vunpack.c.l.b16 %v1545
        %v1635 = vunpack.c.h.b16 %v1545
        %v1636 = vunpack.c.l.b16 %v1546
        %v1637 = vunpack.c.h.b16 %v1546
        %v1638 = vunpack.c.l.b16 %v1547
        %v1639 = vunpack.c.h.b16 %v1547
        %v1640 = vunpack.c.l.b16 %v1548
        %v1641 = vunpack.c.h.b16 %v1548
        %v1642 = vunpack.c.l.b16 %v1549
        %v1643 = vunpack.c.h.b16 %v1549
        %v1644 = vunpack.c.l.b16 %v1550
        %v1645 = vunpack.c.h.b16 %v1550
        %v1646 = vunpack.c.l.b16 %v1551
        %v1647 = vunpack.c.h.b16 %v1551
        %v1648 = vpack.c.b16 %v1588, %v1584
        %v1649 = vpack.c.b16 %v1589, %v1585
        %v1650 = vpack.c.b16 %v1590, %v1586
        %v1651 = vpack.c.b16 %v1591, %v1587
        %v1652 = vpack.c.b16 %v1596, %v1592
        %v1653 = vpack.c.b16 %v1597, %v1593
        %v1654 = vpack.c.b16 %v1598, %v1594
        %v1655 = vpack.c.b16 %v1599, %v1595
        %v1656 = vpack.c.b16 %v1604, %v1600
        %v1657 = vpack.c.b16 %v1605, %v1601
        %v1658 = vpack.c.b16 %v1606, %v1602
        %v1659 = vpack.c.b16 %v1607, %v1603
        %v1660 = vpack.c.b16 %v1612, %v1608
        %v1661 = vpack.c.b16 %v1613, %v1609
        %v1662 = vpack.c.b16 %v1614, %v1610
        %v1663 = vpack.c.b16 %v1615, %v1611
        %v1664 = vpack.c.b16 %v1620, %v1616
        %v1665 = vpack.c.b16 %v1621, %v1617
        %v1666 = vpack.c.b16 %v1622, %v1618
        %v1667 = vpack.c.b16 %v1623, %v1619
        %v1668 = vpack.c.b16 %v1628, %v1624
        %v1669 = vpack.c.b16 %v1629, %v1625
        %v1670 = vpack.c.b16 %v1630, %v1626
        %v1671 = vpack.c.b16 %v1631, %v1627
        %v1672 = vpack.c.b16 %v1636, %v1632
        %v1673 = vpack.c.b16 %v1637, %v1633
        %v1674 = vpack.c.b16 %v1638, %v1634
        %v1675 = vpack.c.b16 %v1639, %v1635
        %v1676 = vpack.c.b16 %v1644, %v1640
        %v1677 = vpack.c.b16 %v1645, %v1641
        %v1678 = vpack.c.b16 %v1646, %v1642
        %v1679 = vpack.c.b16 %v1647, %v1643
        %1712 = vmatprep.subr.bf16.mxu0 %v1649
        %1713 = vmatpush1.bf16.msra.mxu0 %v1648
        %1714 = vmatprep.subr.bf16.mxu0 %v1653
        %1715 = vmatpush1.bf16.msra.mxu0 %v1652
        %1716 = vmatprep.subr.bf16.mxu0 %v1657
        %1717 = vmatpush1.bf16.msra.mxu0 %v1656
        %1718 = vmatprep.subr.bf16.mxu0 %v1661
        %1719 = vmatpush1.bf16.msra.mxu0 %v1660
        %1720 = vmatprep.subr.bf16.mxu0 %v1665
        %1721 = vmatpush1.bf16.msra.mxu0 %v1664
        %1722 = vmatprep.subr.bf16.mxu0 %v1669
        %1723 = vmatpush1.bf16.msra.mxu0 %v1668
        %1724 = vmatprep.subr.bf16.mxu0 %v1673
        %1725 = vmatpush1.bf16.msra.mxu0 %v1672
        %1726 = vmatprep.subr.bf16.mxu0 %v1677
        %1727 = vmatpush1.bf16.msra.mxu0 %v1676
        %1728 = vmatprep.subr.bf16.mxu0 0
        %1729 = vmatpush1.bf16.msra.mxu0 0
        %1730 = vmatprep.subr.bf16.mxu0 0
        %1731 = vmatpush1.bf16.msra.mxu0 0
        %1732 = vmatprep.subr.bf16.mxu0 0
        %1733 = vmatpush1.bf16.msra.mxu0 0
        %1734 = vmatprep.subr.bf16.mxu0 0
        %1735 = vmatpush1.bf16.msra.mxu0 0
        %1736 = vmatprep.subr.bf16.mxu0 0
        %1737 = vmatpush1.bf16.msra.mxu0 0
        %1738 = vmatprep.subr.bf16.mxu0 0
        %1739 = vmatpush1.bf16.msra.mxu0 0
        %1740 = vmatprep.subr.bf16.mxu0 0
        %1741 = vmatpush1.bf16.msra.mxu0 0
        %1742 = vmatprep.subr.bf16.mxu0 0
        %1743 = vmatpush1.bf16.msra.mxu0 0
        %1744 = vmatprep.mubr.bf16.mxu0 0
        %1745 = vmatmul.mubr.bf16.gmra.mrb[0].mxu0 %v1519
        %v1746 = vpop.f32.mrb[0].mxu0
        %v1747 = vadd.f32 0.0, %v1746
        %v1748 = vpop.f32.mrb[0].mxu0
        %v1749 = vadd.f32 0.0, %v1748
        %v1750 = vpop.f32.mrb[0].mxu0
        %v1751 = vadd.f32 0.0, %v1750
        %v1752 = vpop.f32.mrb[0].mxu0
        %v1753 = vadd.f32 0.0, %v1752
        %1754 = vdwg.mxu0
        %1755 = vmatprep.subr.bf16.mxu0 %v1651
        %1756 = vmatpush1.bf16.msra.mxu0 %v1650
        %1757 = vmatprep.subr.bf16.mxu0 %v1655
        %1758 = vmatpush1.bf16.msra.mxu0 %v1654
        %1759 = vmatprep.subr.bf16.mxu0 %v1659
        %1760 = vmatpush1.bf16.msra.mxu0 %v1658
        %1761 = vmatprep.subr.bf16.mxu0 %v1663
        %1762 = vmatpush1.bf16.msra.mxu0 %v1662
        %1763 = vmatprep.subr.bf16.mxu0 %v1667
        %1764 = vmatpush1.bf16.msra.mxu0 %v1666
        %1765 = vmatprep.subr.bf16.mxu0 %v1671
        %1766 = vmatpush1.bf16.msra.mxu0 %v1670
        %1767 = vmatprep.subr.bf16.mxu0 %v1675
        %1768 = vmatpush1.bf16.msra.mxu0 %v1674
        %1769 = vmatprep.subr.bf16.mxu0 %v1679
        %1770 = vmatpush1.bf16.msra.mxu0 %v1678
        %1771 = vmatprep.subr.bf16.mxu0 0
        %1772 = vmatpush1.bf16.msra.mxu0 0
        %1773 = vmatprep.subr.bf16.mxu0 0
        %1774 = vmatpush1.bf16.msra.mxu0 0
        %1775 = vmatprep.subr.bf16.mxu0 0
        %1776 = vmatpush1.bf16.msra.mxu0 0
        %1777 = vmatprep.subr.bf16.mxu0 0
        %1778 = vmatpush1.bf16.msra.mxu0 0
        %1779 = vmatprep.subr.bf16.mxu0 0
        %1780 = vmatpush1.bf16.msra.mxu0 0
        %1781 = vmatprep.subr.bf16.mxu0 0
        %1782 = vmatpush1.bf16.msra.mxu0 0
        %1783 = vmatprep.subr.bf16.mxu0 0
        %1784 = vmatpush1.bf16.msra.mxu0 0
        %1785 = vmatprep.subr.bf16.mxu0 0
        %1786 = vmatpush1.bf16.msra.mxu0 0
        %1787 = vmatprep.mubr.bf16.mxu0 0
        %1788 = vmatmul.mubr.bf16.gmra.mrb[0].mxu0 %v1519
        %v1789 = vpop.f32.mrb[0].mxu0
        %v1790 = vadd.f32 0.0, %v1789
        %v1791 = vpop.f32.mrb[0].mxu0
        %v1792 = vadd.f32 0.0, %v1791
        %v1793 = vpop.f32.mrb[0].mxu0
        %v1794 = vadd.f32 0.0, %v1793
        %v1795 = vpop.f32.mrb[0].mxu0
        %v1796 = vadd.f32 0.0, %v1795
        %1797 = vdwg.mxu0
        %v1798 = vadd.f32 %v1511, %v1747
        %v1799 = vadd.f32 %v1512, %v1749
        %v1800 = vadd.f32 %v1513, %v1790
        %v1801 = vadd.f32 %v1514, %v1792
        %v1802 = vadd.f32 %v1515, %v1751
        %v1803 = vadd.f32 %v1516, %v1753
        %v1804 = vadd.f32 %v1517, %v1794
        %v1805 = vadd.f32 %v1518, %v1796
        %v1806 = vxor.u32 %v1798, 2147483648
        %v1807 = vxor.u32 %v1799, 2147483648
        %v1808 = vxor.u32 %v1800, 2147483648
        %v1809 = vxor.u32 %v1802, 2147483648
        %v1810 = vxor.u32 %v1803, 2147483648
        %v1811 = vxor.u32 %v1804, 2147483648
        %v1812 = vmul.f32 %v1806, 1.442695
        %v1813 = vpow.pop %v1812
        %v1814 = vmul.f32 %v1807, 1.442695
        %v1815 = vpow.pop %v1814
        %v1816 = vmul.f32 %v1808, 1.442695
        %v1817 = vpow.pop %v1816
        %v1818 = vmul.f32 %v1809, 1.442695
        %v1819 = vpow.pop %v1818
        %v1820 = vmul.f32 %v1810, 1.442695
        %v1821 = vpow.pop %v1820
        %v1822 = vmul.f32 %v1811, 1.442695
        %v1823 = vpow.pop %v1822
        %v1824 = vadd.f32 %v1813, 1.0
        %v1825 = vadd.f32 %v1815, 1.0
        %v1826 = vadd.f32 %v1817, 1.0
        %v1827 = vadd.f32 %v1819, 1.0
        %v1828 = vadd.f32 %v1821, 1.0
        %v1829 = vadd.f32 %v1823, 1.0
        %v1830 = vrcp.pop %v1824
        %v1831 = vmul.f32 1.0, %v1830
        %v1832 = vrcp.pop %v1825
        %v1833 = vmul.f32 1.0, %v1832
        %v1834 = vrcp.pop %v1826
        %v1835 = vmul.f32 1.0, %v1834
        %v1836 = vrcp.pop %v1827
        %v1837 = vmul.f32 1.0, %v1836
        %v1838 = vrcp.pop %v1828
        %v1839 = vmul.f32 1.0, %v1838
        %v1840 = vrcp.pop %v1829
        %v1841 = vmul.f32 1.0, %v1840
        %v1842 = vtanh.pop %v1801
        %v1843 = vtanh.pop %v1805
        %v1844 = vmul.f32 %v1833, %v1502
        %v1845 = vmul.f32 %v1839, %v1503
        %v1846 = vmul.f32 %v1831, %v1842
        %v1847 = vmul.f32 %v1837, %v1843
        %v1848 = vadd.f32 %v1844, %v1846
        %v1849 = vadd.f32 %v1845, %v1847
        %v1850 = vtanh.pop %v1848
        %v1851 = vtanh.pop %v1849
        %v1852 = vmul.f32 %v1835, %v1850
        %v1853 = vmul.f32 %v1841, %v1851
        %s1854 = scalar_lea.vmem [#allocation3], 16
        %1855 = vst [vmem:[%s1854] sm:$0xff] %v1852
        %1856 = vst [vmem:[%s1854 + $0x8] sm:$0xff] %v1853
        %s1857 = scalar_lea.vmem [#allocation2], 128
        %v1858 = vld [vmem:[%s1857] sm:$0xff]
        %v1859 = vld [vmem:[%s1857 + $0x8] sm:$0xff]
        %v1860 = vld [vmem:[%s1857 + $0x10] sm:$0xff]
        %v1861 = vld [vmem:[%s1857 + $0x18] sm:$0xff]
        %v1862 = vld [vmem:[%s1857 + $0x20] sm:$0xff]
        %v1863 = vld [vmem:[%s1857 + $0x28] sm:$0xff]
        %v1864 = vld [vmem:[%s1857 + $0x30] sm:$0xff]
        %v1865 = vld [vmem:[%s1857 + $0x38] sm:$0xff]
        %v1866 = vpack.c.bf16 %v1853, %v1852
        %v1867 = vld [vmem:[%s6] sm:$0xff]
        %v1868 = vld [vmem:[%s6 + $0x8] sm:$0xff]
        %v1869 = vld [vmem:[%s6 + $0x10] sm:$0xff]
        %v1870 = vld [vmem:[%s6 + $0x18] sm:$0xff]
        %v1871 = vld [vmem:[%s6 + $0x20] sm:$0xff]
        %v1872 = vld [vmem:[%s6 + $0x28] sm:$0xff]
        %v1873 = vld [vmem:[%s6 + $0x30] sm:$0xff]
        %v1874 = vld [vmem:[%s6 + $0x38] sm:$0xff]
        %v1875 = vld [vmem:[%s6 + $0x40] sm:$0xff]
        %v1876 = vld [vmem:[%s6 + $0x48] sm:$0xff]
        %v1877 = vld [vmem:[%s6 + $0x50] sm:$0xff]
        %v1878 = vld [vmem:[%s6 + $0x58] sm:$0xff]
        %v1879 = vld [vmem:[%s6 + $0x60] sm:$0xff]
        %v1880 = vld [vmem:[%s6 + $0x68] sm:$0xff]
        %v1881 = vld [vmem:[%s6 + $0x70] sm:$0xff]
        %v1882 = vld [vmem:[%s6 + $0x78] sm:$0xff]
        %v1883 = vld [vmem:[%s6 + $0x80] sm:$0xff]
        %v1884 = vld [vmem:[%s6 + $0x88] sm:$0xff]
        %v1885 = vld [vmem:[%s6 + $0x90] sm:$0xff]
        %v1886 = vld [vmem:[%s6 + $0x98] sm:$0xff]
        %v1887 = vld [vmem:[%s6 + $0xa0] sm:$0xff]
        %v1888 = vld [vmem:[%s6 + $0xa8] sm:$0xff]
        %v1889 = vld [vmem:[%s6 + $0xb0] sm:$0xff]
        %v1890 = vld [vmem:[%s6 + $0xb8] sm:$0xff]
        %v1891 = vld [vmem:[%s6 + $0xc0] sm:$0xff]
        %v1892 = vld [vmem:[%s6 + $0xc8] sm:$0xff]
        %v1893 = vld [vmem:[%s6 + $0xd0] sm:$0xff]
        %v1894 = vld [vmem:[%s6 + $0xd8] sm:$0xff]
        %v1895 = vld [vmem:[%s6 + $0xe0] sm:$0xff]
        %v1896 = vld [vmem:[%s6 + $0xe8] sm:$0xff]
        %v1897 = vld [vmem:[%s6 + $0xf0] sm:$0xff]
        %v1898 = vld [vmem:[%s6 + $0xf8] sm:$0xff]
        %v1931 = vunpack.c.l.b16 %v1867
        %v1932 = vunpack.c.h.b16 %v1867
        %v1933 = vunpack.c.l.b16 %v1868
        %v1934 = vunpack.c.h.b16 %v1868
        %v1935 = vunpack.c.l.b16 %v1869
        %v1936 = vunpack.c.h.b16 %v1869
        %v1937 = vunpack.c.l.b16 %v1870
        %v1938 = vunpack.c.h.b16 %v1870
        %v1939 = vunpack.c.l.b16 %v1871
        %v1940 = vunpack.c.h.b16 %v1871
        %v1941 = vunpack.c.l.b16 %v1872
        %v1942 = vunpack.c.h.b16 %v1872
        %v1943 = vunpack.c.l.b16 %v1873
        %v1944 = vunpack.c.h.b16 %v1873
        %v1945 = vunpack.c.l.b16 %v1874
        %v1946 = vunpack.c.h.b16 %v1874
        %v1947 = vunpack.c.l.b16 %v1875
        %v1948 = vunpack.c.h.b16 %v1875
        %v1949 = vunpack.c.l.b16 %v1876
        %v1950 = vunpack.c.h.b16 %v1876
        %v1951 = vunpack.c.l.b16 %v1877
        %v1952 = vunpack.c.h.b16 %v1877
        %v1953 = vunpack.c.l.b16 %v1878
        %v1954 = vunpack.c.h.b16 %v1878
        %v1955 = vunpack.c.l.b16 %v1879
        %v1956 = vunpack.c.h.b16 %v1879
        %v1957 = vunpack.c.l.b16 %v1880
        %v1958 = vunpack.c.h.b16 %v1880
        %v1959 = vunpack.c.l.b16 %v1881
        %v1960 = vunpack.c.h.b16 %v1881
        %v1961 = vunpack.c.l.b16 %v1882
        %v1962 = vunpack.c.h.b16 %v1882
        %v1963 = vunpack.c.l.b16 %v1883
        %v1964 = vunpack.c.h.b16 %v1883
        %v1965 = vunpack.c.l.b16 %v1884
        %v1966 = vunpack.c.h.b16 %v1884
        %v1967 = vunpack.c.l.b16 %v1885
        %v1968 = vunpack.c.h.b16 %v1885
        %v1969 = vunpack.c.l.b16 %v1886
        %v1970 = vunpack.c.h.b16 %v1886
        %v1971 = vunpack.c.l.b16 %v1887
        %v1972 = vunpack.c.h.b16 %v1887
        %v1973 = vunpack.c.l.b16 %v1888
        %v1974 = vunpack.c.h.b16 %v1888
        %v1975 = vunpack.c.l.b16 %v1889
        %v1976 = vunpack.c.h.b16 %v1889
        %v1977 = vunpack.c.l.b16 %v1890
        %v1978 = vunpack.c.h.b16 %v1890
        %v1979 = vunpack.c.l.b16 %v1891
        %v1980 = vunpack.c.h.b16 %v1891
        %v1981 = vunpack.c.l.b16 %v1892
        %v1982 = vunpack.c.h.b16 %v1892
        %v1983 = vunpack.c.l.b16 %v1893
        %v1984 = vunpack.c.h.b16 %v1893
        %v1985 = vunpack.c.l.b16 %v1894
        %v1986 = vunpack.c.h.b16 %v1894
        %v1987 = vunpack.c.l.b16 %v1895
        %v1988 = vunpack.c.h.b16 %v1895
        %v1989 = vunpack.c.l.b16 %v1896
        %v1990 = vunpack.c.h.b16 %v1896
        %v1991 = vunpack.c.l.b16 %v1897
        %v1992 = vunpack.c.h.b16 %v1897
        %v1993 = vunpack.c.l.b16 %v1898
        %v1994 = vunpack.c.h.b16 %v1898
        %v1995 = vpack.c.b16 %v1935, %v1931
        %v1996 = vpack.c.b16 %v1936, %v1932
        %v1997 = vpack.c.b16 %v1937, %v1933
        %v1998 = vpack.c.b16 %v1938, %v1934
        %v1999 = vpack.c.b16 %v1943, %v1939
        %v2000 = vpack.c.b16 %v1944, %v1940
        %v2001 = vpack.c.b16 %v1945, %v1941
        %v2002 = vpack.c.b16 %v1946, %v1942
        %v2003 = vpack.c.b16 %v1951, %v1947
        %v2004 = vpack.c.b16 %v1952, %v1948
        %v2005 = vpack.c.b16 %v1953, %v1949
        %v2006 = vpack.c.b16 %v1954, %v1950
        %v2007 = vpack.c.b16 %v1959, %v1955
        %v2008 = vpack.c.b16 %v1960, %v1956
        %v2009 = vpack.c.b16 %v1961, %v1957
        %v2010 = vpack.c.b16 %v1962, %v1958
        %v2011 = vpack.c.b16 %v1967, %v1963
        %v2012 = vpack.c.b16 %v1968, %v1964
        %v2013 = vpack.c.b16 %v1969, %v1965
        %v2014 = vpack.c.b16 %v1970, %v1966
        %v2015 = vpack.c.b16 %v1975, %v1971
        %v2016 = vpack.c.b16 %v1976, %v1972
        %v2017 = vpack.c.b16 %v1977, %v1973
        %v2018 = vpack.c.b16 %v1978, %v1974
        %v2019 = vpack.c.b16 %v1983, %v1979
        %v2020 = vpack.c.b16 %v1984, %v1980
        %v2021 = vpack.c.b16 %v1985, %v1981
        %v2022 = vpack.c.b16 %v1986, %v1982
        %v2023 = vpack.c.b16 %v1991, %v1987
        %v2024 = vpack.c.b16 %v1992, %v1988
        %v2025 = vpack.c.b16 %v1993, %v1989
        %v2026 = vpack.c.b16 %v1994, %v1990
        %2059 = vmatprep.subr.bf16.mxu0 %v1996
        %2060 = vmatpush1.bf16.msra.mxu0 %v1995
        %2061 = vmatprep.subr.bf16.mxu0 %v2000
        %2062 = vmatpush1.bf16.msra.mxu0 %v1999
        %2063 = vmatprep.subr.bf16.mxu0 %v2004
        %2064 = vmatpush1.bf16.msra.mxu0 %v2003
        %2065 = vmatprep.subr.bf16.mxu0 %v2008
        %2066 = vmatpush1.bf16.msra.mxu0 %v2007
        %2067 = vmatprep.subr.bf16.mxu0 %v2012
        %2068 = vmatpush1.bf16.msra.mxu0 %v2011
        %2069 = vmatprep.subr.bf16.mxu0 %v2016
        %2070 = vmatpush1.bf16.msra.mxu0 %v2015
        %2071 = vmatprep.subr.bf16.mxu0 %v2020
        %2072 = vmatpush1.bf16.msra.mxu0 %v2019
        %2073 = vmatprep.subr.bf16.mxu0 %v2024
        %2074 = vmatpush1.bf16.msra.mxu0 %v2023
        %2075 = vmatprep.subr.bf16.mxu0 0
        %2076 = vmatpush1.bf16.msra.mxu0 0
        %2077 = vmatprep.subr.bf16.mxu0 0
        %2078 = vmatpush1.bf16.msra.mxu0 0
        %2079 = vmatprep.subr.bf16.mxu0 0
        %2080 = vmatpush1.bf16.msra.mxu0 0
        %2081 = vmatprep.subr.bf16.mxu0 0
        %2082 = vmatpush1.bf16.msra.mxu0 0
        %2083 = vmatprep.subr.bf16.mxu0 0
        %2084 = vmatpush1.bf16.msra.mxu0 0
        %2085 = vmatprep.subr.bf16.mxu0 0
        %2086 = vmatpush1.bf16.msra.mxu0 0
        %2087 = vmatprep.subr.bf16.mxu0 0
        %2088 = vmatpush1.bf16.msra.mxu0 0
        %2089 = vmatprep.subr.bf16.mxu0 0
        %2090 = vmatpush1.bf16.msra.mxu0 0
        %2091 = vmatprep.mubr.bf16.mxu0 0
        %2092 = vmatmul.mubr.bf16.gmra.mrb[0].mxu0 %v1866
        %v2093 = vpop.f32.mrb[0].mxu0
        %v2094 = vadd.f32 0.0, %v2093
        %v2095 = vpop.f32.mrb[0].mxu0
        %v2096 = vadd.f32 0.0, %v2095
        %v2097 = vpop.f32.mrb[0].mxu0
        %v2098 = vadd.f32 0.0, %v2097
        %v2099 = vpop.f32.mrb[0].mxu0
        %v2100 = vadd.f32 0.0, %v2099
        %2101 = vdwg.mxu0
        %2102 = vmatprep.subr.bf16.mxu0 %v1998
        %2103 = vmatpush1.bf16.msra.mxu0 %v1997
        %2104 = vmatprep.subr.bf16.mxu0 %v2002
        %2105 = vmatpush1.bf16.msra.mxu0 %v2001
        %2106 = vmatprep.subr.bf16.mxu0 %v2006
        %2107 = vmatpush1.bf16.msra.mxu0 %v2005
        %2108 = vmatprep.subr.bf16.mxu0 %v2010
        %2109 = vmatpush1.bf16.msra.mxu0 %v2009
        %2110 = vmatprep.subr.bf16.mxu0 %v2014
        %2111 = vmatpush1.bf16.msra.mxu0 %v2013
        %2112 = vmatprep.subr.bf16.mxu0 %v2018
        %2113 = vmatpush1.bf16.msra.mxu0 %v2017
        %2114 = vmatprep.subr.bf16.mxu0 %v2022
        %2115 = vmatpush1.bf16.msra.mxu0 %v2021
        %2116 = vmatprep.subr.bf16.mxu0 %v2026
        %2117 = vmatpush1.bf16.msra.mxu0 %v2025
        %2118 = vmatprep.subr.bf16.mxu0 0
        %2119 = vmatpush1.bf16.msra.mxu0 0
        %2120 = vmatprep.subr.bf16.mxu0 0
        %2121 = vmatpush1.bf16.msra.mxu0 0
        %2122 = vmatprep.subr.bf16.mxu0 0
        %2123 = vmatpush1.bf16.msra.mxu0 0
        %2124 = vmatprep.subr.bf16.mxu0 0
        %2125 = vmatpush1.bf16.msra.mxu0 0
        %2126 = vmatprep.subr.bf16.mxu0 0
        %2127 = vmatpush1.bf16.msra.mxu0 0
        %2128 = vmatprep.subr.bf16.mxu0 0
        %2129 = vmatpush1.bf16.msra.mxu0 0
        %2130 = vmatprep.subr.bf16.mxu0 0
        %2131 = vmatpush1.bf16.msra.mxu0 0
        %2132 = vmatprep.subr.bf16.mxu0 0
        %2133 = vmatpush1.bf16.msra.mxu0 0
        %2134 = vmatprep.mubr.bf16.mxu0 0
        %2135 = vmatmul.mubr.bf16.gmra.mrb[0].mxu0 %v1866
        %v2136 = vpop.f32.mrb[0].mxu0
        %v2137 = vadd.f32 0.0, %v2136
        %v2138 = vpop.f32.mrb[0].mxu0
        %v2139 = vadd.f32 0.0, %v2138
        %v2140 = vpop.f32.mrb[0].mxu0
        %v2141 = vadd.f32 0.0, %v2140
        %v2142 = vpop.f32.mrb[0].mxu0
        %v2143 = vadd.f32 0.0, %v2142
        %2144 = vdwg.mxu0
        %v2145 = vadd.f32 %v1858, %v2094
        %v2146 = vadd.f32 %v1859, %v2096
        %v2147 = vadd.f32 %v1860, %v2137
        %v2148 = vadd.f32 %v1861, %v2139
        %v2149 = vadd.f32 %v1862, %v2098
        %v2150 = vadd.f32 %v1863, %v2100
        %v2151 = vadd.f32 %v1864, %v2141
        %v2152 = vadd.f32 %v1865, %v2143
        %v2153 = vxor.u32 %v2145, 2147483648
        %v2154 = vxor.u32 %v2146, 2147483648
        %v2155 = vxor.u32 %v2147, 2147483648
        %v2156 = vxor.u32 %v2149, 2147483648
        %v2157 = vxor.u32 %v2150, 2147483648
        %v2158 = vxor.u32 %v2151, 2147483648
        %v2159 = vmul.f32 %v2153, 1.442695
        %v2160 = vpow.pop %v2159
        %v2161 = vmul.f32 %v2154, 1.442695
        %v2162 = vpow.pop %v2161
        %v2163 = vmul.f32 %v2155, 1.442695
        %v2164 = vpow.pop %v2163
        %v2165 = vmul.f32 %v2156, 1.442695
        %v2166 = vpow.pop %v2165
        %v2167 = vmul.f32 %v2157, 1.442695
        %v2168 = vpow.pop %v2167
        %v2169 = vmul.f32 %v2158, 1.442695
        %v2170 = vpow.pop %v2169
        %v2171 = vadd.f32 %v2160, 1.0
        %v2172 = vadd.f32 %v2162, 1.0
        %v2173 = vadd.f32 %v2164, 1.0
        %v2174 = vadd.f32 %v2166, 1.0
        %v2175 = vadd.f32 %v2168, 1.0
        %v2176 = vadd.f32 %v2170, 1.0
        %v2177 = vrcp.pop %v2171
        %v2178 = vmul.f32 1.0, %v2177
        %v2179 = vrcp.pop %v2172
        %v2180 = vmul.f32 1.0, %v2179
        %v2181 = vrcp.pop %v2173
        %v2182 = vmul.f32 1.0, %v2181
        %v2183 = vrcp.pop %v2174
        %v2184 = vmul.f32 1.0, %v2183
        %v2185 = vrcp.pop %v2175
        %v2186 = vmul.f32 1.0, %v2185
        %v2187 = vrcp.pop %v2176
        %v2188 = vmul.f32 1.0, %v2187
        %v2189 = vtanh.pop %v2148
        %v2190 = vtanh.pop %v2152
        %v2191 = vmul.f32 %v2180, %v1848
        %v2192 = vmul.f32 %v2186, %v1849
        %v2193 = vmul.f32 %v2178, %v2189
        %v2194 = vmul.f32 %v2184, %v2190
        %v2195 = vadd.f32 %v2191, %v2193
        %v2196 = vadd.f32 %v2192, %v2194
        %v2197 = vtanh.pop %v2195
        %v2198 = vtanh.pop %v2196
        %v2199 = vmul.f32 %v2182, %v2197
        %v2200 = vmul.f32 %v2188, %v2198
        %s2201 = scalar_lea.vmem [#allocation3], 32
        %2202 = vst [vmem:[%s2201] sm:$0xff] %v2199
        %2203 = vst [vmem:[%s2201 + $0x8] sm:$0xff] %v2200
        %s2204 = scalar_lea.vmem [#allocation2], 192
        %v2205 = vld [vmem:[%s2204] sm:$0xff]
        %v2206 = vld [vmem:[%s2204 + $0x8] sm:$0xff]
        %v2207 = vld [vmem:[%s2204 + $0x10] sm:$0xff]
        %v2208 = vld [vmem:[%s2204 + $0x18] sm:$0xff]
        %v2209 = vld [vmem:[%s2204 + $0x20] sm:$0xff]
        %v2210 = vld [vmem:[%s2204 + $0x28] sm:$0xff]
        %v2211 = vld [vmem:[%s2204 + $0x30] sm:$0xff]
        %v2212 = vld [vmem:[%s2204 + $0x38] sm:$0xff]
        %v2213 = vpack.c.bf16 %v2200, %v2199
        %v2214 = vld [vmem:[%s6] sm:$0xff]
        %v2215 = vld [vmem:[%s6 + $0x8] sm:$0xff]
        %v2216 = vld [vmem:[%s6 + $0x10] sm:$0xff]
        %v2217 = vld [vmem:[%s6 + $0x18] sm:$0xff]
        %v2218 = vld [vmem:[%s6 + $0x20] sm:$0xff]
        %v2219 = vld [vmem:[%s6 + $0x28] sm:$0xff]
        %v2220 = vld [vmem:[%s6 + $0x30] sm:$0xff]
        %v2221 = vld [vmem:[%s6 + $0x38] sm:$0xff]
        %v2222 = vld [vmem:[%s6 + $0x40] sm:$0xff]
        %v2223 = vld [vmem:[%s6 + $0x48] sm:$0xff]
        %v2224 = vld [vmem:[%s6 + $0x50] sm:$0xff]
        %v2225 = vld [vmem:[%s6 + $0x58] sm:$0xff]
        %v2226 = vld [vmem:[%s6 + $0x60] sm:$0xff]
        %v2227 = vld [vmem:[%s6 + $0x68] sm:$0xff]
        %v2228 = vld [vmem:[%s6 + $0x70] sm:$0xff]
        %v2229 = vld [vmem:[%s6 + $0x78] sm:$0xff]
        %v2230 = vld [vmem:[%s6 + $0x80] sm:$0xff]
        %v2231 = vld [vmem:[%s6 + $0x88] sm:$0xff]
        %v2232 = vld [vmem:[%s6 + $0x90] sm:$0xff]
        %v2233 = vld [vmem:[%s6 + $0x98] sm:$0xff]
        %v2234 = vld [vmem:[%s6 + $0xa0] sm:$0xff]
        %v2235 = vld [vmem:[%s6 + $0xa8] sm:$0xff]
        %v2236 = vld [vmem:[%s6 + $0xb0] sm:$0xff]
        %v2237 = vld [vmem:[%s6 + $0xb8] sm:$0xff]
        %v2238 = vld [vmem:[%s6 + $0xc0] sm:$0xff]
        %v2239 = vld [vmem:[%s6 + $0xc8] sm:$0xff]
        %v2240 = vld [vmem:[%s6 + $0xd0] sm:$0xff]
        %v2241 = vld [vmem:[%s6 + $0xd8] sm:$0xff]
        %v2242 = vld [vmem:[%s6 + $0xe0] sm:$0xff]
        %v2243 = vld [vmem:[%s6 + $0xe8] sm:$0xff]
        %v2244 = vld [vmem:[%s6 + $0xf0] sm:$0xff]
        %v2245 = vld [vmem:[%s6 + $0xf8] sm:$0xff]
        %v2278 = vunpack.c.l.b16 %v2214
        %v2279 = vunpack.c.h.b16 %v2214
        %v2280 = vunpack.c.l.b16 %v2215
        %v2281 = vunpack.c.h.b16 %v2215
        %v2282 = vunpack.c.l.b16 %v2216
        %v2283 = vunpack.c.h.b16 %v2216
        %v2284 = vunpack.c.l.b16 %v2217
        %v2285 = vunpack.c.h.b16 %v2217
        %v2286 = vunpack.c.l.b16 %v2218
        %v2287 = vunpack.c.h.b16 %v2218
        %v2288 = vunpack.c.l.b16 %v2219
        %v2289 = vunpack.c.h.b16 %v2219
        %v2290 = vunpack.c.l.b16 %v2220
        %v2291 = vunpack.c.h.b16 %v2220
        %v2292 = vunpack.c.l.b16 %v2221
        %v2293 = vunpack.c.h.b16 %v2221
        %v2294 = vunpack.c.l.b16 %v2222
        %v2295 = vunpack.c.h.b16 %v2222
        %v2296 = vunpack.c.l.b16 %v2223
        %v2297 = vunpack.c.h.b16 %v2223
        %v2298 = vunpack.c.l.b16 %v2224
        %v2299 = vunpack.c.h.b16 %v2224
        %v2300 = vunpack.c.l.b16 %v2225
        %v2301 = vunpack.c.h.b16 %v2225
        %v2302 = vunpack.c.l.b16 %v2226
        %v2303 = vunpack.c.h.b16 %v2226
        %v2304 = vunpack.c.l.b16 %v2227
        %v2305 = vunpack.c.h.b16 %v2227
        %v2306 = vunpack.c.l.b16 %v2228
        %v2307 = vunpack.c.h.b16 %v2228
        %v2308 = vunpack.c.l.b16 %v2229
        %v2309 = vunpack.c.h.b16 %v2229
        %v2310 = vunpack.c.l.b16 %v2230
        %v2311 = vunpack.c.h.b16 %v2230
        %v2312 = vunpack.c.l.b16 %v2231
        %v2313 = vunpack.c.h.b16 %v2231
        %v2314 = vunpack.c.l.b16 %v2232
        %v2315 = vunpack.c.h.b16 %v2232
        %v2316 = vunpack.c.l.b16 %v2233
        %v2317 = vunpack.c.h.b16 %v2233
        %v2318 = vunpack.c.l.b16 %v2234
        %v2319 = vunpack.c.h.b16 %v2234
        %v2320 = vunpack.c.l.b16 %v2235
        %v2321 = vunpack.c.h.b16 %v2235
        %v2322 = vunpack.c.l.b16 %v2236
        %v2323 = vunpack.c.h.b16 %v2236
        %v2324 = vunpack.c.l.b16 %v2237
        %v2325 = vunpack.c.h.b16 %v2237
        %v2326 = vunpack.c.l.b16 %v2238
        %v2327 = vunpack.c.h.b16 %v2238
        %v2328 = vunpack.c.l.b16 %v2239
        %v2329 = vunpack.c.h.b16 %v2239
        %v2330 = vunpack.c.l.b16 %v2240
        %v2331 = vunpack.c.h.b16 %v2240
        %v2332 = vunpack.c.l.b16 %v2241
        %v2333 = vunpack.c.h.b16 %v2241
        %v2334 = vunpack.c.l.b16 %v2242
        %v2335 = vunpack.c.h.b16 %v2242
        %v2336 = vunpack.c.l.b16 %v2243
        %v2337 = vunpack.c.h.b16 %v2243
        %v2338 = vunpack.c.l.b16 %v2244
        %v2339 = vunpack.c.h.b16 %v2244
        %v2340 = vunpack.c.l.b16 %v2245
        %v2341 = vunpack.c.h.b16 %v2245
        %v2342 = vpack.c.b16 %v2282, %v2278
        %v2343 = vpack.c.b16 %v2283, %v2279
        %v2344 = vpack.c.b16 %v2284, %v2280
        %v2345 = vpack.c.b16 %v2285, %v2281
        %v2346 = vpack.c.b16 %v2290, %v2286
        %v2347 = vpack.c.b16 %v2291, %v2287
        %v2348 = vpack.c.b16 %v2292, %v2288
        %v2349 = vpack.c.b16 %v2293, %v2289
        %v2350 = vpack.c.b16 %v2298, %v2294
        %v2351 = vpack.c.b16 %v2299, %v2295
        %v2352 = vpack.c.b16 %v2300, %v2296
        %v2353 = vpack.c.b16 %v2301, %v2297
        %v2354 = vpack.c.b16 %v2306, %v2302
        %v2355 = vpack.c.b16 %v2307, %v2303
        %v2356 = vpack.c.b16 %v2308, %v2304
        %v2357 = vpack.c.b16 %v2309, %v2305
        %v2358 = vpack.c.b16 %v2314, %v2310
        %v2359 = vpack.c.b16 %v2315, %v2311
        %v2360 = vpack.c.b16 %v2316, %v2312
        %v2361 = vpack.c.b16 %v2317, %v2313
        %v2362 = vpack.c.b16 %v2322, %v2318
        %v2363 = vpack.c.b16 %v2323, %v2319
        %v2364 = vpack.c.b16 %v2324, %v2320
        %v2365 = vpack.c.b16 %v2325, %v2321
        %v2366 = vpack.c.b16 %v2330, %v2326
        %v2367 = vpack.c.b16 %v2331, %v2327
        %v2368 = vpack.c.b16 %v2332, %v2328
        %v2369 = vpack.c.b16 %v2333, %v2329
        %v2370 = vpack.c.b16 %v2338, %v2334
        %v2371 = vpack.c.b16 %v2339, %v2335
        %v2372 = vpack.c.b16 %v2340, %v2336
        %v2373 = vpack.c.b16 %v2341, %v2337
        %2406 = vmatprep.subr.bf16.mxu0 %v2343
        %2407 = vmatpush1.bf16.msra.mxu0 %v2342
        %2408 = vmatprep.subr.bf16.mxu0 %v2347
        %2409 = vmatpush1.bf16.msra.mxu0 %v2346
        %2410 = vmatprep.subr.bf16.mxu0 %v2351
        %2411 = vmatpush1.bf16.msra.mxu0 %v2350
        %2412 = vmatprep.subr.bf16.mxu0 %v2355
        %2413 = vmatpush1.bf16.msra.mxu0 %v2354
        %2414 = vmatprep.subr.bf16.mxu0 %v2359
        %2415 = vmatpush1.bf16.msra.mxu0 %v2358
        %2416 = vmatprep.subr.bf16.mxu0 %v2363
        %2417 = vmatpush1.bf16.msra.mxu0 %v2362
        %2418 = vmatprep.subr.bf16.mxu0 %v2367
        %2419 = vmatpush1.bf16.msra.mxu0 %v2366
        %2420 = vmatprep.subr.bf16.mxu0 %v2371
        %2421 = vmatpush1.bf16.msra.mxu0 %v2370
        %2422 = vmatprep.subr.bf16.mxu0 0
        %2423 = vmatpush1.bf16.msra.mxu0 0
        %2424 = vmatprep.subr.bf16.mxu0 0
        %2425 = vmatpush1.bf16.msra.mxu0 0
        %2426 = vmatprep.subr.bf16.mxu0 0
        %2427 = vmatpush1.bf16.msra.mxu0 0
        %2428 = vmatprep.subr.bf16.mxu0 0
        %2429 = vmatpush1.bf16.msra.mxu0 0
        %2430 = vmatprep.subr.bf16.mxu0 0
        %2431 = vmatpush1.bf16.msra.mxu0 0
        %2432 = vmatprep.subr.bf16.mxu0 0
        %2433 = vmatpush1.bf16.msra.mxu0 0
        %2434 = vmatprep.subr.bf16.mxu0 0
        %2435 = vmatpush1.bf16.msra.mxu0 0
        %2436 = vmatprep.subr.bf16.mxu0 0
        %2437 = vmatpush1.bf16.msra.mxu0 0
        %2438 = vmatprep.mubr.bf16.mxu0 0
        %2439 = vmatmul.mubr.bf16.gmra.mrb[0].mxu0 %v2213
        %v2440 = vpop.f32.mrb[0].mxu0
        %v2441 = vadd.f32 0.0, %v2440
        %v2442 = vpop.f32.mrb[0].mxu0
        %v2443 = vadd.f32 0.0, %v2442
        %v2444 = vpop.f32.mrb[0].mxu0
        %v2445 = vadd.f32 0.0, %v2444
        %v2446 = vpop.f32.mrb[0].mxu0
        %v2447 = vadd.f32 0.0, %v2446
        %2448 = vdwg.mxu0
        %2449 = vmatprep.subr.bf16.mxu0 %v2345
        %2450 = vmatpush1.bf16.msra.mxu0 %v2344
        %2451 = vmatprep.subr.bf16.mxu0 %v2349
        %2452 = vmatpush1.bf16.msra.mxu0 %v2348
        %2453 = vmatprep.subr.bf16.mxu0 %v2353
        %2454 = vmatpush1.bf16.msra.mxu0 %v2352
        %2455 = vmatprep.subr.bf16.mxu0 %v2357
        %2456 = vmatpush1.bf16.msra.mxu0 %v2356
        %2457 = vmatprep.subr.bf16.mxu0 %v2361
        %2458 = vmatpush1.bf16.msra.mxu0 %v2360
        %2459 = vmatprep.subr.bf16.mxu0 %v2365
        %2460 = vmatpush1.bf16.msra.mxu0 %v2364
        %2461 = vmatprep.subr.bf16.mxu0 %v2369
        %2462 = vmatpush1.bf16.msra.mxu0 %v2368
        %2463 = vmatprep.subr.bf16.mxu0 %v2373
        %2464 = vmatpush1.bf16.msra.mxu0 %v2372
        %2465 = vmatprep.subr.bf16.mxu0 0
        %2466 = vmatpush1.bf16.msra.mxu0 0
        %2467 = vmatprep.subr.bf16.mxu0 0
        %2468 = vmatpush1.bf16.msra.mxu0 0
        %2469 = vmatprep.subr.bf16.mxu0 0
        %2470 = vmatpush1.bf16.msra.mxu0 0
        %2471 = vmatprep.subr.bf16.mxu0 0
        %2472 = vmatpush1.bf16.msra.mxu0 0
        %2473 = vmatprep.subr.bf16.mxu0 0
        %2474 = vmatpush1.bf16.msra.mxu0 0
        %2475 = vmatprep.subr.bf16.mxu0 0
        %2476 = vmatpush1.bf16.msra.mxu0 0
        %2477 = vmatprep.subr.bf16.mxu0 0
        %2478 = vmatpush1.bf16.msra.mxu0 0
        %2479 = vmatprep.subr.bf16.mxu0 0
        %2480 = vmatpush1.bf16.msra.mxu0 0
        %2481 = vmatprep.mubr.bf16.mxu0 0
        %2482 = vmatmul.mubr.bf16.gmra.mrb[0].mxu0 %v2213
        %v2483 = vpop.f32.mrb[0].mxu0
        %v2484 = vadd.f32 0.0, %v2483
        %v2485 = vpop.f32.mrb[0].mxu0
        %v2486 = vadd.f32 0.0, %v2485
        %v2487 = vpop.f32.mrb[0].mxu0
        %v2488 = vadd.f32 0.0, %v2487
        %v2489 = vpop.f32.mrb[0].mxu0
        %v2490 = vadd.f32 0.0, %v2489
        %2491 = vdwg.mxu0
        %v2492 = vadd.f32 %v2205, %v2441
        %v2493 = vadd.f32 %v2206, %v2443
        %v2494 = vadd.f32 %v2207, %v2484
        %v2495 = vadd.f32 %v2208, %v2486
        %v2496 = vadd.f32 %v2209, %v2445
        %v2497 = vadd.f32 %v2210, %v2447
        %v2498 = vadd.f32 %v2211, %v2488
        %v2499 = vadd.f32 %v2212, %v2490
        %v2500 = vxor.u32 %v2492, 2147483648
        %v2501 = vxor.u32 %v2493, 2147483648
        %v2502 = vxor.u32 %v2494, 2147483648
        %v2503 = vxor.u32 %v2496, 2147483648
        %v2504 = vxor.u32 %v2497, 2147483648
        %v2505 = vxor.u32 %v2498, 2147483648
        %v2506 = vmul.f32 %v2500, 1.442695
        %v2507 = vpow.pop %v2506
        %v2508 = vmul.f32 %v2501, 1.442695
        %v2509 = vpow.pop %v2508
        %v2510 = vmul.f32 %v2502, 1.442695
        %v2511 = vpow.pop %v2510
        %v2512 = vmul.f32 %v2503, 1.442695
        %v2513 = vpow.pop %v2512
        %v2514 = vmul.f32 %v2504, 1.442695
        %v2515 = vpow.pop %v2514
        %v2516 = vmul.f32 %v2505, 1.442695
        %v2517 = vpow.pop %v2516
        %v2518 = vadd.f32 %v2507, 1.0
        %v2519 = vadd.f32 %v2509, 1.0
        %v2520 = vadd.f32 %v2511, 1.0
        %v2521 = vadd.f32 %v2513, 1.0
        %v2522 = vadd.f32 %v2515, 1.0
        %v2523 = vadd.f32 %v2517, 1.0
        %v2524 = vrcp.pop %v2518
        %v2525 = vmul.f32 1.0, %v2524
        %v2526 = vrcp.pop %v2519
        %v2527 = vmul.f32 1.0, %v2526
        %v2528 = vrcp.pop %v2520
        %v2529 = vmul.f32 1.0, %v2528
        %v2530 = vrcp.pop %v2521
        %v2531 = vmul.f32 1.0, %v2530
        %v2532 = vrcp.pop %v2522
        %v2533 = vmul.f32 1.0, %v2532
        %v2534 = vrcp.pop %v2523
        %v2535 = vmul.f32 1.0, %v2534
        %v2536 = vtanh.pop %v2495
        %v2537 = vtanh.pop %v2499
        %v2538 = vmul.f32 %v2527, %v2195
        %v2539 = vmul.f32 %v2533, %v2196
        %v2540 = vmul.f32 %v2525, %v2536
        %v2541 = vmul.f32 %v2531, %v2537
        %v2542 = vadd.f32 %v2538, %v2540
        %v2543 = vadd.f32 %v2539, %v2541
        %v2544 = vtanh.pop %v2542
        %v2545 = vtanh.pop %v2543
        %v2546 = vmul.f32 %v2529, %v2544
        %v2547 = vmul.f32 %v2535, %v2545
        %s2548 = scalar_lea.vmem [#allocation3], 48
        %2549 = vst [vmem:[%s2548] sm:$0xff] %v2546
        %2550 = vst [vmem:[%s2548 + $0x8] sm:$0xff] %v2547
        %2551 = vst [vmem:[%s524] sm:$0xff] %v2546
        %2552 = vst [vmem:[%s524 + $0x8] sm:$0xff] %v2547
        %2553 = vst [vmem:[%s530] sm:$0xff] %v2542
        %2554 = vst [vmem:[%s530 + $0x8] sm:$0xff] %v2543
        %v2555 = vld [vmem:[#allocation3] sm:$0xff]
        %v2556 = vld [vmem:[#allocation3 + $0x8] sm:$0xff]
        %v2557 = vld [vmem:[#allocation3 + $0x10] sm:$0xff]
        %v2558 = vld [vmem:[#allocation3 + $0x18] sm:$0xff]
        %v2559 = vld [vmem:[#allocation3 + $0x20] sm:$0xff]
        %v2560 = vld [vmem:[#allocation3 + $0x28] sm:$0xff]
        %v2561 = vld [vmem:[#allocation3 + $0x30] sm:$0xff]
        %v2562 = vld [vmem:[#allocation3 + $0x38] sm:$0xff]
        %v2563 = vpack.c.bf16 %v2556, %v2555
        %v2564 = vpack.c.bf16 %v2558, %v2557
        %v2565 = vpack.c.bf16 %v2560, %v2559
        %v2566 = vpack.c.bf16 %v2562, %v2561
        %v2567 = vld [vmem:[%s8] sm:$0xf]
        %v2568 = vld [vmem:[%s8 + $0x4] sm:$0xf]
        %v2569 = vld [vmem:[%s8 + $0x8] sm:$0xf]
        %v2570 = vld [vmem:[%s8 + $0xc] sm:$0xf]
        %v2571 = vld [vmem:[%s8 + $0x10] sm:$0xf]
        %v2572 = vld [vmem:[%s8 + $0x14] sm:$0xf]
        %v2573 = vld [vmem:[%s8 + $0x18] sm:$0xf]
        %v2574 = vld [vmem:[%s8 + $0x1c] sm:$0xf]
        %v2575 = vld [vmem:[%s8 + $0x20] sm:$0xf]
        %v2576 = vld [vmem:[%s8 + $0x24] sm:$0xf]
        %v2577 = vld [vmem:[%s8 + $0x28] sm:$0xf]
        %v2578 = vld [vmem:[%s8 + $0x2c] sm:$0xf]
        %v2579 = vld [vmem:[%s8 + $0x30] sm:$0xf]
        %v2580 = vld [vmem:[%s8 + $0x34] sm:$0xf]
        %v2581 = vld [vmem:[%s8 + $0x38] sm:$0xf]
        %v2582 = vld [vmem:[%s8 + $0x3c] sm:$0xf]
        %v2583 = vld [vmem:[%s9] sm:$0x1]
        %v2585 = vlaneseq
        %v2586 = vshrl.u32 %v2585, 7
        %v2587 = vsub.s32 0, %v2586
        %v2588 = vrot.slane %v2583, %v2587
        %v2606 = vunpack.c.l.b16 %v2567
        %v2607 = vunpack.c.l.b16 %v2568
        %v2608 = vunpack.c.l.b16 %v2569
        %v2609 = vunpack.c.l.b16 %v2570
        %v2610 = vunpack.c.l.b16 %v2571
        %v2611 = vunpack.c.l.b16 %v2572
        %v2612 = vunpack.c.l.b16 %v2573
        %v2613 = vunpack.c.l.b16 %v2574
        %v2614 = vunpack.c.l.b16 %v2575
        %v2615 = vunpack.c.l.b16 %v2576
        %v2616 = vunpack.c.l.b16 %v2577
        %v2617 = vunpack.c.l.b16 %v2578
        %v2618 = vunpack.c.l.b16 %v2579
        %v2619 = vunpack.c.l.b16 %v2580
        %v2620 = vunpack.c.l.b16 %v2581
        %v2621 = vunpack.c.l.b16 %v2582
        %v2622 = vpack.c.b16 %v2607, %v2606
        %v2623 = vpack.c.b16 %v2609, %v2608
        %v2624 = vpack.c.b16 %v2611, %v2610
        %v2625 = vpack.c.b16 %v2613, %v2612
        %v2626 = vpack.c.b16 %v2615, %v2614
        %v2627 = vpack.c.b16 %v2617, %v2616
        %v2628 = vpack.c.b16 %v2619, %v2618
        %v2629 = vpack.c.b16 %v2621, %v2620
        %2638 = vmatprep.subr.bf16.mxu0 0
        %2639 = vmatpush1.bf16.msra.mxu0 %v2622
        %2640 = vmatprep.subr.bf16.mxu0 0
        %2641 = vmatpush1.bf16.msra.mxu0 %v2623
        %2642 = vmatprep.subr.bf16.mxu0 0
        %2643 = vmatpush1.bf16.msra.mxu0 %v2624
        %2644 = vmatprep.subr.bf16.mxu0 0
        %2645 = vmatpush1.bf16.msra.mxu0 %v2625
        %2646 = vmatprep.subr.bf16.mxu0 0
        %2647 = vmatpush1.bf16.msra.mxu0 %v2626
        %2648 = vmatprep.subr.bf16.mxu0 0
        %2649 = vmatpush1.bf16.msra.mxu0 %v2627
        %2650 = vmatprep.subr.bf16.mxu0 0
        %2651 = vmatpush1.bf16.msra.mxu0 %v2628
        %2652 = vmatprep.subr.bf16.mxu0 0
        %2653 = vmatpush1.bf16.msra.mxu0 %v2629
        %2654 = vmatprep.subr.bf16.mxu0 0
        %2655 = vmatpush1.bf16.msra.mxu0 0
        %2656 = vmatprep.subr.bf16.mxu0 0
        %2657 = vmatpush1.bf16.msra.mxu0 0
        %2658 = vmatprep.subr.bf16.mxu0 0
        %2659 = vmatpush1.bf16.msra.mxu0 0
        %2660 = vmatprep.subr.bf16.mxu0 0
        %2661 = vmatpush1.bf16.msra.mxu0 0
        %2662 = vmatprep.subr.bf16.mxu0 0
        %2663 = vmatpush1.bf16.msra.mxu0 0
        %2664 = vmatprep.subr.bf16.mxu0 0
        %2665 = vmatpush1.bf16.msra.mxu0 0
        %2666 = vmatprep.subr.bf16.mxu0 0
        %2667 = vmatpush1.bf16.msra.mxu0 0
        %2668 = vmatprep.subr.bf16.mxu0 0
        %2669 = vmatpush1.bf16.msra.mxu0 0
        %2670 = vmatprep.mubr.bf16.mxu0 0
        %2671 = vmatmul.mubr.bf16.gmra.mrb[0].mxu0 %v2563
        %v2672 = vpop.f32.mrb[0].mxu0
        %v2673 = vadd.f32 %v2588, %v2672
        %v2674 = vpop.f32.mrb[0].mxu0
        %v2675 = vpop.f32.mrb[0].mxu0
        %v2676 = vadd.f32 %v2588, %v2675
        %v2677 = vpop.f32.mrb[0].mxu0
        %2678 = vmatprep.mubr.bf16.mxu0 0
        %2679 = vmatmul.mubr.bf16.gmra.mrb[0].mxu0 %v2564
        %v2680 = vpop.f32.mrb[0].mxu0
        %v2681 = vadd.f32 %v2588, %v2680
        %v2682 = vpop.f32.mrb[0].mxu0
        %v2683 = vpop.f32.mrb[0].mxu0
        %v2684 = vadd.f32 %v2588, %v2683
        %v2685 = vpop.f32.mrb[0].mxu0
        %2686 = vmatprep.mubr.bf16.mxu0 0
        %2687 = vmatmul.mubr.bf16.gmra.mrb[0].mxu0 %v2565
        %v2688 = vpop.f32.mrb[0].mxu0
        %v2689 = vadd.f32 %v2588, %v2688
        %v2690 = vpop.f32.mrb[0].mxu0
        %v2691 = vpop.f32.mrb[0].mxu0
        %v2692 = vadd.f32 %v2588, %v2691
        %v2693 = vpop.f32.mrb[0].mxu0
        %2694 = vmatprep.mubr.bf16.mxu0 0
        %2695 = vmatmul.mubr.bf16.gmra.mrb[0].mxu0 %v2566
        %v2696 = vpop.f32.mrb[0].mxu0
        %v2697 = vadd.f32 %v2588, %v2696
        %v2698 = vpop.f32.mrb[0].mxu0
        %v2699 = vpop.f32.mrb[0].mxu0
        %v2700 = vadd.f32 %v2588, %v2699
        %v2701 = vpop.f32.mrb[0].mxu0
        %2702 = vdwg.mxu0
        %v2703 = vlaneseq
        %v2704 = vand.u32 %v2703, 127
        %vm2705 = vcmp.lt.s32.totalorder %v2704, 16
        %v2706 = vsel %vm2705, %v2673, -1e+30
        %v2707 = vsel %vm2705, %v2676, -1e+30
        %v2708 = vsel %vm2705, %v2681, -1e+30
        %v2709 = vsel %vm2705, %v2684, -1e+30
        %v2710 = vsel %vm2705, %v2689, -1e+30
        %v2711 = vsel %vm2705, %v2692, -1e+30
        %v2712 = vsel %vm2705, %v2697, -1e+30
        %v2713 = vsel %vm2705, %v2700, -1e+30
        %2714 = vmax.xlane.f32.xlu0 %v2706
        %v2715 = vpop.xlane.xlu0 %2714
        %2716 = vmax.xlane.f32.xlu0 %v2707
        %v2717 = vpop.xlane.xlu0 %2716
        %2718 = vmax.xlane.f32.xlu0 %v2708
        %v2719 = vpop.xlane.xlu0 %2718
        %2720 = vmax.xlane.f32.xlu0 %v2709
        %v2721 = vpop.xlane.xlu0 %2720
        %2722 = vmax.xlane.f32.xlu0 %v2710
        %v2723 = vpop.xlane.xlu0 %2722
        %2724 = vmax.xlane.f32.xlu0 %v2711
        %v2725 = vpop.xlane.xlu0 %2724
        %2726 = vmax.xlane.f32.xlu0 %v2712
        %v2727 = vpop.xlane.xlu0 %2726
        %2728 = vmax.xlane.f32.xlu0 %v2713
        %v2729 = vpop.xlane.xlu0 %2728
        %v2730 = vsub.f32 %v2706, %v2715
        %v2731 = vsub.f32 %v2707, %v2717
        %v2732 = vsub.f32 %v2708, %v2719
        %v2733 = vsub.f32 %v2709, %v2721
        %v2734 = vsub.f32 %v2710, %v2723
        %v2735 = vsub.f32 %v2711, %v2725
        %v2736 = vsub.f32 %v2712, %v2727
        %v2737 = vsub.f32 %v2713, %v2729
        %v2738 = vmul.f32 %v2730, 1.442695
        %v2739 = vpow.pop %v2738
        %v2740 = vmul.f32 %v2731, 1.442695
        %v2741 = vpow.pop %v2740
        %v2742 = vmul.f32 %v2732, 1.442695
        %v2743 = vpow.pop %v2742
        %v2744 = vmul.f32 %v2733, 1.442695
        %v2745 = vpow.pop %v2744
        %v2746 = vmul.f32 %v2734, 1.442695
        %v2747 = vpow.pop %v2746
        %v2748 = vmul.f32 %v2735, 1.442695
        %v2749 = vpow.pop %v2748
        %v2750 = vmul.f32 %v2736, 1.442695
        %v2751 = vpow.pop %v2750
        %v2752 = vmul.f32 %v2737, 1.442695
        %v2753 = vpow.pop %v2752
        %2754 = vadd.xlane.f32.xlu0 %v2739
        %v2755 = vpop.xlane.xlu0 %2754
        %2756 = vadd.xlane.f32.xlu0 %v2741
        %v2757 = vpop.xlane.xlu0 %2756
        %2758 = vadd.xlane.f32.xlu0 %v2743
        %v2759 = vpop.xlane.xlu0 %2758
        %2760 = vadd.xlane.f32.xlu0 %v2745
        %v2761 = vpop.xlane.xlu0 %2760
        %2762 = vadd.xlane.f32.xlu0 %v2747
        %v2763 = vpop.xlane.xlu0 %2762
        %2764 = vadd.xlane.f32.xlu0 %v2749
        %v2765 = vpop.xlane.xlu0 %2764
        %2766 = vadd.xlane.f32.xlu0 %v2751
        %v2767 = vpop.xlane.xlu0 %2766
        %2768 = vadd.xlane.f32.xlu0 %v2753
        %v2769 = vpop.xlane.xlu0 %2768
        %v2770 = vlog2.pop %v2755
        %v2771 = vmul.f32 %v2770, 0.6931472
        %v2772 = vlog2.pop %v2757
        %v2773 = vmul.f32 %v2772, 0.6931472
        %v2774 = vlog2.pop %v2759
        %v2775 = vmul.f32 %v2774, 0.6931472
        %v2776 = vlog2.pop %v2761
        %v2777 = vmul.f32 %v2776, 0.6931472
        %v2778 = vlog2.pop %v2763
        %v2779 = vmul.f32 %v2778, 0.6931472
        %v2780 = vlog2.pop %v2765
        %v2781 = vmul.f32 %v2780, 0.6931472
        %v2782 = vlog2.pop %v2767
        %v2783 = vmul.f32 %v2782, 0.6931472
        %v2784 = vlog2.pop %v2769
        %v2785 = vmul.f32 %v2784, 0.6931472
        %v2786 = vsub.f32 %v2730, %v2771
        %v2787 = vsub.f32 %v2731, %v2773
        %v2788 = vsub.f32 %v2732, %v2775
        %v2789 = vsub.f32 %v2733, %v2777
        %v2790 = vsub.f32 %v2734, %v2779
        %v2791 = vsub.f32 %v2735, %v2781
        %v2792 = vsub.f32 %v2736, %v2783
        %v2793 = vsub.f32 %v2737, %v2785
        %v2794 = vmul.f32 %v2739, %v2786
        %v2795 = vmul.f32 %v2741, %v2787
        %v2796 = vmul.f32 %v2743, %v2788
        %v2797 = vmul.f32 %v2745, %v2789
        %v2798 = vmul.f32 %v2747, %v2790
        %v2799 = vmul.f32 %v2749, %v2791
        %v2800 = vmul.f32 %v2751, %v2792
        %v2801 = vmul.f32 %v2753, %v2793
        %2802 = vadd.xlane.f32.xlu0 %v2794
        %v2803 = vpop.xlane.xlu0 %2802
        %2804 = vadd.xlane.f32.xlu0 %v2795
        %v2805 = vpop.xlane.xlu0 %2804
        %2806 = vadd.xlane.f32.xlu0 %v2796
        %v2807 = vpop.xlane.xlu0 %2806
        %2808 = vadd.xlane.f32.xlu0 %v2797
        %v2809 = vpop.xlane.xlu0 %2808
        %2810 = vadd.xlane.f32.xlu0 %v2798
        %v2811 = vpop.xlane.xlu0 %2810
        %2812 = vadd.xlane.f32.xlu0 %v2799
        %v2813 = vpop.xlane.xlu0 %2812
        %2814 = vadd.xlane.f32.xlu0 %v2800
        %v2815 = vpop.xlane.xlu0 %2814
        %2816 = vadd.xlane.f32.xlu0 %v2801
        %v2817 = vpop.xlane.xlu0 %2816
        %v2818 = vsub.f32 0.0, %v2803
        %v2819 = vsub.f32 0.0, %v2805
        %v2820 = vsub.f32 0.0, %v2807
        %v2821 = vsub.f32 0.0, %v2809
        %v2822 = vsub.f32 0.0, %v2811
        %v2823 = vsub.f32 0.0, %v2813
        %v2824 = vsub.f32 0.0, %v2815
        %v2825 = vsub.f32 0.0, %v2817
        %v2826 = vrcp.pop %v2755
        %v2827 = vrcp.pop %v2757
        %v2828 = vrcp.pop %v2759
        %v2829 = vrcp.pop %v2761
        %v2830 = vrcp.pop %v2763
        %v2831 = vrcp.pop %v2765
        %v2832 = vrcp.pop %v2767
        %v2833 = vrcp.pop %v2769
        %v2834 = vmul.f32 %v2818, %v2826
        %v2835 = vmul.f32 %v2819, %v2827
        %v2836 = vmul.f32 %v2820, %v2828
        %v2837 = vmul.f32 %v2821, %v2829
        %v2838 = vmul.f32 %v2822, %v2830
        %v2839 = vmul.f32 %v2823, %v2831
        %v2840 = vmul.f32 %v2824, %v2832
        %v2841 = vmul.f32 %v2825, %v2833
        %vm2842 = vcmp.eq.s32.totalorder %v2704, 17
        %v2843 = vsel %vm2842, %v2834, %v2673
        %v2844 = vsel %vm2842, %v2835, %v2676
        %v2845 = vsel %vm2842, %v2836, %v2681
        %v2846 = vsel %vm2842, %v2837, %v2684
        %v2847 = vsel %vm2842, %v2838, %v2689
        %v2848 = vsel %vm2842, %v2839, %v2692
        %v2849 = vsel %vm2842, %v2840, %v2697
        %v2850 = vsel %vm2842, %v2841, %v2700
        %2851 = vst [vmem:[%s491] sm:$0xff] %v2786
        %2852 = vst [vmem:[%s491 + $0x8] sm:$0xff] %v2843
        %2853 = vst [vmem:[%s491 + $0x10] sm:$0xff] %v2787
        %2854 = vst [vmem:[%s491 + $0x18] sm:$0xff] %v2844
        %2855 = vst [vmem:[%s491 + $0x20] sm:$0xff] %v2788
        %2856 = vst [vmem:[%s491 + $0x28] sm:$0xff] %v2845
        %2857 = vst [vmem:[%s491 + $0x30] sm:$0xff] %v2789
        %2858 = vst [vmem:[%s491 + $0x38] sm:$0xff] %v2846
        %2859 = vst [vmem:[%s491 + $0x40] sm:$0xff] %v2790
        %2860 = vst [vmem:[%s491 + $0x48] sm:$0xff] %v2847
        %2861 = vst [vmem:[%s491 + $0x50] sm:$0xff] %v2791
        %2862 = vst [vmem:[%s491 + $0x58] sm:$0xff] %v2848
        %2863 = vst [vmem:[%s491 + $0x60] sm:$0xff] %v2792
        %2864 = vst [vmem:[%s491 + $0x68] sm:$0xff] %v2849
        %2865 = vst [vmem:[%s491 + $0x70] sm:$0xff] %v2793
        %2866 = vst [vmem:[%s491 + $0x78] sm:$0xff] %v2850
        %s2867 = sand.u32 %s257, 1
        %s2868 = sand.u32 %s257, 1
        %s2869 = smul.addr %s2868, 128
        %s2870 = scalar_lea.vmem [#allocation5], %s2869
        %s2871 = smul.u32 2, %s24
        %p2872 = scmp.lt.s32.totalorder %s2871, 3
        %s2873 = scalar_select %p2872, %s2871, 3
        %s2874 = smul.addr %s2873, 8
        %s2875 = scalar_lea.vmem %s11, %s2874
        %s2876 = smul.u32 2, %s24
        %p2877 = scmp.lt.s32.totalorder %s2876, 3
        %s2878 = scalar_select %p2877, %s2876, 3
        %s2879 = smul.addr %s2878, 8
        %s2880 = scalar_lea.vmem %s12, %s2879
        // Predicated region
        $region84: #{agent_forward.1} parent=78 // pred_check
          %p2881 = pneg %p267
        $region85: #{agent_forward.1} parent=78 // pred_check_branch
          %2883 = sbr.rel (%p2881) target = $region87
        $region86: #{agent_forward.1} parent=78 // pred_region
          %s2884 = smul.u32 2, %s24
          %s2885 = smul.addr %s2884, 2
          %s2886 = smul.addr %s2885, 8
          %s2887 = scalar_lea.vmem %s10, %s2886
          // Predicated region
          $region88: #{agent_forward.1} parent=86 // pred_check
            _
          $region89: #{agent_forward.1} parent=86 // pred_check_branch
            %2889 = sbr.rel (0) target = $region91
          $region90: #{agent_forward.1} parent=86 // pred_region
            // Predicated region
            $region92: #{agent_forward.1} parent=90 // pred_check
              _
            $region93: #{agent_forward.1} parent=90 // pred_check_branch
              %2891 = sbr.rel (0) target = $region95
            $region94: #{agent_forward.1} parent=90 // pred_region
              loop: start=0, step=1, limit=1
              $region96: #{agent_forward.1} parent=94 // loop_pre_header
                _
              $region97: #{agent_forward.1} parent=94 // loop_header
                %s2893 = sphi 0, %s2897
                %p2894 = scmp.ge.s32.totalorder %s2893, 1
                %s2898 = sphi %s2870, %s2870
                %s2899 = sphi %s2887, %s2887
              $region98: #{agent_forward.1} parent=94 // loop_header_branch
                %2896 = sbr.rel (%p2894) target = $region102
              $region99: #{agent_forward.1} parent=94 // loop_body
                %v2900 = vld [vmem:[%s2898] sm:$0xff]
                %2901 = vst [vmem:[%s2899] sm:$0xff] %v2900
                %v2902 = vld [vmem:[%s2898 + $0x8] sm:$0xff]
                %2903 = vst [vmem:[%s2899 + $0x8] sm:$0xff] %v2902
                %v2904 = vld [vmem:[%s2898 + $0x10] sm:$0xff]
                %2905 = vst [vmem:[%s2899 + $0x10] sm:$0xff] %v2904
                %v2906 = vld [vmem:[%s2898 + $0x18] sm:$0xff]
                %2907 = vst [vmem:[%s2899 + $0x18] sm:$0xff] %v2906
                %v2908 = vld [vmem:[%s2898 + $0x20] sm:$0xff]
                %2909 = vst [vmem:[%s2899 + $0x40] sm:$0xff] %v2908
                %v2910 = vld [vmem:[%s2898 + $0x28] sm:$0xff]
                %2911 = vst [vmem:[%s2899 + $0x48] sm:$0xff] %v2910
                %v2912 = vld [vmem:[%s2898 + $0x30] sm:$0xff]
                %2913 = vst [vmem:[%s2899 + $0x50] sm:$0xff] %v2912
                %v2914 = vld [vmem:[%s2898 + $0x38] sm:$0xff]
                %2915 = vst [vmem:[%s2899 + $0x58] sm:$0xff] %v2914
                %v2916 = vld [vmem:[%s2898 + $0x40] sm:$0xff]
                %2917 = vst [vmem:[%s2899 + $0x80] sm:$0xff] %v2916
                %v2918 = vld [vmem:[%s2898 + $0x48] sm:$0xff]
                %2919 = vst [vmem:[%s2899 + $0x88] sm:$0xff] %v2918
                %v2920 = vld [vmem:[%s2898 + $0x50] sm:$0xff]
                %2921 = vst [vmem:[%s2899 + $0x90] sm:$0xff] %v2920
                %v2922 = vld [vmem:[%s2898 + $0x58] sm:$0xff]
                %2923 = vst [vmem:[%s2899 + $0x98] sm:$0xff] %v2922
                %v2924 = vld [vmem:[%s2898 + $0x60] sm:$0xff]
                %2925 = vst [vmem:[%s2899 + $0xc0] sm:$0xff] %v2924
                %v2926 = vld [vmem:[%s2898 + $0x68] sm:$0xff]
                %2927 = vst [vmem:[%s2899 + $0xc8] sm:$0xff] %v2926
                %v2928 = vld [vmem:[%s2898 + $0x70] sm:$0xff]
                %2929 = vst [vmem:[%s2899 + $0xd0] sm:$0xff] %v2928
                %v2930 = vld [vmem:[%s2898 + $0x78] sm:$0xff]
                %2931 = vst [vmem:[%s2899 + $0xd8] sm:$0xff] %v2930
              $region100: #{agent_forward.1} parent=94 // loop_footer
                %s2897 = sadd.s32 1, %s2893
              $region101: #{agent_forward.1} parent=94 // loop_footer_branch
                %2892 = sbr.rel target = $region97
              $region102: #{agent_forward.1} parent=94 // loop_exit
                _
            $region95: #{agent_forward.1} parent=90 // pred_fallthru
              _
            // Predicated region
            $region103: #{agent_forward.1} parent=90 // pred_check
              _
            $region104: #{agent_forward.1} parent=90 // pred_check_branch
              %2933 = sbr.rel target = $region106
            $region105: #{agent_forward.1} parent=90 // pred_region
              _
            $region106: #{agent_forward.1} parent=90 // pred_fallthru
              _
          $region91: #{agent_forward.1} parent=86 // pred_fallthru
            _
          %2934 = vnop
        $region87: #{agent_forward.1} parent=78 // pred_fallthru
          _
        // Predicated region
        $region107: #{agent_forward.1} parent=78 // pred_check
          %p2935 = pneg %p293
        $region108: #{agent_forward.1} parent=78 // pred_check_branch
          %2937 = sbr.rel (%p2935) target = $region110
        $region109: #{agent_forward.1} parent=78 // pred_region
          %s2938 = smul.u32 2, %s24
        $region110: #{agent_forward.1} parent=78 // pred_fallthru
          _
        // Predicated region
        $region111: #{agent_forward.1} parent=78 // pred_check
          %p2939 = pneg %p319
        $region112: #{agent_forward.1} parent=78 // pred_check_branch
          %2941 = sbr.rel (%p2939) target = $region114
        $region113: #{agent_forward.1} parent=78 // pred_region
          %s2942 = smul.u32 2, %s24
        $region114: #{agent_forward.1} parent=78 // pred_fallthru
          _
      $region79: #{agent_forward.1} parent=5 // pred_fallthru
        _
      %p2943 = scmp.le.s32.totalorder 2, %s19
      // Predicated region
      $region115: #{agent_forward.1} parent=5 // pred_check
        %p2944 = pneg %p2943
      $region116: #{agent_forward.1} parent=5 // pred_check_branch
        %2946 = sbr.rel (%p2944) target = $region118
      $region117: #{agent_forward.1} parent=5 // pred_region
        %s2947 = ssub.s32 %s19, 2
        // Predicated region
        $region119: #{agent_forward.1} parent=117 // pred_check
          %p2948 = pneg %p273
        $region120: #{agent_forward.1} parent=117 // pred_check_branch
          %2950 = sbr.rel (%p2948) target = $region122
        $region121: #{agent_forward.1} parent=117 // pred_region
          %s2951 = sand.u32 %s258, 1
          %s2952 = sand.u32 %s258, 1
          %s2953 = smul.addr %s2952, 128
          %s2954 = scalar_lea.vmem [#allocation5], %s2953
        $region122: #{agent_forward.1} parent=117 // pred_fallthru
          _
        // Predicated region
        $region123: #{agent_forward.1} parent=117 // pred_check
          %p2955 = pneg %p299
        $region124: #{agent_forward.1} parent=117 // pred_check_branch
          %2957 = sbr.rel (%p2955) target = $region126
        $region125: #{agent_forward.1} parent=117 // pred_region
          %s2958 = smul.u32 2, %s25
          %p2959 = scmp.lt.s32.totalorder %s2958, 3
          %s2960 = scalar_select %p2959, %s2958, 3
          %s2961 = smul.addr %s2960, 8
          %s2962 = scalar_lea.vmem %s11, %s2961
        $region126: #{agent_forward.1} parent=117 // pred_fallthru
          _
        // Predicated region
        $region127: #{agent_forward.1} parent=117 // pred_check
          %p2963 = pneg %p325
        $region128: #{agent_forward.1} parent=117 // pred_check_branch
          %2965 = sbr.rel (%p2963) target = $region130
        $region129: #{agent_forward.1} parent=117 // pred_region
          %s2966 = smul.u32 2, %s25
          %p2967 = scmp.lt.s32.totalorder %s2966, 3
          %s2968 = scalar_select %p2967, %s2966, 3
          %s2969 = smul.addr %s2968, 8
          %s2970 = scalar_lea.vmem %s12, %s2969
        $region130: #{agent_forward.1} parent=117 // pred_fallthru
          _
      $region118: #{agent_forward.1} parent=5 // pred_fallthru
        _
    $region6: #{agent_forward.1} parent=1 // loop_footer
      %s23 = sadd.s32 1, %s19
    $region7: #{agent_forward.1} parent=1 // loop_footer_branch
      %18 = sbr.rel target = $region3
    $region8: #{agent_forward.1} parent=1 // loop_exit
      _

</llo_original>
